<compile_context>
chip_gen: v5e
topology: v5e:2x2
jax: 0.10.0
libtpu: 0.0.40
codegen_flags: <defaults>
</compile_context>

<pallas_src>
import functools

import jax
import jax.numpy as jnp
from jax.experimental import pallas as pl
from jax.experimental.pallas import tpu as pltpu


def _grc_recurrent_kernel(x_ref, m_ref, w1h_ref, w1x_ref, b1_ref, w2_ref,
                          b2_ref, gamma_ref, beta_ref,
                          seq_ref, glob_ref, h_ref, *,
                          hidden_size, block_t, eps):
    """Grid = (batch_tiles, time_blocks); time is the inner ('arbitrary') axis."""
    D = hidden_size
    CH = w1h_ref.shape[1]
    TN = x_ref.shape[0]
    s = pl.program_id(1)

    # Reset the carried recurrent state at the start of each batch tile's time loop.
    @pl.when(s == 0)
    def _():
        h_ref[...] = jnp.zeros_like(h_ref)

    # Constant operands: resident in VMEM across the whole grid (constant index maps).
    w1h = w1h_ref[...]                 # (D, CH)   bf16  (multiplies carried state h)
    w1x = w1x_ref[...]                 # (D, CH)   bf16  (multiplies input x)
    w2 = w2_ref[...]                   # (CH, 4D)  bf16
    b1 = b1_ref[...]                   # (1, CH)   f32
    # Hoisted broadcasts: JAX does not CSE broadcast_in_dim across the unrolled steps.
    b2_b = jnp.broadcast_to(b2_ref[...], (TN, 4 * D))
    gamma_b = jnp.broadcast_to(gamma_ref[...], (TN, D))
    beta_b = jnp.broadcast_to(beta_ref[...], (TN, D))

    inv_d = 1.0 / D

    # Off-critical-path half of Linear_1: one batched MXU pass over the whole time
    # block (M = TN * block_t, K = D), f32 accumulation, bias folded in once.
    x_blk = x_ref[...]                                           # (TN, BT, D) bf16
    z_x = jnp.dot(x_blk.reshape(TN * block_t, D), w1x,
                  preferred_element_type=jnp.float32) + b1       # (TN*BT, CH) f32
    z_x = z_x.reshape(TN, block_t, CH)

    # Recurrent state: loaded once per grid step, carried as a value, stored once.
    h = h_ref[...]                                               # (TN, D) f32

    # Statically unrolled time loop. block_t is kept small (<= 16) by the wrapper's
    # heuristic so code size / vreg live ranges stay bounded (for larger blocks you
    # would chunk z_x and wrap the chunks in lax.fori_loop).
    for ti in range(block_t):
        # Serial half of Linear_1: only the carried state, K = D.
        z = z_x[:, ti, :] + jnp.dot(h.astype(jnp.bfloat16), w1h,
                                    preferred_element_type=jnp.float32)
        # TODO(synk): dropout omitted (inference semantics; identity in eval mode).
        inter = jax.nn.gelu(z, approximate=True)                 # tanh GELU on the EUP
        c = jnp.dot(inter.astype(jnp.bfloat16), w2,
                    preferred_element_type=jnp.float32) + b2_b   # (TN, 4D) f32

        gates = jax.nn.sigmoid(c[:, 0:3 * D])                    # one fused EUP pass
        f1 = gates[:, 0:D]
        f2 = gates[:, D:2 * D]
        i_g = gates[:, 2 * D:3 * D]
        parent = c[:, 3 * D:4 * D]

        x_t = x_blk[:, ti, :].astype(jnp.float32)                # (TN, D)
        pre = f1 * h + f2 * x_t + i_g * parent

        # Two-pass LayerNorm statistics (d = pre - mu is reused for the normalization,
        # and the variance cannot cancel / go negative).
        mu = jnp.sum(pre, axis=-1, keepdims=True) * inv_d
        d = pre - mu
        var = jnp.sum(d * d, axis=-1, keepdims=True) * inv_d
        h_cell = d * jax.lax.rsqrt(var + eps) * gamma_b + beta_b

        m_t = m_ref[:, ti, :]                                    # (TN, 1) f32
        h = h + m_t * (h_cell - h)                               # m*h_cell + (1-m)*h

        # TODO(synk): for D < 128 these per-step stores are masked partial vst's; pad D
        # to 128 (or fold time into lanes) for store-bound small-model configs.
        seq_ref[:, ti, :] = h.astype(seq_ref.dtype)

    h_ref[...] = h                                               # carry across time blocks

    # global_state: only the final h of each batch tile is needed.
    @pl.when(s == pl.num_programs(1) - 1)
    def _():
        glob_ref[...] = h.astype(glob_ref.dtype)


def _pick_time_block(S, block_n, D, budget_bytes):
    """Largest time block in {16, 8} dividing S whose streaming VMEM (double-buffered
    bf16 x tile + f32 seq tile + the in-kernel f32 z_x temp) fits the budget; falls back
    to the full sequence for short S (block_t == S satisfies the block-shape rule)."""
    def stream_bytes(bt):
        return (2 * block_n * bt * D * 2      # x tile (bf16), double-buffered
                + 2 * block_n * bt * D * 4    # sequence tile (f32), double-buffered
                + block_n * bt * 4 * D * 4)   # z_x temporary (f32, width 4D)
    for bt in (16, 8):
        if S % bt == 0 and stream_bytes(bt) <= budget_bytes:
            return bt
    if S % 8 == 0:
        return 8
    return S


def recurrent_grcx(x, input_mask, params, *, eps=1e-5, block_t=None, block_n=None,
                   single_buffer_constants=True,
                   vmem_budget_bytes=24 * 1024 * 1024):
    """x: (N, S, D) float, input_mask: (N, S) float 0/1. Batch-major throughout."""
    N, S, D = x.shape
    CH = params["w1"].shape[1]
    assert params["w1"].shape[0] == 2 * D

    if block_n is None:
        # TODO(synk): on v7x (2 TensorCores) pass block_n = N // 2 (multiple of 8,
        # ideally >= 128) so the "parallel" batch axis shards across both cores; on
        # v5e/v6e keep block_n = N unless VMEM forces tiling.
        block_n = N
    assert N % block_n == 0, "block_n must divide N"

    if block_t is None:
        block_t = _pick_time_block(S, block_n, D, vmem_budget_bytes)
    assert S % block_t == 0, "block_t must divide S"

    # bf16 weights & activations on the MXU path (native rate, half the resident VMEM);
    # f32 biases / LN params and f32 carried state. W1 is split so the x half can be
    # batched off the serial recurrence.
    w1 = params["w1"]
    w1_h = w1[:D, :].astype(jnp.bfloat16)      # multiplies the carried state ("left")
    w1_x = w1[D:, :].astype(jnp.bfloat16)      # multiplies the input x_t   ("right")
    w2_bf = params["w2"].astype(jnp.bfloat16)
    x_bf = x if x.dtype == jnp.bfloat16 else x.astype(jnp.bfloat16)
    mask3 = input_mask.reshape(N, S, 1).astype(jnp.float32)

    kernel = functools.partial(_grc_recurrent_kernel, hidden_size=D,
                               block_t=block_t, eps=eps)
    grid = (N // block_n, S // block_t)
    out_shape = (jax.ShapeDtypeStruct((N, S, D), jnp.float32),   # sequence
                 jax.ShapeDtypeStruct((N, D), jnp.float32))      # global_state

    # VMEM limit: weights (conservatively counted double-buffered) + streaming tiles
    # + z_x temp + slack, clamped to v7x's 64 MiB physical VMEM.
    weight_bytes = (2 * D * CH + CH * 4 * D) * 2
    stream_bytes = (2 * block_n * block_t * D * (2 + 4)
                    + block_n * block_t * 4 * D * 4)
    vmem_limit = int(min(64 * 2 ** 20,
                         max(24 * 2 ** 20, 2 * weight_bytes + stream_bytes + (8 << 20))))

    def build(single_buffer):
        const_kwargs = {"pipeline_mode": pl.Buffered(1)} if single_buffer else {}

        def const_spec(shape):
            # Constant index map: the operand never changes across the grid, so a
            # single VMEM buffer is enough (no double buffering).
            return pl.BlockSpec(shape, lambda nb, s: (0,) * len(shape), **const_kwargs)

        return pl.pallas_call(
            kernel,
            out_shape=out_shape,
            grid_spec=pltpu.PrefetchScalarGridSpec(
                num_scalar_prefetch=0,
                grid=grid,
                in_specs=[
                    pl.BlockSpec((block_n, block_t, D), lambda nb, s: (nb, s, 0)),  # x (bf16)
                    pl.BlockSpec((block_n, block_t, 1), lambda nb, s: (nb, s, 0)),  # mask
                    const_spec((D, CH)),           # W1_h (bf16)
                    const_spec((D, CH)),           # W1_x (bf16)
                    const_spec((1, CH)),           # b1
                    const_spec((CH, 4 * D)),       # W2 (bf16)
                    const_spec((1, 4 * D)),        # b2
                    const_spec((1, D)),            # LN gamma
                    const_spec((1, D)),            # LN beta
                ],
                out_specs=[
                    pl.BlockSpec((block_n, block_t, D), lambda nb, s: (nb, s, 0)),  # sequence
                    pl.BlockSpec((block_n, D), lambda nb, s: (nb, 0)),              # global h
                ],
                scratch_shapes=[pltpu.VMEM((block_n, D), jnp.float32)],  # carried state h
            ),
            compiler_params=pltpu.CompilerParams(
                dimension_semantics=("parallel", "arbitrary"),  # batch parallel, time serial
                vmem_limit_bytes=vmem_limit),
        )

    args = (x_bf, mask3, w1_h, w1_x, params["b1"], w2_bf, params["b2"],
            params["ln_gamma"], params["ln_beta"])
    if single_buffer_constants:
        try:
            seq, glob = build(True)(*args)
        except Exception:
            # Compatibility fallback: some Pallas builds reject buffer_count=1 pipeline
            # mode; default double-buffered constants only cost extra VMEM, not speed.
            seq, glob = build(False)(*args)
    else:
        seq, glob = build(False)(*args)

    return {"sequence": seq,
            "global_state": glob,
            "input_mask": input_mask.reshape(N, S, 1),
            "aux_loss": None}


def _reference(x, input_mask, params, eps=1e-5):
    """Pure-JAX f32 reference mirroring the PyTorch forward (exact-erf GELU)."""
    N, S, D = x.shape

    def cell(h, xt):
        z = jnp.concatenate([h, xt], axis=-1) @ params["w1"] + params["b1"]
        inter = jax.nn.gelu(z, approximate=False)
        c = inter @ params["w2"] + params["b2"]
        f1 = jax.nn.sigmoid(c[:, 0:D])
        f2 = jax.nn.sigmoid(c[:, D:2 * D])
        ig = jax.nn.sigmoid(c[:, 2 * D:3 * D])
        parent = c[:, 3 * D:4 * D]
        pre = f1 * h + f2 * xt + ig * parent
        mu = pre.mean(-1, keepdims=True)
        var = ((pre - mu) ** 2).mean(-1, keepdims=True)
        return (pre - mu) * jax.lax.rsqrt(var + eps) * params["ln_gamma"] + params["ln_beta"]

    def step(h, inp):
        xt, mt = inp
        h_new = mt * cell(h, xt) + (1.0 - mt) * h
        return h_new, h_new

    xs = jnp.transpose(x, (1, 0, 2))
    ms = jnp.transpose(input_mask, (1, 0)).reshape(S, N, 1)
    h0 = jnp.zeros((N, D), jnp.float32)
    h_final, seq = jax.lax.scan(step, h0, (xs, ms))
    return jnp.transpose(seq, (1, 0, 2)), h_final


def _init_params(key, hidden_size):
    D = hidden_size
    CH = 4 * D  # cell_hidden_size = 4 * hidden_size
    k1, k2, k3, k4 = jax.random.split(key, 4)
    scale1 = 1.0 / jnp.sqrt(2.0 * D)
    scale2 = 1.0 / jnp.sqrt(float(CH))
    return {
        "w1": jax.random.normal(k1, (2 * D, CH), jnp.float32) * scale1,
        "b1": jax.random.normal(k2, (1, CH), jnp.float32) * 0.01,
        "w2": jax.random.normal(k3, (CH, 4 * D), jnp.float32) * scale2,
        "b2": jax.random.normal(k4, (1, 4 * D), jnp.float32) * 0.01,
        "ln_gamma": jnp.ones((1, D), jnp.float32),
        "ln_beta": jnp.zeros((1, D), jnp.float32),
    }


if __name__ == "__main__":
    N, S, D = 4, 8, 32

    key = jax.random.PRNGKey(0)
    kp, kx = jax.random.split(key)
    params = _init_params(kp, D)

    x = jax.random.normal(kx, (N, S, D), jnp.float32)
    # Variable-length sequences (1 = valid, 0 = pad).
    lengths = jnp.array([8, 6, 3, 1], dtype=jnp.int32)
    input_mask = (jnp.arange(S)[None, :] < lengths[:, None]).astype(jnp.float32)

    out = recurrent_grcx(x, input_mask, params)
    jax.block_until_ready(out["sequence"])
    jax.block_until_ready(out["global_state"])

    seq_ref, glob_ref = _reference(x, input_mask, params)
    assert out["sequence"].shape == (N, S, D)
    assert out["global_state"].shape == (N, D)
    assert out["input_mask"].shape == (N, S, 1)

    # Tolerance: bf16 MXU operands, bf16 x, and tanh-GELU accumulate a small per-step
    # delta that compounds through the 8-step recurrence against the f32 erf-GELU
    # reference; outputs are LayerNorm'ed (O(1) scale), so this is ~10% worst-case.
    seq_err = float(jnp.max(jnp.abs(out["sequence"] - seq_ref)))
    glob_err = float(jnp.max(jnp.abs(out["global_state"] - glob_ref)))
    assert jnp.allclose(out["sequence"], seq_ref, atol=1e-1, rtol=5e-2), seq_err
    assert jnp.allclose(out["global_state"], glob_ref, atol=1e-1, rtol=5e-2), glob_err

    print("KERNEL_OK")
</pallas_src>

<mosaic_0001>
module attributes {stable_mosaic.version = 11 : i64} {
  func.func @_grc_recurrent_kernel(%arg0: i32, %arg1: i32, %arg2: memref<4x8x32xbf16, #tpu.memory_space<vmem>>, %arg3: memref<4x8x1xf32, #tpu.memory_space<vmem>>, %arg4: memref<32x128xbf16, #tpu.memory_space<vmem>>, %arg5: memref<32x128xbf16, #tpu.memory_space<vmem>>, %arg6: memref<1x128xf32, #tpu.memory_space<vmem>>, %arg7: memref<128x128xbf16, #tpu.memory_space<vmem>>, %arg8: memref<1x128xf32, #tpu.memory_space<vmem>>, %arg9: memref<1x32xf32, #tpu.memory_space<vmem>>, %arg10: memref<1x32xf32, #tpu.memory_space<vmem>>, %arg11: memref<4x8x32xf32, #tpu.memory_space<vmem>>, %arg12: memref<4x32xf32, #tpu.memory_space<vmem>>, %arg13: memref<4x32xf32, #tpu.memory_space<vmem>>) attributes {dimension_semantics = [#tpu.dimension_semantics<parallel>, #tpu.dimension_semantics<arbitrary>], iteration_bounds = array<i64: 1, 1>, scalar_prefetch = 0 : i64, scratch_operands = 1 : i64, tpu.core_type = #tpu.core_type<tc>, window_params = [{transform_indices = @transform_0, window_bounds = array<i64: 4, 8, 32>}, {transform_indices = @transform_1, window_bounds = array<i64: 4, 8, 1>}, {pipeline_mode = #tpu.pipeline_mode<synchronous>, transform_indices = @transform_2, window_bounds = array<i64: 32, 128>}, {pipeline_mode = #tpu.pipeline_mode<synchronous>, transform_indices = @transform_3, window_bounds = array<i64: 32, 128>}, {pipeline_mode = #tpu.pipeline_mode<synchronous>, transform_indices = @transform_4, window_bounds = array<i64: 1, 128>}, {pipeline_mode = #tpu.pipeline_mode<synchronous>, transform_indices = @transform_5, window_bounds = array<i64: 128, 128>}, {pipeline_mode = #tpu.pipeline_mode<synchronous>, transform_indices = @transform_6, window_bounds = array<i64: 1, 128>}, {pipeline_mode = #tpu.pipeline_mode<synchronous>, transform_indices = @transform_7, window_bounds = array<i64: 1, 32>}, {pipeline_mode = #tpu.pipeline_mode<synchronous>, transform_indices = @transform_8, window_bounds = array<i64: 1, 32>}, {transform_indices = @transform_9, window_bounds = array<i64: 4, 8, 32>}, {transform_indices = @transform_10, window_bounds = array<i64: 4, 32>}]} {
    %c0_i32 = arith.constant 0 : i32
    %0 = arith.cmpi eq, %arg1, %c0_i32 : i32
    %1 = arith.extui %0 : i1 to i32
    %c0_i32_0 = arith.constant 0 : i32
    %2 = arith.cmpi ne, %1, %c0_i32_0 : i32
    scf.if %2 {
      %cst_160 = arith.constant 0.000000e+00 : f32
      %555 = vector.broadcast %cst_160 : f32 to vector<4x32xf32>
      %c0_161 = arith.constant 0 : index
      %c0_162 = arith.constant 0 : index
      %556 = vector.load %arg13[%c0_161, %c0_162] : memref<4x32xf32, #tpu.memory_space<vmem>>, vector<4x32xf32>
      tpu.vector_store %arg13[%c0_161, %c0_162], %555 {strides = array<i32>} : memref<4x32xf32, #tpu.memory_space<vmem>>, vector<4x32xf32>,
    } else {
    }
    %c0 = arith.constant 0 : index
    %c0_1 = arith.constant 0 : index
    %3 = vector.load %arg4[%c0, %c0_1] : memref<32x128xbf16, #tpu.memory_space<vmem>>, vector<32x128xbf16>
    %c0_2 = arith.constant 0 : index
    %c0_3 = arith.constant 0 : index
    %4 = vector.load %arg5[%c0_2, %c0_3] : memref<32x128xbf16, #tpu.memory_space<vmem>>, vector<32x128xbf16>
    %c0_4 = arith.constant 0 : index
    %c0_5 = arith.constant 0 : index
    %5 = vector.load %arg7[%c0_4, %c0_5] : memref<128x128xbf16, #tpu.memory_space<vmem>>, vector<128x128xbf16>
    %c0_6 = arith.constant 0 : index
    %c0_7 = arith.constant 0 : index
    %6 = vector.load %arg6[%c0_6, %c0_7] : memref<1x128xf32, #tpu.memory_space<vmem>>, vector<1x128xf32>
    %c0_8 = arith.constant 0 : index
    %c0_9 = arith.constant 0 : index
    %7 = vector.load %arg8[%c0_8, %c0_9] : memref<1x128xf32, #tpu.memory_space<vmem>>, vector<1x128xf32>
    %8 = vector.shape_cast %7 : vector<1x128xf32> to vector<1x128xf32>
    %9 = vector.broadcast %8 : vector<1x128xf32> to vector<4x128xf32>
    %c0_10 = arith.constant 0 : index
    %c0_11 = arith.constant 0 : index
    %10 = vector.load %arg9[%c0_10, %c0_11] : memref<1x32xf32, #tpu.memory_space<vmem>>, vector<1x32xf32>
    %11 = vector.shape_cast %10 : vector<1x32xf32> to vector<1x32xf32>
    %12 = vector.broadcast %11 : vector<1x32xf32> to vector<4x32xf32>
    %c0_12 = arith.constant 0 : index
    %c0_13 = arith.constant 0 : index
    %13 = vector.load %arg10[%c0_12, %c0_13] : memref<1x32xf32, #tpu.memory_space<vmem>>, vector<1x32xf32>
    %14 = vector.shape_cast %13 : vector<1x32xf32> to vector<1x32xf32>
    %15 = vector.broadcast %14 : vector<1x32xf32> to vector<4x32xf32>
    %c0_14 = arith.constant 0 : index
    %c0_15 = arith.constant 0 : index
    %c0_16 = arith.constant 0 : index
    %16 = vector.load %arg2[%c0_14, %c0_15, %c0_16] : memref<4x8x32xbf16, #tpu.memory_space<vmem>>, vector<4x8x32xbf16>
    %17 = vector.shape_cast %16 : vector<4x8x32xbf16> to vector<32x32xbf16>
    %cst = arith.constant dense<0.000000e+00> : vector<32x128xf32>
    %18 = tpu.matmul %17, %4, %cst {dimension_numbers = #tpu.dot_dimension_numbers<[1], [0], [0], [1], [0, 0, 1, 1], [], []>} : vector<32x32xbf16>, vector<32x128xbf16>, vector<32x128xf32> -> vector<32x128xf32>
    %19 = vector.broadcast %6 : vector<1x128xf32> to vector<32x128xf32>
    %20 = arith.addf %18, %19 : vector<32x128xf32>
    %21 = vector.shape_cast %20 : vector<32x128xf32> to vector<4x8x128xf32>
    %c0_17 = arith.constant 0 : index
    %c0_18 = arith.constant 0 : index
    %22 = vector.load %arg13[%c0_17, %c0_18] : memref<4x32xf32, #tpu.memory_space<vmem>>, vector<4x32xf32>
    %23 = vector.extract_strided_slice %21 {offsets = [0, 0, 0], sizes = [4, 1, 128], strides = [1, 1, 1]} : vector<4x8x128xf32> to vector<4x1x128xf32>
    %24 = vector.shape_cast %23 : vector<4x1x128xf32> to vector<4x128xf32>
    %25 = arith.truncf %22 : vector<4x32xf32> to vector<4x32xbf16>
    %cst_19 = arith.constant dense<0.000000e+00> : vector<4x128xf32>
    %26 = tpu.matmul %25, %3, %cst_19 {dimension_numbers = #tpu.dot_dimension_numbers<[1], [0], [0], [1], [0, 0, 1, 1], [], []>} : vector<4x32xbf16>, vector<32x128xbf16>, vector<4x128xf32> -> vector<4x128xf32>
    %27 = arith.addf %24, %26 : vector<4x128xf32>
    %28 = arith.mulf %27, %27 : vector<4x128xf32>
    %29 = arith.mulf %27, %28 : vector<4x128xf32>
    %cst_20 = arith.constant 4.471500e-02 : f32
    %30 = vector.broadcast %cst_20 : f32 to vector<4x128xf32>
    %31 = arith.mulf %30, %29 : vector<4x128xf32>
    %32 = arith.addf %27, %31 : vector<4x128xf32>
    %cst_21 = arith.constant 0.797884583 : f32
    %33 = vector.broadcast %cst_21 : f32 to vector<4x128xf32>
    %34 = arith.mulf %33, %32 : vector<4x128xf32>
    %35 = math.tanh %34 : vector<4x128xf32>
    %cst_22 = arith.constant 1.000000e+00 : f32
    %36 = vector.broadcast %cst_22 : f32 to vector<4x128xf32>
    %37 = arith.addf %36, %35 : vector<4x128xf32>
    %cst_23 = arith.constant 5.000000e-01 : f32
    %38 = vector.broadcast %cst_23 : f32 to vector<4x128xf32>
    %39 = arith.mulf %38, %37 : vector<4x128xf32>
    %40 = arith.mulf %27, %39 : vector<4x128xf32>
    %41 = arith.truncf %40 : vector<4x128xf32> to vector<4x128xbf16>
    %cst_24 = arith.constant dense<0.000000e+00> : vector<4x128xf32>
    %42 = tpu.matmul %41, %5, %cst_24 {dimension_numbers = #tpu.dot_dimension_numbers<[1], [0], [0], [1], [0, 0, 1, 1], [], []>} : vector<4x128xbf16>, vector<128x128xbf16>, vector<4x128xf32> -> vector<4x128xf32>
    %43 = arith.addf %42, %9 : vector<4x128xf32>
    %44 = vector.extract_strided_slice %43 {offsets = [0, 0], sizes = [4, 96], strides = [1, 1]} : vector<4x128xf32> to vector<4x96xf32>
    %45 = arith.negf %44 : vector<4x96xf32>
    %46 = math.exp %45 : vector<4x96xf32>
    %cst_25 = arith.constant 1.000000e+00 : f32
    %47 = vector.broadcast %cst_25 : f32 to vector<4x96xf32>
    %48 = arith.addf %47, %46 : vector<4x96xf32>
    %49 = arith.divf %47, %48 : vector<4x96xf32>
    %50 = vector.extract_strided_slice %49 {offsets = [0, 0], sizes = [4, 32], strides = [1, 1]} : vector<4x96xf32> to vector<4x32xf32>
    %51 = vector.extract_strided_slice %49 {offsets = [0, 32], sizes = [4, 32], strides = [1, 1]} : vector<4x96xf32> to vector<4x32xf32>
    %52 = vector.extract_strided_slice %49 {offsets = [0, 64], sizes = [4, 32], strides = [1, 1]} : vector<4x96xf32> to vector<4x32xf32>
    %53 = vector.extract_strided_slice %43 {offsets = [0, 96], sizes = [4, 32], strides = [1, 1]} : vector<4x128xf32> to vector<4x32xf32>
    %54 = vector.extract_strided_slice %16 {offsets = [0, 0, 0], sizes = [4, 1, 32], strides = [1, 1, 1]} : vector<4x8x32xbf16> to vector<4x1x32xbf16>
    %55 = vector.shape_cast %54 : vector<4x1x32xbf16> to vector<4x32xbf16>
    %56 = arith.extf %55 : vector<4x32xbf16> to vector<4x32xf32>
    %57 = arith.mulf %50, %22 : vector<4x32xf32>
    %58 = arith.mulf %51, %56 : vector<4x32xf32>
    %59 = arith.addf %57, %58 : vector<4x32xf32>
    %60 = arith.mulf %52, %53 : vector<4x32xf32>
    %61 = arith.addf %59, %60 : vector<4x32xf32>
    %cst_26 = arith.constant dense<0.000000e+00> : vector<4xf32>
    %62 = vector.multi_reduction <add>, %61, %cst_26 [1] : vector<4x32xf32> to vector<4xf32>
    %63 = vector.shape_cast %62 : vector<4xf32> to vector<4x1xf32>
    %cst_27 = arith.constant 3.125000e-02 : f32
    %64 = vector.broadcast %cst_27 : f32 to vector<4x1xf32>
    %65 = arith.mulf %63, %64 : vector<4x1xf32>
    %66 = vector.broadcast %65 : vector<4x1xf32> to vector<4x32xf32>
    %67 = arith.subf %61, %66 : vector<4x32xf32>
    %68 = arith.mulf %67, %67 : vector<4x32xf32>
    %cst_28 = arith.constant dense<0.000000e+00> : vector<4xf32>
    %69 = vector.multi_reduction <add>, %68, %cst_28 [1] : vector<4x32xf32> to vector<4xf32>
    %70 = vector.shape_cast %69 : vector<4xf32> to vector<4x1xf32>
    %cst_29 = arith.constant 3.125000e-02 : f32
    %71 = vector.broadcast %cst_29 : f32 to vector<4x1xf32>
    %72 = arith.mulf %70, %71 : vector<4x1xf32>
    %cst_30 = arith.constant 9.99999974E-6 : f32
    %73 = vector.broadcast %cst_30 : f32 to vector<4x1xf32>
    %74 = arith.addf %72, %73 : vector<4x1xf32>
    %75 = math.rsqrt %74 : vector<4x1xf32>
    %76 = vector.broadcast %75 : vector<4x1xf32> to vector<4x32xf32>
    %77 = arith.mulf %67, %76 : vector<4x32xf32>
    %78 = arith.mulf %77, %12 : vector<4x32xf32>
    %79 = arith.addf %78, %15 : vector<4x32xf32>
    %c0_31 = arith.constant 0 : index
    %c0_32 = arith.constant 0 : index
    %c0_33 = arith.constant 0 : index
    %80 = vector.load %arg3[%c0_31, %c0_32, %c0_33] : memref<4x8x1xf32, #tpu.memory_space<vmem>>, vector<4x1x1xf32>
    %81 = vector.shape_cast %80 : vector<4x1x1xf32> to vector<4x1xf32>
    %82 = arith.subf %79, %22 : vector<4x32xf32>
    %83 = vector.broadcast %81 : vector<4x1xf32> to vector<4x32xf32>
    %84 = arith.mulf %83, %82 : vector<4x32xf32>
    %85 = arith.addf %22, %84 : vector<4x32xf32>
    %c0_34 = arith.constant 0 : index
    %c0_35 = arith.constant 0 : index
    %c0_36 = arith.constant 0 : index
    %86 = vector.load %arg11[%c0_34, %c0_35, %c0_36] : memref<4x8x32xf32, #tpu.memory_space<vmem>>, vector<4x1x32xf32>
    %87 = vector.shape_cast %86 : vector<4x1x32xf32> to vector<4x32xf32>
    %88 = vector.shape_cast %85 : vector<4x32xf32> to vector<4x1x32xf32>
    tpu.vector_store %arg11[%c0_34, %c0_35, %c0_36], %88 {strides = array<i32>} : memref<4x8x32xf32, #tpu.memory_space<vmem>>, vector<4x1x32xf32>,
    %89 = vector.extract_strided_slice %21 {offsets = [0, 1, 0], sizes = [4, 1, 128], strides = [1, 1, 1]} : vector<4x8x128xf32> to vector<4x1x128xf32>
    %90 = vector.shape_cast %89 : vector<4x1x128xf32> to vector<4x128xf32>
    %91 = arith.truncf %85 : vector<4x32xf32> to vector<4x32xbf16>
    %cst_37 = arith.constant dense<0.000000e+00> : vector<4x128xf32>
    %92 = tpu.matmul %91, %3, %cst_37 {dimension_numbers = #tpu.dot_dimension_numbers<[1], [0], [0], [1], [0, 0, 1, 1], [], []>} : vector<4x32xbf16>, vector<32x128xbf16>, vector<4x128xf32> -> vector<4x128xf32>
    %93 = arith.addf %90, %92 : vector<4x128xf32>
    %94 = arith.mulf %93, %93 : vector<4x128xf32>
    %95 = arith.mulf %93, %94 : vector<4x128xf32>
    %cst_38 = arith.constant 4.471500e-02 : f32
    %96 = vector.broadcast %cst_38 : f32 to vector<4x128xf32>
    %97 = arith.mulf %96, %95 : vector<4x128xf32>
    %98 = arith.addf %93, %97 : vector<4x128xf32>
    %cst_39 = arith.constant 0.797884583 : f32
    %99 = vector.broadcast %cst_39 : f32 to vector<4x128xf32>
    %100 = arith.mulf %99, %98 : vector<4x128xf32>
    %101 = math.tanh %100 : vector<4x128xf32>
    %cst_40 = arith.constant 1.000000e+00 : f32
    %102 = vector.broadcast %cst_40 : f32 to vector<4x128xf32>
    %103 = arith.addf %102, %101 : vector<4x128xf32>
    %cst_41 = arith.constant 5.000000e-01 : f32
    %104 = vector.broadcast %cst_41 : f32 to vector<4x128xf32>
    %105 = arith.mulf %104, %103 : vector<4x128xf32>
    %106 = arith.mulf %93, %105 : vector<4x128xf32>
    %107 = arith.truncf %106 : vector<4x128xf32> to vector<4x128xbf16>
    %cst_42 = arith.constant dense<0.000000e+00> : vector<4x128xf32>
    %108 = tpu.matmul %107, %5, %cst_42 {dimension_numbers = #tpu.dot_dimension_numbers<[1], [0], [0], [1], [0, 0, 1, 1], [], []>} : vector<4x128xbf16>, vector<128x128xbf16>, vector<4x128xf32> -> vector<4x128xf32>
    %109 = arith.addf %108, %9 : vector<4x128xf32>
    %110 = vector.extract_strided_slice %109 {offsets = [0, 0], sizes = [4, 96], strides = [1, 1]} : vector<4x128xf32> to vector<4x96xf32>
    %111 = arith.negf %110 : vector<4x96xf32>
    %112 = math.exp %111 : vector<4x96xf32>
    %cst_43 = arith.constant 1.000000e+00 : f32
    %113 = vector.broadcast %cst_43 : f32 to vector<4x96xf32>
    %114 = arith.addf %113, %112 : vector<4x96xf32>
    %115 = arith.divf %113, %114 : vector<4x96xf32>
    %116 = vector.extract_strided_slice %115 {offsets = [0, 0], sizes = [4, 32], strides = [1, 1]} : vector<4x96xf32> to vector<4x32xf32>
    %117 = vector.extract_strided_slice %115 {offsets = [0, 32], sizes = [4, 32], strides = [1, 1]} : vector<4x96xf32> to vector<4x32xf32>
    %118 = vector.extract_strided_slice %115 {offsets = [0, 64], sizes = [4, 32], strides = [1, 1]} : vector<4x96xf32> to vector<4x32xf32>
    %119 = vector.extract_strided_slice %109 {offsets = [0, 96], sizes = [4, 32], strides = [1, 1]} : vector<4x128xf32> to vector<4x32xf32>
    %120 = vector.extract_strided_slice %16 {offsets = [0, 1, 0], sizes = [4, 1, 32], strides = [1, 1, 1]} : vector<4x8x32xbf16> to vector<4x1x32xbf16>
    %121 = vector.shape_cast %120 : vector<4x1x32xbf16> to vector<4x32xbf16>
    %122 = arith.extf %121 : vector<4x32xbf16> to vector<4x32xf32>
    %123 = arith.mulf %116, %85 : vector<4x32xf32>
    %124 = arith.mulf %117, %122 : vector<4x32xf32>
    %125 = arith.addf %123, %124 : vector<4x32xf32>
    %126 = arith.mulf %118, %119 : vector<4x32xf32>
    %127 = arith.addf %125, %126 : vector<4x32xf32>
    %cst_44 = arith.constant dense<0.000000e+00> : vector<4xf32>
    %128 = vector.multi_reduction <add>, %127, %cst_44 [1] : vector<4x32xf32> to vector<4xf32>
    %129 = vector.shape_cast %128 : vector<4xf32> to vector<4x1xf32>
    %cst_45 = arith.constant 3.125000e-02 : f32
    %130 = vector.broadcast %cst_45 : f32 to vector<4x1xf32>
    %131 = arith.mulf %129, %130 : vector<4x1xf32>
    %132 = vector.broadcast %131 : vector<4x1xf32> to vector<4x32xf32>
    %133 = arith.subf %127, %132 : vector<4x32xf32>
    %134 = arith.mulf %133, %133 : vector<4x32xf32>
    %cst_46 = arith.constant dense<0.000000e+00> : vector<4xf32>
    %135 = vector.multi_reduction <add>, %134, %cst_46 [1] : vector<4x32xf32> to vector<4xf32>
    %136 = vector.shape_cast %135 : vector<4xf32> to vector<4x1xf32>
    %cst_47 = arith.constant 3.125000e-02 : f32
    %137 = vector.broadcast %cst_47 : f32 to vector<4x1xf32>
    %138 = arith.mulf %136, %137 : vector<4x1xf32>
    %cst_48 = arith.constant 9.99999974E-6 : f32
    %139 = vector.broadcast %cst_48 : f32 to vector<4x1xf32>
    %140 = arith.addf %138, %139 : vector<4x1xf32>
    %141 = math.rsqrt %140 : vector<4x1xf32>
    %142 = vector.broadcast %141 : vector<4x1xf32> to vector<4x32xf32>
    %143 = arith.mulf %133, %142 : vector<4x32xf32>
    %144 = arith.mulf %143, %12 : vector<4x32xf32>
    %145 = arith.addf %144, %15 : vector<4x32xf32>
    %c0_49 = arith.constant 0 : index
    %c1 = arith.constant 1 : index
    %c0_50 = arith.constant 0 : index
    %146 = vector.load %arg3[%c0_49, %c1, %c0_50] : memref<4x8x1xf32, #tpu.memory_space<vmem>>, vector<4x1x1xf32>
    %147 = vector.shape_cast %146 : vector<4x1x1xf32> to vector<4x1xf32>
    %148 = arith.subf %145, %85 : vector<4x32xf32>
    %149 = vector.broadcast %147 : vector<4x1xf32> to vector<4x32xf32>
    %150 = arith.mulf %149, %148 : vector<4x32xf32>
    %151 = arith.addf %85, %150 : vector<4x32xf32>
    %c0_51 = arith.constant 0 : index
    %c1_52 = arith.constant 1 : index
    %c0_53 = arith.constant 0 : index
    %152 = vector.load %arg11[%c0_51, %c1_52, %c0_53] : memref<4x8x32xf32, #tpu.memory_space<vmem>>, vector<4x1x32xf32>
    %153 = vector.shape_cast %152 : vector<4x1x32xf32> to vector<4x32xf32>
    %154 = vector.shape_cast %151 : vector<4x32xf32> to vector<4x1x32xf32>
    tpu.vector_store %arg11[%c0_51, %c1_52, %c0_53], %154 {strides = array<i32>} : memref<4x8x32xf32, #tpu.memory_space<vmem>>, vector<4x1x32xf32>,
    %155 = vector.extract_strided_slice %21 {offsets = [0, 2, 0], sizes = [4, 1, 128], strides = [1, 1, 1]} : vector<4x8x128xf32> to vector<4x1x128xf32>
    %156 = vector.shape_cast %155 : vector<4x1x128xf32> to vector<4x128xf32>
    %157 = arith.truncf %151 : vector<4x32xf32> to vector<4x32xbf16>
    %cst_54 = arith.constant dense<0.000000e+00> : vector<4x128xf32>
    %158 = tpu.matmul %157, %3, %cst_54 {dimension_numbers = #tpu.dot_dimension_numbers<[1], [0], [0], [1], [0, 0, 1, 1], [], []>} : vector<4x32xbf16>, vector<32x128xbf16>, vector<4x128xf32> -> vector<4x128xf32>
    %159 = arith.addf %156, %158 : vector<4x128xf32>
    %160 = arith.mulf %159, %159 : vector<4x128xf32>
    %161 = arith.mulf %159, %160 : vector<4x128xf32>
    %cst_55 = arith.constant 4.471500e-02 : f32
    %162 = vector.broadcast %cst_55 : f32 to vector<4x128xf32>
    %163 = arith.mulf %162, %161 : vector<4x128xf32>
    %164 = arith.addf %159, %163 : vector<4x128xf32>
    %cst_56 = arith.constant 0.797884583 : f32
    %165 = vector.broadcast %cst_56 : f32 to vector<4x128xf32>
    %166 = arith.mulf %165, %164 : vector<4x128xf32>
    %167 = math.tanh %166 : vector<4x128xf32>
    %cst_57 = arith.constant 1.000000e+00 : f32
    %168 = vector.broadcast %cst_57 : f32 to vector<4x128xf32>
    %169 = arith.addf %168, %167 : vector<4x128xf32>
    %cst_58 = arith.constant 5.000000e-01 : f32
    %170 = vector.broadcast %cst_58 : f32 to vector<4x128xf32>
    %171 = arith.mulf %170, %169 : vector<4x128xf32>
    %172 = arith.mulf %159, %171 : vector<4x128xf32>
    %173 = arith.truncf %172 : vector<4x128xf32> to vector<4x128xbf16>
    %cst_59 = arith.constant dense<0.000000e+00> : vector<4x128xf32>
    %174 = tpu.matmul %173, %5, %cst_59 {dimension_numbers = #tpu.dot_dimension_numbers<[1], [0], [0], [1], [0, 0, 1, 1], [], []>} : vector<4x128xbf16>, vector<128x128xbf16>, vector<4x128xf32> -> vector<4x128xf32>
    %175 = arith.addf %174, %9 : vector<4x128xf32>
    %176 = vector.extract_strided_slice %175 {offsets = [0, 0], sizes = [4, 96], strides = [1, 1]} : vector<4x128xf32> to vector<4x96xf32>
    %177 = arith.negf %176 : vector<4x96xf32>
    %178 = math.exp %177 : vector<4x96xf32>
    %cst_60 = arith.constant 1.000000e+00 : f32
    %179 = vector.broadcast %cst_60 : f32 to vector<4x96xf32>
    %180 = arith.addf %179, %178 : vector<4x96xf32>
    %181 = arith.divf %179, %180 : vector<4x96xf32>
    %182 = vector.extract_strided_slice %181 {offsets = [0, 0], sizes = [4, 32], strides = [1, 1]} : vector<4x96xf32> to vector<4x32xf32>
    %183 = vector.extract_strided_slice %181 {offsets = [0, 32], sizes = [4, 32], strides = [1, 1]} : vector<4x96xf32> to vector<4x32xf32>
    %184 = vector.extract_strided_slice %181 {offsets = [0, 64], sizes = [4, 32], strides = [1, 1]} : vector<4x96xf32> to vector<4x32xf32>
    %185 = vector.extract_strided_slice %175 {offsets = [0, 96], sizes = [4, 32], strides = [1, 1]} : vector<4x128xf32> to vector<4x32xf32>
    %186 = vector.extract_strided_slice %16 {offsets = [0, 2, 0], sizes = [4, 1, 32], strides = [1, 1, 1]} : vector<4x8x32xbf16> to vector<4x1x32xbf16>
    %187 = vector.shape_cast %186 : vector<4x1x32xbf16> to vector<4x32xbf16>
    %188 = arith.extf %187 : vector<4x32xbf16> to vector<4x32xf32>
    %189 = arith.mulf %182, %151 : vector<4x32xf32>
    %190 = arith.mulf %183, %188 : vector<4x32xf32>
    %191 = arith.addf %189, %190 : vector<4x32xf32>
    %192 = arith.mulf %184, %185 : vector<4x32xf32>
    %193 = arith.addf %191, %192 : vector<4x32xf32>
    %cst_61 = arith.constant dense<0.000000e+00> : vector<4xf32>
    %194 = vector.multi_reduction <add>, %193, %cst_61 [1] : vector<4x32xf32> to vector<4xf32>
    %195 = vector.shape_cast %194 : vector<4xf32> to vector<4x1xf32>
    %cst_62 = arith.constant 3.125000e-02 : f32
    %196 = vector.broadcast %cst_62 : f32 to vector<4x1xf32>
    %197 = arith.mulf %195, %196 : vector<4x1xf32>
    %198 = vector.broadcast %197 : vector<4x1xf32> to vector<4x32xf32>
    %199 = arith.subf %193, %198 : vector<4x32xf32>
    %200 = arith.mulf %199, %199 : vector<4x32xf32>
    %cst_63 = arith.constant dense<0.000000e+00> : vector<4xf32>
    %201 = vector.multi_reduction <add>, %200, %cst_63 [1] : vector<4x32xf32> to vector<4xf32>
    %202 = vector.shape_cast %201 : vector<4xf32> to vector<4x1xf32>
    %cst_64 = arith.constant 3.125000e-02 : f32
    %203 = vector.broadcast %cst_64 : f32 to vector<4x1xf32>
    %204 = arith.mulf %202, %203 : vector<4x1xf32>
    %cst_65 = arith.constant 9.99999974E-6 : f32
    %205 = vector.broadcast %cst_65 : f32 to vector<4x1xf32>
    %206 = arith.addf %204, %205 : vector<4x1xf32>
    %207 = math.rsqrt %206 : vector<4x1xf32>
    %208 = vector.broadcast %207 : vector<4x1xf32> to vector<4x32xf32>
    %209 = arith.mulf %199, %208 : vector<4x32xf32>
    %210 = arith.mulf %209, %12 : vector<4x32xf32>
    %211 = arith.addf %210, %15 : vector<4x32xf32>
    %c0_66 = arith.constant 0 : index
    %c2 = arith.constant 2 : index
    %c0_67 = arith.constant 0 : index
    %212 = vector.load %arg3[%c0_66, %c2, %c0_67] : memref<4x8x1xf32, #tpu.memory_space<vmem>>, vector<4x1x1xf32>
    %213 = vector.shape_cast %212 : vector<4x1x1xf32> to vector<4x1xf32>
    %214 = arith.subf %211, %151 : vector<4x32xf32>
    %215 = vector.broadcast %213 : vector<4x1xf32> to vector<4x32xf32>
    %216 = arith.mulf %215, %214 : vector<4x32xf32>
    %217 = arith.addf %151, %216 : vector<4x32xf32>
    %c0_68 = arith.constant 0 : index
    %c2_69 = arith.constant 2 : index
    %c0_70 = arith.constant 0 : index
    %218 = vector.load %arg11[%c0_68, %c2_69, %c0_70] : memref<4x8x32xf32, #tpu.memory_space<vmem>>, vector<4x1x32xf32>
    %219 = vector.shape_cast %218 : vector<4x1x32xf32> to vector<4x32xf32>
    %220 = vector.shape_cast %217 : vector<4x32xf32> to vector<4x1x32xf32>
    tpu.vector_store %arg11[%c0_68, %c2_69, %c0_70], %220 {strides = array<i32>} : memref<4x8x32xf32, #tpu.memory_space<vmem>>, vector<4x1x32xf32>,
    %221 = vector.extract_strided_slice %21 {offsets = [0, 3, 0], sizes = [4, 1, 128], strides = [1, 1, 1]} : vector<4x8x128xf32> to vector<4x1x128xf32>
    %222 = vector.shape_cast %221 : vector<4x1x128xf32> to vector<4x128xf32>
    %223 = arith.truncf %217 : vector<4x32xf32> to vector<4x32xbf16>
    %cst_71 = arith.constant dense<0.000000e+00> : vector<4x128xf32>
    %224 = tpu.matmul %223, %3, %cst_71 {dimension_numbers = #tpu.dot_dimension_numbers<[1], [0], [0], [1], [0, 0, 1, 1], [], []>} : vector<4x32xbf16>, vector<32x128xbf16>, vector<4x128xf32> -> vector<4x128xf32>
    %225 = arith.addf %222, %224 : vector<4x128xf32>
    %226 = arith.mulf %225, %225 : vector<4x128xf32>
    %227 = arith.mulf %225, %226 : vector<4x128xf32>
    %cst_72 = arith.constant 4.471500e-02 : f32
    %228 = vector.broadcast %cst_72 : f32 to vector<4x128xf32>
    %229 = arith.mulf %228, %227 : vector<4x128xf32>
    %230 = arith.addf %225, %229 : vector<4x128xf32>
    %cst_73 = arith.constant 0.797884583 : f32
    %231 = vector.broadcast %cst_73 : f32 to vector<4x128xf32>
    %232 = arith.mulf %231, %230 : vector<4x128xf32>
    %233 = math.tanh %232 : vector<4x128xf32>
    %cst_74 = arith.constant 1.000000e+00 : f32
    %234 = vector.broadcast %cst_74 : f32 to vector<4x128xf32>
    %235 = arith.addf %234, %233 : vector<4x128xf32>
    %cst_75 = arith.constant 5.000000e-01 : f32
    %236 = vector.broadcast %cst_75 : f32 to vector<4x128xf32>
    %237 = arith.mulf %236, %235 : vector<4x128xf32>
    %238 = arith.mulf %225, %237 : vector<4x128xf32>
    %239 = arith.truncf %238 : vector<4x128xf32> to vector<4x128xbf16>
    %cst_76 = arith.constant dense<0.000000e+00> : vector<4x128xf32>
    %240 = tpu.matmul %239, %5, %cst_76 {dimension_numbers = #tpu.dot_dimension_numbers<[1], [0], [0], [1], [0, 0, 1, 1], [], []>} : vector<4x128xbf16>, vector<128x128xbf16>, vector<4x128xf32> -> vector<4x128xf32>
    %241 = arith.addf %240, %9 : vector<4x128xf32>
    %242 = vector.extract_strided_slice %241 {offsets = [0, 0], sizes = [4, 96], strides = [1, 1]} : vector<4x128xf32> to vector<4x96xf32>
    %243 = arith.negf %242 : vector<4x96xf32>
    %244 = math.exp %243 : vector<4x96xf32>
    %cst_77 = arith.constant 1.000000e+00 : f32
    %245 = vector.broadcast %cst_77 : f32 to vector<4x96xf32>
    %246 = arith.addf %245, %244 : vector<4x96xf32>
    %247 = arith.divf %245, %246 : vector<4x96xf32>
    %248 = vector.extract_strided_slice %247 {offsets = [0, 0], sizes = [4, 32], strides = [1, 1]} : vector<4x96xf32> to vector<4x32xf32>
    %249 = vector.extract_strided_slice %247 {offsets = [0, 32], sizes = [4, 32], strides = [1, 1]} : vector<4x96xf32> to vector<4x32xf32>
    %250 = vector.extract_strided_slice %247 {offsets = [0, 64], sizes = [4, 32], strides = [1, 1]} : vector<4x96xf32> to vector<4x32xf32>
    %251 = vector.extract_strided_slice %241 {offsets = [0, 96], sizes = [4, 32], strides = [1, 1]} : vector<4x128xf32> to vector<4x32xf32>
    %252 = vector.extract_strided_slice %16 {offsets = [0, 3, 0], sizes = [4, 1, 32], strides = [1, 1, 1]} : vector<4x8x32xbf16> to vector<4x1x32xbf16>
    %253 = vector.shape_cast %252 : vector<4x1x32xbf16> to vector<4x32xbf16>
    %254 = arith.extf %253 : vector<4x32xbf16> to vector<4x32xf32>
    %255 = arith.mulf %248, %217 : vector<4x32xf32>
    %256 = arith.mulf %249, %254 : vector<4x32xf32>
    %257 = arith.addf %255, %256 : vector<4x32xf32>
    %258 = arith.mulf %250, %251 : vector<4x32xf32>
    %259 = arith.addf %257, %258 : vector<4x32xf32>
    %cst_78 = arith.constant dense<0.000000e+00> : vector<4xf32>
    %260 = vector.multi_reduction <add>, %259, %cst_78 [1] : vector<4x32xf32> to vector<4xf32>
    %261 = vector.shape_cast %260 : vector<4xf32> to vector<4x1xf32>
    %cst_79 = arith.constant 3.125000e-02 : f32
    %262 = vector.broadcast %cst_79 : f32 to vector<4x1xf32>
    %263 = arith.mulf %261, %262 : vector<4x1xf32>
    %264 = vector.broadcast %263 : vector<4x1xf32> to vector<4x32xf32>
    %265 = arith.subf %259, %264 : vector<4x32xf32>
    %266 = arith.mulf %265, %265 : vector<4x32xf32>
    %cst_80 = arith.constant dense<0.000000e+00> : vector<4xf32>
    %267 = vector.multi_reduction <add>, %266, %cst_80 [1] : vector<4x32xf32> to vector<4xf32>
    %268 = vector.shape_cast %267 : vector<4xf32> to vector<4x1xf32>
    %cst_81 = arith.constant 3.125000e-02 : f32
    %269 = vector.broadcast %cst_81 : f32 to vector<4x1xf32>
    %270 = arith.mulf %268, %269 : vector<4x1xf32>
    %cst_82 = arith.constant 9.99999974E-6 : f32
    %271 = vector.broadcast %cst_82 : f32 to vector<4x1xf32>
    %272 = arith.addf %270, %271 : vector<4x1xf32>
    %273 = math.rsqrt %272 : vector<4x1xf32>
    %274 = vector.broadcast %273 : vector<4x1xf32> to vector<4x32xf32>
    %275 = arith.mulf %265, %274 : vector<4x32xf32>
    %276 = arith.mulf %275, %12 : vector<4x32xf32>
    %277 = arith.addf %276, %15 : vector<4x32xf32>
    %c0_83 = arith.constant 0 : index
    %c3 = arith.constant 3 : index
    %c0_84 = arith.constant 0 : index
    %278 = vector.load %arg3[%c0_83, %c3, %c0_84] : memref<4x8x1xf32, #tpu.memory_space<vmem>>, vector<4x1x1xf32>
    %279 = vector.shape_cast %278 : vector<4x1x1xf32> to vector<4x1xf32>
    %280 = arith.subf %277, %217 : vector<4x32xf32>
    %281 = vector.broadcast %279 : vector<4x1xf32> to vector<4x32xf32>
    %282 = arith.mulf %281, %280 : vector<4x32xf32>
    %283 = arith.addf %217, %282 : vector<4x32xf32>
    %c0_85 = arith.constant 0 : index
    %c3_86 = arith.constant 3 : index
    %c0_87 = arith.constant 0 : index
    %284 = vector.load %arg11[%c0_85, %c3_86, %c0_87] : memref<4x8x32xf32, #tpu.memory_space<vmem>>, vector<4x1x32xf32>
    %285 = vector.shape_cast %284 : vector<4x1x32xf32> to vector<4x32xf32>
    %286 = vector.shape_cast %283 : vector<4x32xf32> to vector<4x1x32xf32>
    tpu.vector_store %arg11[%c0_85, %c3_86, %c0_87], %286 {strides = array<i32>} : memref<4x8x32xf32, #tpu.memory_space<vmem>>, vector<4x1x32xf32>,
    %287 = vector.extract_strided_slice %21 {offsets = [0, 4, 0], sizes = [4, 1, 128], strides = [1, 1, 1]} : vector<4x8x128xf32> to vector<4x1x128xf32>
    %288 = vector.shape_cast %287 : vector<4x1x128xf32> to vector<4x128xf32>
    %289 = arith.truncf %283 : vector<4x32xf32> to vector<4x32xbf16>
    %cst_88 = arith.constant dense<0.000000e+00> : vector<4x128xf32>
    %290 = tpu.matmul %289, %3, %cst_88 {dimension_numbers = #tpu.dot_dimension_numbers<[1], [0], [0], [1], [0, 0, 1, 1], [], []>} : vector<4x32xbf16>, vector<32x128xbf16>, vector<4x128xf32> -> vector<4x128xf32>
    %291 = arith.addf %288, %290 : vector<4x128xf32>
    %292 = arith.mulf %291, %291 : vector<4x128xf32>
    %293 = arith.mulf %291, %292 : vector<4x128xf32>
    %cst_89 = arith.constant 4.471500e-02 : f32
    %294 = vector.broadcast %cst_89 : f32 to vector<4x128xf32>
    %295 = arith.mulf %294, %293 : vector<4x128xf32>
    %296 = arith.addf %291, %295 : vector<4x128xf32>
    %cst_90 = arith.constant 0.797884583 : f32
    %297 = vector.broadcast %cst_90 : f32 to vector<4x128xf32>
    %298 = arith.mulf %297, %296 : vector<4x128xf32>
    %299 = math.tanh %298 : vector<4x128xf32>
    %cst_91 = arith.constant 1.000000e+00 : f32
    %300 = vector.broadcast %cst_91 : f32 to vector<4x128xf32>
    %301 = arith.addf %300, %299 : vector<4x128xf32>
    %cst_92 = arith.constant 5.000000e-01 : f32
    %302 = vector.broadcast %cst_92 : f32 to vector<4x128xf32>
    %303 = arith.mulf %302, %301 : vector<4x128xf32>
    %304 = arith.mulf %291, %303 : vector<4x128xf32>
    %305 = arith.truncf %304 : vector<4x128xf32> to vector<4x128xbf16>
    %cst_93 = arith.constant dense<0.000000e+00> : vector<4x128xf32>
    %306 = tpu.matmul %305, %5, %cst_93 {dimension_numbers = #tpu.dot_dimension_numbers<[1], [0], [0], [1], [0, 0, 1, 1], [], []>} : vector<4x128xbf16>, vector<128x128xbf16>, vector<4x128xf32> -> vector<4x128xf32>
    %307 = arith.addf %306, %9 : vector<4x128xf32>
    %308 = vector.extract_strided_slice %307 {offsets = [0, 0], sizes = [4, 96], strides = [1, 1]} : vector<4x128xf32> to vector<4x96xf32>
    %309 = arith.negf %308 : vector<4x96xf32>
    %310 = math.exp %309 : vector<4x96xf32>
    %cst_94 = arith.constant 1.000000e+00 : f32
    %311 = vector.broadcast %cst_94 : f32 to vector<4x96xf32>
    %312 = arith.addf %311, %310 : vector<4x96xf32>
    %313 = arith.divf %311, %312 : vector<4x96xf32>
    %314 = vector.extract_strided_slice %313 {offsets = [0, 0], sizes = [4, 32], strides = [1, 1]} : vector<4x96xf32> to vector<4x32xf32>
    %315 = vector.extract_strided_slice %313 {offsets = [0, 32], sizes = [4, 32], strides = [1, 1]} : vector<4x96xf32> to vector<4x32xf32>
    %316 = vector.extract_strided_slice %313 {offsets = [0, 64], sizes = [4, 32], strides = [1, 1]} : vector<4x96xf32> to vector<4x32xf32>
    %317 = vector.extract_strided_slice %307 {offsets = [0, 96], sizes = [4, 32], strides = [1, 1]} : vector<4x128xf32> to vector<4x32xf32>
    %318 = vector.extract_strided_slice %16 {offsets = [0, 4, 0], sizes = [4, 1, 32], strides = [1, 1, 1]} : vector<4x8x32xbf16> to vector<4x1x32xbf16>
    %319 = vector.shape_cast %318 : vector<4x1x32xbf16> to vector<4x32xbf16>
    %320 = arith.extf %319 : vector<4x32xbf16> to vector<4x32xf32>
    %321 = arith.mulf %314, %283 : vector<4x32xf32>
    %322 = arith.mulf %315, %320 : vector<4x32xf32>
    %323 = arith.addf %321, %322 : vector<4x32xf32>
    %324 = arith.mulf %316, %317 : vector<4x32xf32>
    %325 = arith.addf %323, %324 : vector<4x32xf32>
    %cst_95 = arith.constant dense<0.000000e+00> : vector<4xf32>
    %326 = vector.multi_reduction <add>, %325, %cst_95 [1] : vector<4x32xf32> to vector<4xf32>
    %327 = vector.shape_cast %326 : vector<4xf32> to vector<4x1xf32>
    %cst_96 = arith.constant 3.125000e-02 : f32
    %328 = vector.broadcast %cst_96 : f32 to vector<4x1xf32>
    %329 = arith.mulf %327, %328 : vector<4x1xf32>
    %330 = vector.broadcast %329 : vector<4x1xf32> to vector<4x32xf32>
    %331 = arith.subf %325, %330 : vector<4x32xf32>
    %332 = arith.mulf %331, %331 : vector<4x32xf32>
    %cst_97 = arith.constant dense<0.000000e+00> : vector<4xf32>
    %333 = vector.multi_reduction <add>, %332, %cst_97 [1] : vector<4x32xf32> to vector<4xf32>
    %334 = vector.shape_cast %333 : vector<4xf32> to vector<4x1xf32>
    %cst_98 = arith.constant 3.125000e-02 : f32
    %335 = vector.broadcast %cst_98 : f32 to vector<4x1xf32>
    %336 = arith.mulf %334, %335 : vector<4x1xf32>
    %cst_99 = arith.constant 9.99999974E-6 : f32
    %337 = vector.broadcast %cst_99 : f32 to vector<4x1xf32>
    %338 = arith.addf %336, %337 : vector<4x1xf32>
    %339 = math.rsqrt %338 : vector<4x1xf32>
    %340 = vector.broadcast %339 : vector<4x1xf32> to vector<4x32xf32>
    %341 = arith.mulf %331, %340 : vector<4x32xf32>
    %342 = arith.mulf %341, %12 : vector<4x32xf32>
    %343 = arith.addf %342, %15 : vector<4x32xf32>
    %c0_100 = arith.constant 0 : index
    %c4 = arith.constant 4 : index
    %c0_101 = arith.constant 0 : index
    %344 = vector.load %arg3[%c0_100, %c4, %c0_101] : memref<4x8x1xf32, #tpu.memory_space<vmem>>, vector<4x1x1xf32>
    %345 = vector.shape_cast %344 : vector<4x1x1xf32> to vector<4x1xf32>
    %346 = arith.subf %343, %283 : vector<4x32xf32>
    %347 = vector.broadcast %345 : vector<4x1xf32> to vector<4x32xf32>
    %348 = arith.mulf %347, %346 : vector<4x32xf32>
    %349 = arith.addf %283, %348 : vector<4x32xf32>
    %c0_102 = arith.constant 0 : index
    %c4_103 = arith.constant 4 : index
    %c0_104 = arith.constant 0 : index
    %350 = vector.load %arg11[%c0_102, %c4_103, %c0_104] : memref<4x8x32xf32, #tpu.memory_space<vmem>>, vector<4x1x32xf32>
    %351 = vector.shape_cast %350 : vector<4x1x32xf32> to vector<4x32xf32>
    %352 = vector.shape_cast %349 : vector<4x32xf32> to vector<4x1x32xf32>
    tpu.vector_store %arg11[%c0_102, %c4_103, %c0_104], %352 {strides = array<i32>} : memref<4x8x32xf32, #tpu.memory_space<vmem>>, vector<4x1x32xf32>,
    %353 = vector.extract_strided_slice %21 {offsets = [0, 5, 0], sizes = [4, 1, 128], strides = [1, 1, 1]} : vector<4x8x128xf32> to vector<4x1x128xf32>
    %354 = vector.shape_cast %353 : vector<4x1x128xf32> to vector<4x128xf32>
    %355 = arith.truncf %349 : vector<4x32xf32> to vector<4x32xbf16>
    %cst_105 = arith.constant dense<0.000000e+00> : vector<4x128xf32>
    %356 = tpu.matmul %355, %3, %cst_105 {dimension_numbers = #tpu.dot_dimension_numbers<[1], [0], [0], [1], [0, 0, 1, 1], [], []>} : vector<4x32xbf16>, vector<32x128xbf16>, vector<4x128xf32> -> vector<4x128xf32>
    %357 = arith.addf %354, %356 : vector<4x128xf32>
    %358 = arith.mulf %357, %357 : vector<4x128xf32>
    %359 = arith.mulf %357, %358 : vector<4x128xf32>
    %cst_106 = arith.constant 4.471500e-02 : f32
    %360 = vector.broadcast %cst_106 : f32 to vector<4x128xf32>
    %361 = arith.mulf %360, %359 : vector<4x128xf32>
    %362 = arith.addf %357, %361 : vector<4x128xf32>
    %cst_107 = arith.constant 0.797884583 : f32
    %363 = vector.broadcast %cst_107 : f32 to vector<4x128xf32>
    %364 = arith.mulf %363, %362 : vector<4x128xf32>
    %365 = math.tanh %364 : vector<4x128xf32>
    %cst_108 = arith.constant 1.000000e+00 : f32
    %366 = vector.broadcast %cst_108 : f32 to vector<4x128xf32>
    %367 = arith.addf %366, %365 : vector<4x128xf32>
    %cst_109 = arith.constant 5.000000e-01 : f32
    %368 = vector.broadcast %cst_109 : f32 to vector<4x128xf32>
    %369 = arith.mulf %368, %367 : vector<4x128xf32>
    %370 = arith.mulf %357, %369 : vector<4x128xf32>
    %371 = arith.truncf %370 : vector<4x128xf32> to vector<4x128xbf16>
    %cst_110 = arith.constant dense<0.000000e+00> : vector<4x128xf32>
    %372 = tpu.matmul %371, %5, %cst_110 {dimension_numbers = #tpu.dot_dimension_numbers<[1], [0], [0], [1], [0, 0, 1, 1], [], []>} : vector<4x128xbf16>, vector<128x128xbf16>, vector<4x128xf32> -> vector<4x128xf32>
    %373 = arith.addf %372, %9 : vector<4x128xf32>
    %374 = vector.extract_strided_slice %373 {offsets = [0, 0], sizes = [4, 96], strides = [1, 1]} : vector<4x128xf32> to vector<4x96xf32>
    %375 = arith.negf %374 : vector<4x96xf32>
    %376 = math.exp %375 : vector<4x96xf32>
    %cst_111 = arith.constant 1.000000e+00 : f32
    %377 = vector.broadcast %cst_111 : f32 to vector<4x96xf32>
    %378 = arith.addf %377, %376 : vector<4x96xf32>
    %379 = arith.divf %377, %378 : vector<4x96xf32>
    %380 = vector.extract_strided_slice %379 {offsets = [0, 0], sizes = [4, 32], strides = [1, 1]} : vector<4x96xf32> to vector<4x32xf32>
    %381 = vector.extract_strided_slice %379 {offsets = [0, 32], sizes = [4, 32], strides = [1, 1]} : vector<4x96xf32> to vector<4x32xf32>
    %382 = vector.extract_strided_slice %379 {offsets = [0, 64], sizes = [4, 32], strides = [1, 1]} : vector<4x96xf32> to vector<4x32xf32>
    %383 = vector.extract_strided_slice %373 {offsets = [0, 96], sizes = [4, 32], strides = [1, 1]} : vector<4x128xf32> to vector<4x32xf32>
    %384 = vector.extract_strided_slice %16 {offsets = [0, 5, 0], sizes = [4, 1, 32], strides = [1, 1, 1]} : vector<4x8x32xbf16> to vector<4x1x32xbf16>
    %385 = vector.shape_cast %384 : vector<4x1x32xbf16> to vector<4x32xbf16>
    %386 = arith.extf %385 : vector<4x32xbf16> to vector<4x32xf32>
    %387 = arith.mulf %380, %349 : vector<4x32xf32>
    %388 = arith.mulf %381, %386 : vector<4x32xf32>
    %389 = arith.addf %387, %388 : vector<4x32xf32>
    %390 = arith.mulf %382, %383 : vector<4x32xf32>
    %391 = arith.addf %389, %390 : vector<4x32xf32>
    %cst_112 = arith.constant dense<0.000000e+00> : vector<4xf32>
    %392 = vector.multi_reduction <add>, %391, %cst_112 [1] : vector<4x32xf32> to vector<4xf32>
    %393 = vector.shape_cast %392 : vector<4xf32> to vector<4x1xf32>
    %cst_113 = arith.constant 3.125000e-02 : f32
    %394 = vector.broadcast %cst_113 : f32 to vector<4x1xf32>
    %395 = arith.mulf %393, %394 : vector<4x1xf32>
    %396 = vector.broadcast %395 : vector<4x1xf32> to vector<4x32xf32>
    %397 = arith.subf %391, %396 : vector<4x32xf32>
    %398 = arith.mulf %397, %397 : vector<4x32xf32>
    %cst_114 = arith.constant dense<0.000000e+00> : vector<4xf32>
    %399 = vector.multi_reduction <add>, %398, %cst_114 [1] : vector<4x32xf32> to vector<4xf32>
    %400 = vector.shape_cast %399 : vector<4xf32> to vector<4x1xf32>
    %cst_115 = arith.constant 3.125000e-02 : f32
    %401 = vector.broadcast %cst_115 : f32 to vector<4x1xf32>
    %402 = arith.mulf %400, %401 : vector<4x1xf32>
    %cst_116 = arith.constant 9.99999974E-6 : f32
    %403 = vector.broadcast %cst_116 : f32 to vector<4x1xf32>
    %404 = arith.addf %402, %403 : vector<4x1xf32>
    %405 = math.rsqrt %404 : vector<4x1xf32>
    %406 = vector.broadcast %405 : vector<4x1xf32> to vector<4x32xf32>
    %407 = arith.mulf %397, %406 : vector<4x32xf32>
    %408 = arith.mulf %407, %12 : vector<4x32xf32>
    %409 = arith.addf %408, %15 : vector<4x32xf32>
    %c0_117 = arith.constant 0 : index
    %c5 = arith.constant 5 : index
    %c0_118 = arith.constant 0 : index
    %410 = vector.load %arg3[%c0_117, %c5, %c0_118] : memref<4x8x1xf32, #tpu.memory_space<vmem>>, vector<4x1x1xf32>
    %411 = vector.shape_cast %410 : vector<4x1x1xf32> to vector<4x1xf32>
    %412 = arith.subf %409, %349 : vector<4x32xf32>
    %413 = vector.broadcast %411 : vector<4x1xf32> to vector<4x32xf32>
    %414 = arith.mulf %413, %412 : vector<4x32xf32>
    %415 = arith.addf %349, %414 : vector<4x32xf32>
    %c0_119 = arith.constant 0 : index
    %c5_120 = arith.constant 5 : index
    %c0_121 = arith.constant 0 : index
    %416 = vector.load %arg11[%c0_119, %c5_120, %c0_121] : memref<4x8x32xf32, #tpu.memory_space<vmem>>, vector<4x1x32xf32>
    %417 = vector.shape_cast %416 : vector<4x1x32xf32> to vector<4x32xf32>
    %418 = vector.shape_cast %415 : vector<4x32xf32> to vector<4x1x32xf32>
    tpu.vector_store %arg11[%c0_119, %c5_120, %c0_121], %418 {strides = array<i32>} : memref<4x8x32xf32, #tpu.memory_space<vmem>>, vector<4x1x32xf32>,
    %419 = vector.extract_strided_slice %21 {offsets = [0, 6, 0], sizes = [4, 1, 128], strides = [1, 1, 1]} : vector<4x8x128xf32> to vector<4x1x128xf32>
    %420 = vector.shape_cast %419 : vector<4x1x128xf32> to vector<4x128xf32>
    %421 = arith.truncf %415 : vector<4x32xf32> to vector<4x32xbf16>
    %cst_122 = arith.constant dense<0.000000e+00> : vector<4x128xf32>
    %422 = tpu.matmul %421, %3, %cst_122 {dimension_numbers = #tpu.dot_dimension_numbers<[1], [0], [0], [1], [0, 0, 1, 1], [], []>} : vector<4x32xbf16>, vector<32x128xbf16>, vector<4x128xf32> -> vector<4x128xf32>
    %423 = arith.addf %420, %422 : vector<4x128xf32>
    %424 = arith.mulf %423, %423 : vector<4x128xf32>
    %425 = arith.mulf %423, %424 : vector<4x128xf32>
    %cst_123 = arith.constant 4.471500e-02 : f32
    %426 = vector.broadcast %cst_123 : f32 to vector<4x128xf32>
    %427 = arith.mulf %426, %425 : vector<4x128xf32>
    %428 = arith.addf %423, %427 : vector<4x128xf32>
    %cst_124 = arith.constant 0.797884583 : f32
    %429 = vector.broadcast %cst_124 : f32 to vector<4x128xf32>
    %430 = arith.mulf %429, %428 : vector<4x128xf32>
    %431 = math.tanh %430 : vector<4x128xf32>
    %cst_125 = arith.constant 1.000000e+00 : f32
    %432 = vector.broadcast %cst_125 : f32 to vector<4x128xf32>
    %433 = arith.addf %432, %431 : vector<4x128xf32>
    %cst_126 = arith.constant 5.000000e-01 : f32
    %434 = vector.broadcast %cst_126 : f32 to vector<4x128xf32>
    %435 = arith.mulf %434, %433 : vector<4x128xf32>
    %436 = arith.mulf %423, %435 : vector<4x128xf32>
    %437 = arith.truncf %436 : vector<4x128xf32> to vector<4x128xbf16>
    %cst_127 = arith.constant dense<0.000000e+00> : vector<4x128xf32>
    %438 = tpu.matmul %437, %5, %cst_127 {dimension_numbers = #tpu.dot_dimension_numbers<[1], [0], [0], [1], [0, 0, 1, 1], [], []>} : vector<4x128xbf16>, vector<128x128xbf16>, vector<4x128xf32> -> vector<4x128xf32>
    %439 = arith.addf %438, %9 : vector<4x128xf32>
    %440 = vector.extract_strided_slice %439 {offsets = [0, 0], sizes = [4, 96], strides = [1, 1]} : vector<4x128xf32> to vector<4x96xf32>
    %441 = arith.negf %440 : vector<4x96xf32>
    %442 = math.exp %441 : vector<4x96xf32>
    %cst_128 = arith.constant 1.000000e+00 : f32
    %443 = vector.broadcast %cst_128 : f32 to vector<4x96xf32>
    %444 = arith.addf %443, %442 : vector<4x96xf32>
    %445 = arith.divf %443, %444 : vector<4x96xf32>
    %446 = vector.extract_strided_slice %445 {offsets = [0, 0], sizes = [4, 32], strides = [1, 1]} : vector<4x96xf32> to vector<4x32xf32>
    %447 = vector.extract_strided_slice %445 {offsets = [0, 32], sizes = [4, 32], strides = [1, 1]} : vector<4x96xf32> to vector<4x32xf32>
    %448 = vector.extract_strided_slice %445 {offsets = [0, 64], sizes = [4, 32], strides = [1, 1]} : vector<4x96xf32> to vector<4x32xf32>
    %449 = vector.extract_strided_slice %439 {offsets = [0, 96], sizes = [4, 32], strides = [1, 1]} : vector<4x128xf32> to vector<4x32xf32>
    %450 = vector.extract_strided_slice %16 {offsets = [0, 6, 0], sizes = [4, 1, 32], strides = [1, 1, 1]} : vector<4x8x32xbf16> to vector<4x1x32xbf16>
    %451 = vector.shape_cast %450 : vector<4x1x32xbf16> to vector<4x32xbf16>
    %452 = arith.extf %451 : vector<4x32xbf16> to vector<4x32xf32>
    %453 = arith.mulf %446, %415 : vector<4x32xf32>
    %454 = arith.mulf %447, %452 : vector<4x32xf32>
    %455 = arith.addf %453, %454 : vector<4x32xf32>
    %456 = arith.mulf %448, %449 : vector<4x32xf32>
    %457 = arith.addf %455, %456 : vector<4x32xf32>
    %cst_129 = arith.constant dense<0.000000e+00> : vector<4xf32>
    %458 = vector.multi_reduction <add>, %457, %cst_129 [1] : vector<4x32xf32> to vector<4xf32>
    %459 = vector.shape_cast %458 : vector<4xf32> to vector<4x1xf32>
    %cst_130 = arith.constant 3.125000e-02 : f32
    %460 = vector.broadcast %cst_130 : f32 to vector<4x1xf32>
    %461 = arith.mulf %459, %460 : vector<4x1xf32>
    %462 = vector.broadcast %461 : vector<4x1xf32> to vector<4x32xf32>
    %463 = arith.subf %457, %462 : vector<4x32xf32>
    %464 = arith.mulf %463, %463 : vector<4x32xf32>
    %cst_131 = arith.constant dense<0.000000e+00> : vector<4xf32>
    %465 = vector.multi_reduction <add>, %464, %cst_131 [1] : vector<4x32xf32> to vector<4xf32>
    %466 = vector.shape_cast %465 : vector<4xf32> to vector<4x1xf32>
    %cst_132 = arith.constant 3.125000e-02 : f32
    %467 = vector.broadcast %cst_132 : f32 to vector<4x1xf32>
    %468 = arith.mulf %466, %467 : vector<4x1xf32>
    %cst_133 = arith.constant 9.99999974E-6 : f32
    %469 = vector.broadcast %cst_133 : f32 to vector<4x1xf32>
    %470 = arith.addf %468, %469 : vector<4x1xf32>
    %471 = math.rsqrt %470 : vector<4x1xf32>
    %472 = vector.broadcast %471 : vector<4x1xf32> to vector<4x32xf32>
    %473 = arith.mulf %463, %472 : vector<4x32xf32>
    %474 = arith.mulf %473, %12 : vector<4x32xf32>
    %475 = arith.addf %474, %15 : vector<4x32xf32>
    %c0_134 = arith.constant 0 : index
    %c6 = arith.constant 6 : index
    %c0_135 = arith.constant 0 : index
    %476 = vector.load %arg3[%c0_134, %c6, %c0_135] : memref<4x8x1xf32, #tpu.memory_space<vmem>>, vector<4x1x1xf32>
    %477 = vector.shape_cast %476 : vector<4x1x1xf32> to vector<4x1xf32>
    %478 = arith.subf %475, %415 : vector<4x32xf32>
    %479 = vector.broadcast %477 : vector<4x1xf32> to vector<4x32xf32>
    %480 = arith.mulf %479, %478 : vector<4x32xf32>
    %481 = arith.addf %415, %480 : vector<4x32xf32>
    %c0_136 = arith.constant 0 : index
    %c6_137 = arith.constant 6 : index
    %c0_138 = arith.constant 0 : index
    %482 = vector.load %arg11[%c0_136, %c6_137, %c0_138] : memref<4x8x32xf32, #tpu.memory_space<vmem>>, vector<4x1x32xf32>
    %483 = vector.shape_cast %482 : vector<4x1x32xf32> to vector<4x32xf32>
    %484 = vector.shape_cast %481 : vector<4x32xf32> to vector<4x1x32xf32>
    tpu.vector_store %arg11[%c0_136, %c6_137, %c0_138], %484 {strides = array<i32>} : memref<4x8x32xf32, #tpu.memory_space<vmem>>, vector<4x1x32xf32>,
    %485 = vector.extract_strided_slice %21 {offsets = [0, 7, 0], sizes = [4, 1, 128], strides = [1, 1, 1]} : vector<4x8x128xf32> to vector<4x1x128xf32>
    %486 = vector.shape_cast %485 : vector<4x1x128xf32> to vector<4x128xf32>
    %487 = arith.truncf %481 : vector<4x32xf32> to vector<4x32xbf16>
    %cst_139 = arith.constant dense<0.000000e+00> : vector<4x128xf32>
    %488 = tpu.matmul %487, %3, %cst_139 {dimension_numbers = #tpu.dot_dimension_numbers<[1], [0], [0], [1], [0, 0, 1, 1], [], []>} : vector<4x32xbf16>, vector<32x128xbf16>, vector<4x128xf32> -> vector<4x128xf32>
    %489 = arith.addf %486, %488 : vector<4x128xf32>
    %490 = arith.mulf %489, %489 : vector<4x128xf32>
    %491 = arith.mulf %489, %490 : vector<4x128xf32>
    %cst_140 = arith.constant 4.471500e-02 : f32
    %492 = vector.broadcast %cst_140 : f32 to vector<4x128xf32>
    %493 = arith.mulf %492, %491 : vector<4x128xf32>
    %494 = arith.addf %489, %493 : vector<4x128xf32>
    %cst_141 = arith.constant 0.797884583 : f32
    %495 = vector.broadcast %cst_141 : f32 to vector<4x128xf32>
    %496 = arith.mulf %495, %494 : vector<4x128xf32>
    %497 = math.tanh %496 : vector<4x128xf32>
    %cst_142 = arith.constant 1.000000e+00 : f32
    %498 = vector.broadcast %cst_142 : f32 to vector<4x128xf32>
    %499 = arith.addf %498, %497 : vector<4x128xf32>
    %cst_143 = arith.constant 5.000000e-01 : f32
    %500 = vector.broadcast %cst_143 : f32 to vector<4x128xf32>
    %501 = arith.mulf %500, %499 : vector<4x128xf32>
    %502 = arith.mulf %489, %501 : vector<4x128xf32>
    %503 = arith.truncf %502 : vector<4x128xf32> to vector<4x128xbf16>
    %cst_144 = arith.constant dense<0.000000e+00> : vector<4x128xf32>
    %504 = tpu.matmul %503, %5, %cst_144 {dimension_numbers = #tpu.dot_dimension_numbers<[1], [0], [0], [1], [0, 0, 1, 1], [], []>} : vector<4x128xbf16>, vector<128x128xbf16>, vector<4x128xf32> -> vector<4x128xf32>
    %505 = arith.addf %504, %9 : vector<4x128xf32>
    %506 = vector.extract_strided_slice %505 {offsets = [0, 0], sizes = [4, 96], strides = [1, 1]} : vector<4x128xf32> to vector<4x96xf32>
    %507 = arith.negf %506 : vector<4x96xf32>
    %508 = math.exp %507 : vector<4x96xf32>
    %cst_145 = arith.constant 1.000000e+00 : f32
    %509 = vector.broadcast %cst_145 : f32 to vector<4x96xf32>
    %510 = arith.addf %509, %508 : vector<4x96xf32>
    %511 = arith.divf %509, %510 : vector<4x96xf32>
    %512 = vector.extract_strided_slice %511 {offsets = [0, 0], sizes = [4, 32], strides = [1, 1]} : vector<4x96xf32> to vector<4x32xf32>
    %513 = vector.extract_strided_slice %511 {offsets = [0, 32], sizes = [4, 32], strides = [1, 1]} : vector<4x96xf32> to vector<4x32xf32>
    %514 = vector.extract_strided_slice %511 {offsets = [0, 64], sizes = [4, 32], strides = [1, 1]} : vector<4x96xf32> to vector<4x32xf32>
    %515 = vector.extract_strided_slice %505 {offsets = [0, 96], sizes = [4, 32], strides = [1, 1]} : vector<4x128xf32> to vector<4x32xf32>
    %516 = vector.extract_strided_slice %16 {offsets = [0, 7, 0], sizes = [4, 1, 32], strides = [1, 1, 1]} : vector<4x8x32xbf16> to vector<4x1x32xbf16>
    %517 = vector.shape_cast %516 : vector<4x1x32xbf16> to vector<4x32xbf16>
    %518 = arith.extf %517 : vector<4x32xbf16> to vector<4x32xf32>
    %519 = arith.mulf %512, %481 : vector<4x32xf32>
    %520 = arith.mulf %513, %518 : vector<4x32xf32>
    %521 = arith.addf %519, %520 : vector<4x32xf32>
    %522 = arith.mulf %514, %515 : vector<4x32xf32>
    %523 = arith.addf %521, %522 : vector<4x32xf32>
    %cst_146 = arith.constant dense<0.000000e+00> : vector<4xf32>
    %524 = vector.multi_reduction <add>, %523, %cst_146 [1] : vector<4x32xf32> to vector<4xf32>
    %525 = vector.shape_cast %524 : vector<4xf32> to vector<4x1xf32>
    %cst_147 = arith.constant 3.125000e-02 : f32
    %526 = vector.broadcast %cst_147 : f32 to vector<4x1xf32>
    %527 = arith.mulf %525, %526 : vector<4x1xf32>
    %528 = vector.broadcast %527 : vector<4x1xf32> to vector<4x32xf32>
    %529 = arith.subf %523, %528 : vector<4x32xf32>
    %530 = arith.mulf %529, %529 : vector<4x32xf32>
    %cst_148 = arith.constant dense<0.000000e+00> : vector<4xf32>
    %531 = vector.multi_reduction <add>, %530, %cst_148 [1] : vector<4x32xf32> to vector<4xf32>
    %532 = vector.shape_cast %531 : vector<4xf32> to vector<4x1xf32>
    %cst_149 = arith.constant 3.125000e-02 : f32
    %533 = vector.broadcast %cst_149 : f32 to vector<4x1xf32>
    %534 = arith.mulf %532, %533 : vector<4x1xf32>
    %cst_150 = arith.constant 9.99999974E-6 : f32
    %535 = vector.broadcast %cst_150 : f32 to vector<4x1xf32>
    %536 = arith.addf %534, %535 : vector<4x1xf32>
    %537 = math.rsqrt %536 : vector<4x1xf32>
    %538 = vector.broadcast %537 : vector<4x1xf32> to vector<4x32xf32>
    %539 = arith.mulf %529, %538 : vector<4x32xf32>
    %540 = arith.mulf %539, %12 : vector<4x32xf32>
    %541 = arith.addf %540, %15 : vector<4x32xf32>
    %c0_151 = arith.constant 0 : index
    %c7 = arith.constant 7 : index
    %c0_152 = arith.constant 0 : index
    %542 = vector.load %arg3[%c0_151, %c7, %c0_152] : memref<4x8x1xf32, #tpu.memory_space<vmem>>, vector<4x1x1xf32>
    %543 = vector.shape_cast %542 : vector<4x1x1xf32> to vector<4x1xf32>
    %544 = arith.subf %541, %481 : vector<4x32xf32>
    %545 = vector.broadcast %543 : vector<4x1xf32> to vector<4x32xf32>
    %546 = arith.mulf %545, %544 : vector<4x32xf32>
    %547 = arith.addf %481, %546 : vector<4x32xf32>
    %c0_153 = arith.constant 0 : index
    %c7_154 = arith.constant 7 : index
    %c0_155 = arith.constant 0 : index
    %548 = vector.load %arg11[%c0_153, %c7_154, %c0_155] : memref<4x8x32xf32, #tpu.memory_space<vmem>>, vector<4x1x32xf32>
    %549 = vector.shape_cast %548 : vector<4x1x32xf32> to vector<4x32xf32>
    %550 = vector.shape_cast %547 : vector<4x32xf32> to vector<4x1x32xf32>
    tpu.vector_store %arg11[%c0_153, %c7_154, %c0_155], %550 {strides = array<i32>} : memref<4x8x32xf32, #tpu.memory_space<vmem>>, vector<4x1x32xf32>,
    %c0_156 = arith.constant 0 : index
    %c0_157 = arith.constant 0 : index
    %551 = vector.load %arg13[%c0_156, %c0_157] : memref<4x32xf32, #tpu.memory_space<vmem>>, vector<4x32xf32>
    tpu.vector_store %arg13[%c0_156, %c0_157], %547 {strides = array<i32>} : memref<4x32xf32, #tpu.memory_space<vmem>>, vector<4x32xf32>,
    %c0_i32_158 = arith.constant 0 : i32
    %552 = arith.cmpi eq, %arg1, %c0_i32_158 : i32
    %553 = arith.extui %552 : i1 to i32
    %c0_i32_159 = arith.constant 0 : i32
    %554 = arith.cmpi ne, %553, %c0_i32_159 : i32
    scf.if %554 {
      %c0_160 = arith.constant 0 : index
      %c0_161 = arith.constant 0 : index
      %555 = vector.load %arg12[%c0_160, %c0_161] : memref<4x32xf32, #tpu.memory_space<vmem>>, vector<4x32xf32>
      tpu.vector_store %arg12[%c0_160, %c0_161], %547 {strides = array<i32>} : memref<4x32xf32, #tpu.memory_space<vmem>>, vector<4x32xf32>,
    } else {
    }
    return
  }
  func.func @transform_0(%arg0: i32, %arg1: i32) -> (i32, i32, i32) {
    %c0_i32 = arith.constant 0 : i32
    %c0_i32_0 = arith.constant 0 : i32
    return %arg0, %arg1, %c0_i32 : i32, i32, i32
  }
  func.func @transform_1(%arg0: i32, %arg1: i32) -> (i32, i32, i32) {
    %c0_i32 = arith.constant 0 : i32
    %c0_i32_0 = arith.constant 0 : i32
    return %arg0, %arg1, %c0_i32 : i32, i32, i32
  }
  func.func @transform_2(%arg0: i32, %arg1: i32) -> (i32, i32) {
    %c0_i32 = arith.constant 0 : i32
    %c0_i32_0 = arith.constant 0 : i32
    %c0_i32_1 = arith.constant 0 : i32
    return %c0_i32, %c0_i32_0 : i32, i32
  }
  func.func @transform_3(%arg0: i32, %arg1: i32) -> (i32, i32) {
    %c0_i32 = arith.constant 0 : i32
    %c0_i32_0 = arith.constant 0 : i32
    %c0_i32_1 = arith.constant 0 : i32
    return %c0_i32, %c0_i32_0 : i32, i32
  }
  func.func @transform_4(%arg0: i32, %arg1: i32) -> (i32, i32) {
    %c0_i32 = arith.constant 0 : i32
    %c0_i32_0 = arith.constant 0 : i32
    %c0_i32_1 = arith.constant 0 : i32
    return %c0_i32, %c0_i32_0 : i32, i32
  }
  func.func @transform_5(%arg0: i32, %arg1: i32) -> (i32, i32) {
    %c0_i32 = arith.constant 0 : i32
    %c0_i32_0 = arith.constant 0 : i32
    %c0_i32_1 = arith.constant 0 : i32
    return %c0_i32, %c0_i32_0 : i32, i32
  }
  func.func @transform_6(%arg0: i32, %arg1: i32) -> (i32, i32) {
    %c0_i32 = arith.constant 0 : i32
    %c0_i32_0 = arith.constant 0 : i32
    %c0_i32_1 = arith.constant 0 : i32
    return %c0_i32, %c0_i32_0 : i32, i32
  }
  func.func @transform_7(%arg0: i32, %arg1: i32) -> (i32, i32) {
    %c0_i32 = arith.constant 0 : i32
    %c0_i32_0 = arith.constant 0 : i32
    %c0_i32_1 = arith.constant 0 : i32
    return %c0_i32, %c0_i32_0 : i32, i32
  }
  func.func @transform_8(%arg0: i32, %arg1: i32) -> (i32, i32) {
    %c0_i32 = arith.constant 0 : i32
    %c0_i32_0 = arith.constant 0 : i32
    %c0_i32_1 = arith.constant 0 : i32
    return %c0_i32, %c0_i32_0 : i32, i32
  }
  func.func @transform_9(%arg0: i32, %arg1: i32) -> (i32, i32, i32) {
    %c0_i32 = arith.constant 0 : i32
    %c0_i32_0 = arith.constant 0 : i32
    return %arg0, %arg1, %c0_i32 : i32, i32, i32
  }
  func.func @transform_10(%arg0: i32, %arg1: i32) -> (i32, i32) {
    %c0_i32 = arith.constant 0 : i32
    %c0_i32_0 = arith.constant 0 : i32
    return %arg0, %c0_i32 : i32, i32
  }
}

module attributes {stable_mosaic.version = 11 : i64} {
  func.func @_grc_recurrent_kernel(%arg0: i32, %arg1: i32, %arg2: memref<4x8x32xbf16, #tpu.memory_space<vmem>>, %arg3: memref<4x8x1xf32, #tpu.memory_space<vmem>>, %arg4: memref<32x128xbf16, #tpu.memory_space<vmem>>, %arg5: memref<32x128xbf16, #tpu.memory_space<vmem>>, %arg6: memref<1x128xf32, #tpu.memory_space<vmem>>, %arg7: memref<128x128xbf16, #tpu.memory_space<vmem>>, %arg8: memref<1x128xf32, #tpu.memory_space<vmem>>, %arg9: memref<1x32xf32, #tpu.memory_space<vmem>>, %arg10: memref<1x32xf32, #tpu.memory_space<vmem>>, %arg11: memref<4x8x32xf32, #tpu.memory_space<vmem>>, %arg12: memref<4x32xf32, #tpu.memory_space<vmem>>, %arg13: memref<4x32xf32, #tpu.memory_space<vmem>>) attributes {dimension_semantics = [#tpu.dimension_semantics<parallel>, #tpu.dimension_semantics<arbitrary>], iteration_bounds = array<i64: 1, 1>, scalar_prefetch = 0 : i64, scratch_operands = 1 : i64, tpu.core_type = #tpu.core_type<tc>, window_params = [{transform_indices = @transform_0, window_bounds = array<i64: 4, 8, 32>}, {transform_indices = @transform_1, window_bounds = array<i64: 4, 8, 1>}, {pipeline_mode = #tpu.pipeline_mode<synchronous>, transform_indices = @transform_2, window_bounds = array<i64: 32, 128>}, {pipeline_mode = #tpu.pipeline_mode<synchronous>, transform_indices = @transform_3, window_bounds = array<i64: 32, 128>}, {pipeline_mode = #tpu.pipeline_mode<synchronous>, transform_indices = @transform_4, window_bounds = array<i64: 1, 128>}, {pipeline_mode = #tpu.pipeline_mode<synchronous>, transform_indices = @transform_5, window_bounds = array<i64: 128, 128>}, {pipeline_mode = #tpu.pipeline_mode<synchronous>, transform_indices = @transform_6, window_bounds = array<i64: 1, 128>}, {pipeline_mode = #tpu.pipeline_mode<synchronous>, transform_indices = @transform_7, window_bounds = array<i64: 1, 32>}, {pipeline_mode = #tpu.pipeline_mode<synchronous>, transform_indices = @transform_8, window_bounds = array<i64: 1, 32>}, {transform_indices = @transform_9, window_bounds = array<i64: 4, 8, 32>}, {transform_indices = @transform_10, window_bounds = array<i64: 4, 32>}]} {
    %c0_i32 = arith.constant 0 : i32
    %0 = arith.cmpi eq, %arg1, %c0_i32 : i32
    %1 = arith.extui %0 : i1 to i32
    %c0_i32_0 = arith.constant 0 : i32
    %2 = arith.cmpi ne, %1, %c0_i32_0 : i32
    scf.if %2 {
      %cst_160 = arith.constant 0.000000e+00 : f32
      %555 = vector.broadcast %cst_160 : f32 to vector<4x32xf32>
      %c0_161 = arith.constant 0 : index
      %c0_162 = arith.constant 0 : index
      %556 = vector.load %arg13[%c0_161, %c0_162] : memref<4x32xf32, #tpu.memory_space<vmem>>, vector<4x32xf32>
      tpu.vector_store %arg13[%c0_161, %c0_162], %555 {strides = array<i32>} : memref<4x32xf32, #tpu.memory_space<vmem>>, vector<4x32xf32>,
    } else {
    }
    %c0 = arith.constant 0 : index
    %c0_1 = arith.constant 0 : index
    %3 = vector.load %arg4[%c0, %c0_1] : memref<32x128xbf16, #tpu.memory_space<vmem>>, vector<32x128xbf16>
    %c0_2 = arith.constant 0 : index
    %c0_3 = arith.constant 0 : index
    %4 = vector.load %arg5[%c0_2, %c0_3] : memref<32x128xbf16, #tpu.memory_space<vmem>>, vector<32x128xbf16>
    %c0_4 = arith.constant 0 : index
    %c0_5 = arith.constant 0 : index
    %5 = vector.load %arg7[%c0_4, %c0_5] : memref<128x128xbf16, #tpu.memory_space<vmem>>, vector<128x128xbf16>
    %c0_6 = arith.constant 0 : index
    %c0_7 = arith.constant 0 : index
    %6 = vector.load %arg6[%c0_6, %c0_7] : memref<1x128xf32, #tpu.memory_space<vmem>>, vector<1x128xf32>
    %c0_8 = arith.constant 0 : index
    %c0_9 = arith.constant 0 : index
    %7 = vector.load %arg8[%c0_8, %c0_9] : memref<1x128xf32, #tpu.memory_space<vmem>>, vector<1x128xf32>
    %8 = vector.shape_cast %7 : vector<1x128xf32> to vector<1x128xf32>
    %9 = vector.broadcast %8 : vector<1x128xf32> to vector<4x128xf32>
    %c0_10 = arith.constant 0 : index
    %c0_11 = arith.constant 0 : index
    %10 = vector.load %arg9[%c0_10, %c0_11] : memref<1x32xf32, #tpu.memory_space<vmem>>, vector<1x32xf32>
    %11 = vector.shape_cast %10 : vector<1x32xf32> to vector<1x32xf32>
    %12 = vector.broadcast %11 : vector<1x32xf32> to vector<4x32xf32>
    %c0_12 = arith.constant 0 : index
    %c0_13 = arith.constant 0 : index
    %13 = vector.load %arg10[%c0_12, %c0_13] : memref<1x32xf32, #tpu.memory_space<vmem>>, vector<1x32xf32>
    %14 = vector.shape_cast %13 : vector<1x32xf32> to vector<1x32xf32>
    %15 = vector.broadcast %14 : vector<1x32xf32> to vector<4x32xf32>
    %c0_14 = arith.constant 0 : index
    %c0_15 = arith.constant 0 : index
    %c0_16 = arith.constant 0 : index
    %16 = vector.load %arg2[%c0_14, %c0_15, %c0_16] : memref<4x8x32xbf16, #tpu.memory_space<vmem>>, vector<4x8x32xbf16>
    %17 = vector.shape_cast %16 : vector<4x8x32xbf16> to vector<32x32xbf16>
    %cst = arith.constant dense<0.000000e+00> : vector<32x128xf32>
    %18 = tpu.matmul %17, %4, %cst {dimension_numbers = #tpu.dot_dimension_numbers<[1], [0], [0], [1], [0, 0, 1, 1], [], []>} : vector<32x32xbf16>, vector<32x128xbf16>, vector<32x128xf32> -> vector<32x128xf32>
    %19 = vector.broadcast %6 : vector<1x128xf32> to vector<32x128xf32>
    %20 = arith.addf %18, %19 : vector<32x128xf32>
    %21 = vector.shape_cast %20 : vector<32x128xf32> to vector<4x8x128xf32>
    %c0_17 = arith.constant 0 : index
    %c0_18 = arith.constant 0 : index
    %22 = vector.load %arg13[%c0_17, %c0_18] : memref<4x32xf32, #tpu.memory_space<vmem>>, vector<4x32xf32>
    %23 = vector.extract_strided_slice %21 {offsets = [0, 0, 0], sizes = [4, 1, 128], strides = [1, 1, 1]} : vector<4x8x128xf32> to vector<4x1x128xf32>
    %24 = vector.shape_cast %23 : vector<4x1x128xf32> to vector<4x128xf32>
    %25 = arith.truncf %22 : vector<4x32xf32> to vector<4x32xbf16>
    %cst_19 = arith.constant dense<0.000000e+00> : vector<4x128xf32>
    %26 = tpu.matmul %25, %3, %cst_19 {dimension_numbers = #tpu.dot_dimension_numbers<[1], [0], [0], [1], [0, 0, 1, 1], [], []>} : vector<4x32xbf16>, vector<32x128xbf16>, vector<4x128xf32> -> vector<4x128xf32>
    %27 = arith.addf %24, %26 : vector<4x128xf32>
    %28 = arith.mulf %27, %27 : vector<4x128xf32>
    %29 = arith.mulf %27, %28 : vector<4x128xf32>
    %cst_20 = arith.constant 4.471500e-02 : f32
    %30 = vector.broadcast %cst_20 : f32 to vector<4x128xf32>
    %31 = arith.mulf %30, %29 : vector<4x128xf32>
    %32 = arith.addf %27, %31 : vector<4x128xf32>
    %cst_21 = arith.constant 0.797884583 : f32
    %33 = vector.broadcast %cst_21 : f32 to vector<4x128xf32>
    %34 = arith.mulf %33, %32 : vector<4x128xf32>
    %35 = math.tanh %34 : vector<4x128xf32>
    %cst_22 = arith.constant 1.000000e+00 : f32
    %36 = vector.broadcast %cst_22 : f32 to vector<4x128xf32>
    %37 = arith.addf %36, %35 : vector<4x128xf32>
    %cst_23 = arith.constant 5.000000e-01 : f32
    %38 = vector.broadcast %cst_23 : f32 to vector<4x128xf32>
    %39 = arith.mulf %38, %37 : vector<4x128xf32>
    %40 = arith.mulf %27, %39 : vector<4x128xf32>
    %41 = arith.truncf %40 : vector<4x128xf32> to vector<4x128xbf16>
    %cst_24 = arith.constant dense<0.000000e+00> : vector<4x128xf32>
    %42 = tpu.matmul %41, %5, %cst_24 {dimension_numbers = #tpu.dot_dimension_numbers<[1], [0], [0], [1], [0, 0, 1, 1], [], []>} : vector<4x128xbf16>, vector<128x128xbf16>, vector<4x128xf32> -> vector<4x128xf32>
    %43 = arith.addf %42, %9 : vector<4x128xf32>
    %44 = vector.extract_strided_slice %43 {offsets = [0, 0], sizes = [4, 96], strides = [1, 1]} : vector<4x128xf32> to vector<4x96xf32>
    %45 = arith.negf %44 : vector<4x96xf32>
    %46 = math.exp %45 : vector<4x96xf32>
    %cst_25 = arith.constant 1.000000e+00 : f32
    %47 = vector.broadcast %cst_25 : f32 to vector<4x96xf32>
    %48 = arith.addf %47, %46 : vector<4x96xf32>
    %49 = arith.divf %47, %48 : vector<4x96xf32>
    %50 = vector.extract_strided_slice %49 {offsets = [0, 0], sizes = [4, 32], strides = [1, 1]} : vector<4x96xf32> to vector<4x32xf32>
    %51 = vector.extract_strided_slice %49 {offsets = [0, 32], sizes = [4, 32], strides = [1, 1]} : vector<4x96xf32> to vector<4x32xf32>
    %52 = vector.extract_strided_slice %49 {offsets = [0, 64], sizes = [4, 32], strides = [1, 1]} : vector<4x96xf32> to vector<4x32xf32>
    %53 = vector.extract_strided_slice %43 {offsets = [0, 96], sizes = [4, 32], strides = [1, 1]} : vector<4x128xf32> to vector<4x32xf32>
    %54 = vector.extract_strided_slice %16 {offsets = [0, 0, 0], sizes = [4, 1, 32], strides = [1, 1, 1]} : vector<4x8x32xbf16> to vector<4x1x32xbf16>
    %55 = vector.shape_cast %54 : vector<4x1x32xbf16> to vector<4x32xbf16>
    %56 = arith.extf %55 : vector<4x32xbf16> to vector<4x32xf32>
    %57 = arith.mulf %50, %22 : vector<4x32xf32>
    %58 = arith.mulf %51, %56 : vector<4x32xf32>
    %59 = arith.addf %57, %58 : vector<4x32xf32>
    %60 = arith.mulf %52, %53 : vector<4x32xf32>
    %61 = arith.addf %59, %60 : vector<4x32xf32>
    %cst_26 = arith.constant dense<0.000000e+00> : vector<4xf32>
    %62 = vector.multi_reduction <add>, %61, %cst_26 [1] : vector<4x32xf32> to vector<4xf32>
    %63 = vector.shape_cast %62 : vector<4xf32> to vector<4x1xf32>
    %cst_27 = arith.constant 3.125000e-02 : f32
    %64 = vector.broadcast %cst_27 : f32 to vector<4x1xf32>
    %65 = arith.mulf %63, %64 : vector<4x1xf32>
    %66 = vector.broadcast %65 : vector<4x1xf32> to vector<4x32xf32>
    %67 = arith.subf %61, %66 : vector<4x32xf32>
    %68 = arith.mulf %67, %67 : vector<4x32xf32>
    %cst_28 = arith.constant dense<0.000000e+00> : vector<4xf32>
    %69 = vector.multi_reduction <add>, %68, %cst_28 [1] : vector<4x32xf32> to vector<4xf32>
    %70 = vector.shape_cast %69 : vector<4xf32> to vector<4x1xf32>
    %cst_29 = arith.constant 3.125000e-02 : f32
    %71 = vector.broadcast %cst_29 : f32 to vector<4x1xf32>
    %72 = arith.mulf %70, %71 : vector<4x1xf32>
    %cst_30 = arith.constant 9.99999974E-6 : f32
    %73 = vector.broadcast %cst_30 : f32 to vector<4x1xf32>
    %74 = arith.addf %72, %73 : vector<4x1xf32>
    %75 = math.rsqrt %74 : vector<4x1xf32>
    %76 = vector.broadcast %75 : vector<4x1xf32> to vector<4x32xf32>
    %77 = arith.mulf %67, %76 : vector<4x32xf32>
    %78 = arith.mulf %77, %12 : vector<4x32xf32>
    %79 = arith.addf %78, %15 : vector<4x32xf32>
    %c0_31 = arith.constant 0 : index
    %c0_32 = arith.constant 0 : index
    %c0_33 = arith.constant 0 : index
    %80 = vector.load %arg3[%c0_31, %c0_32, %c0_33] : memref<4x8x1xf32, #tpu.memory_space<vmem>>, vector<4x1x1xf32>
    %81 = vector.shape_cast %80 : vector<4x1x1xf32> to vector<4x1xf32>
    %82 = arith.subf %79, %22 : vector<4x32xf32>
    %83 = vector.broadcast %81 : vector<4x1xf32> to vector<4x32xf32>
    %84 = arith.mulf %83, %82 : vector<4x32xf32>
    %85 = arith.addf %22, %84 : vector<4x32xf32>
    %c0_34 = arith.constant 0 : index
    %c0_35 = arith.constant 0 : index
    %c0_36 = arith.constant 0 : index
    %86 = vector.load %arg11[%c0_34, %c0_35, %c0_36] : memref<4x8x32xf32, #tpu.memory_space<vmem>>, vector<4x1x32xf32>
    %87 = vector.shape_cast %86 : vector<4x1x32xf32> to vector<4x32xf32>
    %88 = vector.shape_cast %85 : vector<4x32xf32> to vector<4x1x32xf32>
    tpu.vector_store %arg11[%c0_34, %c0_35, %c0_36], %88 {strides = array<i32>} : memref<4x8x32xf32, #tpu.memory_space<vmem>>, vector<4x1x32xf32>,
    %89 = vector.extract_strided_slice %21 {offsets = [0, 1, 0], sizes = [4, 1, 128], strides = [1, 1, 1]} : vector<4x8x128xf32> to vector<4x1x128xf32>
    %90 = vector.shape_cast %89 : vector<4x1x128xf32> to vector<4x128xf32>
    %91 = arith.truncf %85 : vector<4x32xf32> to vector<4x32xbf16>
    %cst_37 = arith.constant dense<0.000000e+00> : vector<4x128xf32>
    %92 = tpu.matmul %91, %3, %cst_37 {dimension_numbers = #tpu.dot_dimension_numbers<[1], [0], [0], [1], [0, 0, 1, 1], [], []>} : vector<4x32xbf16>, vector<32x128xbf16>, vector<4x128xf32> -> vector<4x128xf32>
    %93 = arith.addf %90, %92 : vector<4x128xf32>
    %94 = arith.mulf %93, %93 : vector<4x128xf32>
    %95 = arith.mulf %93, %94 : vector<4x128xf32>
    %cst_38 = arith.constant 4.471500e-02 : f32
    %96 = vector.broadcast %cst_38 : f32 to vector<4x128xf32>
    %97 = arith.mulf %96, %95 : vector<4x128xf32>
    %98 = arith.addf %93, %97 : vector<4x128xf32>
    %cst_39 = arith.constant 0.797884583 : f32
    %99 = vector.broadcast %cst_39 : f32 to vector<4x128xf32>
    %100 = arith.mulf %99, %98 : vector<4x128xf32>
    %101 = math.tanh %100 : vector<4x128xf32>
    %cst_40 = arith.constant 1.000000e+00 : f32
    %102 = vector.broadcast %cst_40 : f32 to vector<4x128xf32>
    %103 = arith.addf %102, %101 : vector<4x128xf32>
    %cst_41 = arith.constant 5.000000e-01 : f32
    %104 = vector.broadcast %cst_41 : f32 to vector<4x128xf32>
    %105 = arith.mulf %104, %103 : vector<4x128xf32>
    %106 = arith.mulf %93, %105 : vector<4x128xf32>
    %107 = arith.truncf %106 : vector<4x128xf32> to vector<4x128xbf16>
    %cst_42 = arith.constant dense<0.000000e+00> : vector<4x128xf32>
    %108 = tpu.matmul %107, %5, %cst_42 {dimension_numbers = #tpu.dot_dimension_numbers<[1], [0], [0], [1], [0, 0, 1, 1], [], []>} : vector<4x128xbf16>, vector<128x128xbf16>, vector<4x128xf32> -> vector<4x128xf32>
    %109 = arith.addf %108, %9 : vector<4x128xf32>
    %110 = vector.extract_strided_slice %109 {offsets = [0, 0], sizes = [4, 96], strides = [1, 1]} : vector<4x128xf32> to vector<4x96xf32>
    %111 = arith.negf %110 : vector<4x96xf32>
    %112 = math.exp %111 : vector<4x96xf32>
    %cst_43 = arith.constant 1.000000e+00 : f32
    %113 = vector.broadcast %cst_43 : f32 to vector<4x96xf32>
    %114 = arith.addf %113, %112 : vector<4x96xf32>
    %115 = arith.divf %113, %114 : vector<4x96xf32>
    %116 = vector.extract_strided_slice %115 {offsets = [0, 0], sizes = [4, 32], strides = [1, 1]} : vector<4x96xf32> to vector<4x32xf32>
    %117 = vector.extract_strided_slice %115 {offsets = [0, 32], sizes = [4, 32], strides = [1, 1]} : vector<4x96xf32> to vector<4x32xf32>
    %118 = vector.extract_strided_slice %115 {offsets = [0, 64], sizes = [4, 32], strides = [1, 1]} : vector<4x96xf32> to vector<4x32xf32>
    %119 = vector.extract_strided_slice %109 {offsets = [0, 96], sizes = [4, 32], strides = [1, 1]} : vector<4x128xf32> to vector<4x32xf32>
    %120 = vector.extract_strided_slice %16 {offsets = [0, 1, 0], sizes = [4, 1, 32], strides = [1, 1, 1]} : vector<4x8x32xbf16> to vector<4x1x32xbf16>
    %121 = vector.shape_cast %120 : vector<4x1x32xbf16> to vector<4x32xbf16>
    %122 = arith.extf %121 : vector<4x32xbf16> to vector<4x32xf32>
    %123 = arith.mulf %116, %85 : vector<4x32xf32>
    %124 = arith.mulf %117, %122 : vector<4x32xf32>
    %125 = arith.addf %123, %124 : vector<4x32xf32>
    %126 = arith.mulf %118, %119 : vector<4x32xf32>
    %127 = arith.addf %125, %126 : vector<4x32xf32>
    %cst_44 = arith.constant dense<0.000000e+00> : vector<4xf32>
    %128 = vector.multi_reduction <add>, %127, %cst_44 [1] : vector<4x32xf32> to vector<4xf32>
    %129 = vector.shape_cast %128 : vector<4xf32> to vector<4x1xf32>
    %cst_45 = arith.constant 3.125000e-02 : f32
    %130 = vector.broadcast %cst_45 : f32 to vector<4x1xf32>
    %131 = arith.mulf %129, %130 : vector<4x1xf32>
    %132 = vector.broadcast %131 : vector<4x1xf32> to vector<4x32xf32>
    %133 = arith.subf %127, %132 : vector<4x32xf32>
    %134 = arith.mulf %133, %133 : vector<4x32xf32>
    %cst_46 = arith.constant dense<0.000000e+00> : vector<4xf32>
    %135 = vector.multi_reduction <add>, %134, %cst_46 [1] : vector<4x32xf32> to vector<4xf32>
    %136 = vector.shape_cast %135 : vector<4xf32> to vector<4x1xf32>
    %cst_47 = arith.constant 3.125000e-02 : f32
    %137 = vector.broadcast %cst_47 : f32 to vector<4x1xf32>
    %138 = arith.mulf %136, %137 : vector<4x1xf32>
    %cst_48 = arith.constant 9.99999974E-6 : f32
    %139 = vector.broadcast %cst_48 : f32 to vector<4x1xf32>
    %140 = arith.addf %138, %139 : vector<4x1xf32>
    %141 = math.rsqrt %140 : vector<4x1xf32>
    %142 = vector.broadcast %141 : vector<4x1xf32> to vector<4x32xf32>
    %143 = arith.mulf %133, %142 : vector<4x32xf32>
    %144 = arith.mulf %143, %12 : vector<4x32xf32>
    %145 = arith.addf %144, %15 : vector<4x32xf32>
    %c0_49 = arith.constant 0 : index
    %c1 = arith.constant 1 : index
    %c0_50 = arith.constant 0 : index
    %146 = vector.load %arg3[%c0_49, %c1, %c0_50] : memref<4x8x1xf32, #tpu.memory_space<vmem>>, vector<4x1x1xf32>
    %147 = vector.shape_cast %146 : vector<4x1x1xf32> to vector<4x1xf32>
    %148 = arith.subf %145, %85 : vector<4x32xf32>
    %149 = vector.broadcast %147 : vector<4x1xf32> to vector<4x32xf32>
    %150 = arith.mulf %149, %148 : vector<4x32xf32>
    %151 = arith.addf %85, %150 : vector<4x32xf32>
    %c0_51 = arith.constant 0 : index
    %c1_52 = arith.constant 1 : index
    %c0_53 = arith.constant 0 : index
    %152 = vector.load %arg11[%c0_51, %c1_52, %c0_53] : memref<4x8x32xf32, #tpu.memory_space<vmem>>, vector<4x1x32xf32>
    %153 = vector.shape_cast %152 : vector<4x1x32xf32> to vector<4x32xf32>
    %154 = vector.shape_cast %151 : vector<4x32xf32> to vector<4x1x32xf32>
    tpu.vector_store %arg11[%c0_51, %c1_52, %c0_53], %154 {strides = array<i32>} : memref<4x8x32xf32, #tpu.memory_space<vmem>>, vector<4x1x32xf32>,
    %155 = vector.extract_strided_slice %21 {offsets = [0, 2, 0], sizes = [4, 1, 128], strides = [1, 1, 1]} : vector<4x8x128xf32> to vector<4x1x128xf32>
    %156 = vector.shape_cast %155 : vector<4x1x128xf32> to vector<4x128xf32>
    %157 = arith.truncf %151 : vector<4x32xf32> to vector<4x32xbf16>
    %cst_54 = arith.constant dense<0.000000e+00> : vector<4x128xf32>
    %158 = tpu.matmul %157, %3, %cst_54 {dimension_numbers = #tpu.dot_dimension_numbers<[1], [0], [0], [1], [0, 0, 1, 1], [], []>} : vector<4x32xbf16>, vector<32x128xbf16>, vector<4x128xf32> -> vector<4x128xf32>
    %159 = arith.addf %156, %158 : vector<4x128xf32>
    %160 = arith.mulf %159, %159 : vector<4x128xf32>
    %161 = arith.mulf %159, %160 : vector<4x128xf32>
    %cst_55 = arith.constant 4.471500e-02 : f32
    %162 = vector.broadcast %cst_55 : f32 to vector<4x128xf32>
    %163 = arith.mulf %162, %161 : vector<4x128xf32>
    %164 = arith.addf %159, %163 : vector<4x128xf32>
    %cst_56 = arith.constant 0.797884583 : f32
    %165 = vector.broadcast %cst_56 : f32 to vector<4x128xf32>
    %166 = arith.mulf %165, %164 : vector<4x128xf32>
    %167 = math.tanh %166 : vector<4x128xf32>
    %cst_57 = arith.constant 1.000000e+00 : f32
    %168 = vector.broadcast %cst_57 : f32 to vector<4x128xf32>
    %169 = arith.addf %168, %167 : vector<4x128xf32>
    %cst_58 = arith.constant 5.000000e-01 : f32
    %170 = vector.broadcast %cst_58 : f32 to vector<4x128xf32>
    %171 = arith.mulf %170, %169 : vector<4x128xf32>
    %172 = arith.mulf %159, %171 : vector<4x128xf32>
    %173 = arith.truncf %172 : vector<4x128xf32> to vector<4x128xbf16>
    %cst_59 = arith.constant dense<0.000000e+00> : vector<4x128xf32>
    %174 = tpu.matmul %173, %5, %cst_59 {dimension_numbers = #tpu.dot_dimension_numbers<[1], [0], [0], [1], [0, 0, 1, 1], [], []>} : vector<4x128xbf16>, vector<128x128xbf16>, vector<4x128xf32> -> vector<4x128xf32>
    %175 = arith.addf %174, %9 : vector<4x128xf32>
    %176 = vector.extract_strided_slice %175 {offsets = [0, 0], sizes = [4, 96], strides = [1, 1]} : vector<4x128xf32> to vector<4x96xf32>
    %177 = arith.negf %176 : vector<4x96xf32>
    %178 = math.exp %177 : vector<4x96xf32>
    %cst_60 = arith.constant 1.000000e+00 : f32
    %179 = vector.broadcast %cst_60 : f32 to vector<4x96xf32>
    %180 = arith.addf %179, %178 : vector<4x96xf32>
    %181 = arith.divf %179, %180 : vector<4x96xf32>
    %182 = vector.extract_strided_slice %181 {offsets = [0, 0], sizes = [4, 32], strides = [1, 1]} : vector<4x96xf32> to vector<4x32xf32>
    %183 = vector.extract_strided_slice %181 {offsets = [0, 32], sizes = [4, 32], strides = [1, 1]} : vector<4x96xf32> to vector<4x32xf32>
    %184 = vector.extract_strided_slice %181 {offsets = [0, 64], sizes = [4, 32], strides = [1, 1]} : vector<4x96xf32> to vector<4x32xf32>
    %185 = vector.extract_strided_slice %175 {offsets = [0, 96], sizes = [4, 32], strides = [1, 1]} : vector<4x128xf32> to vector<4x32xf32>
    %186 = vector.extract_strided_slice %16 {offsets = [0, 2, 0], sizes = [4, 1, 32], strides = [1, 1, 1]} : vector<4x8x32xbf16> to vector<4x1x32xbf16>
    %187 = vector.shape_cast %186 : vector<4x1x32xbf16> to vector<4x32xbf16>
    %188 = arith.extf %187 : vector<4x32xbf16> to vector<4x32xf32>
    %189 = arith.mulf %182, %151 : vector<4x32xf32>
    %190 = arith.mulf %183, %188 : vector<4x32xf32>
    %191 = arith.addf %189, %190 : vector<4x32xf32>
    %192 = arith.mulf %184, %185 : vector<4x32xf32>
    %193 = arith.addf %191, %192 : vector<4x32xf32>
    %cst_61 = arith.constant dense<0.000000e+00> : vector<4xf32>
    %194 = vector.multi_reduction <add>, %193, %cst_61 [1] : vector<4x32xf32> to vector<4xf32>
    %195 = vector.shape_cast %194 : vector<4xf32> to vector<4x1xf32>
    %cst_62 = arith.constant 3.125000e-02 : f32
    %196 = vector.broadcast %cst_62 : f32 to vector<4x1xf32>
    %197 = arith.mulf %195, %196 : vector<4x1xf32>
    %198 = vector.broadcast %197 : vector<4x1xf32> to vector<4x32xf32>
    %199 = arith.subf %193, %198 : vector<4x32xf32>
    %200 = arith.mulf %199, %199 : vector<4x32xf32>
    %cst_63 = arith.constant dense<0.000000e+00> : vector<4xf32>
    %201 = vector.multi_reduction <add>, %200, %cst_63 [1] : vector<4x32xf32> to vector<4xf32>
    %202 = vector.shape_cast %201 : vector<4xf32> to vector<4x1xf32>
    %cst_64 = arith.constant 3.125000e-02 : f32
    %203 = vector.broadcast %cst_64 : f32 to vector<4x1xf32>
    %204 = arith.mulf %202, %203 : vector<4x1xf32>
    %cst_65 = arith.constant 9.99999974E-6 : f32
    %205 = vector.broadcast %cst_65 : f32 to vector<4x1xf32>
    %206 = arith.addf %204, %205 : vector<4x1xf32>
    %207 = math.rsqrt %206 : vector<4x1xf32>
    %208 = vector.broadcast %207 : vector<4x1xf32> to vector<4x32xf32>
    %209 = arith.mulf %199, %208 : vector<4x32xf32>
    %210 = arith.mulf %209, %12 : vector<4x32xf32>
    %211 = arith.addf %210, %15 : vector<4x32xf32>
    %c0_66 = arith.constant 0 : index
    %c2 = arith.constant 2 : index
    %c0_67 = arith.constant 0 : index
    %212 = vector.load %arg3[%c0_66, %c2, %c0_67] : memref<4x8x1xf32, #tpu.memory_space<vmem>>, vector<4x1x1xf32>
    %213 = vector.shape_cast %212 : vector<4x1x1xf32> to vector<4x1xf32>
    %214 = arith.subf %211, %151 : vector<4x32xf32>
    %215 = vector.broadcast %213 : vector<4x1xf32> to vector<4x32xf32>
    %216 = arith.mulf %215, %214 : vector<4x32xf32>
    %217 = arith.addf %151, %216 : vector<4x32xf32>
    %c0_68 = arith.constant 0 : index
    %c2_69 = arith.constant 2 : index
    %c0_70 = arith.constant 0 : index
    %218 = vector.load %arg11[%c0_68, %c2_69, %c0_70] : memref<4x8x32xf32, #tpu.memory_space<vmem>>, vector<4x1x32xf32>
    %219 = vector.shape_cast %218 : vector<4x1x32xf32> to vector<4x32xf32>
    %220 = vector.shape_cast %217 : vector<4x32xf32> to vector<4x1x32xf32>
    tpu.vector_store %arg11[%c0_68, %c2_69, %c0_70], %220 {strides = array<i32>} : memref<4x8x32xf32, #tpu.memory_space<vmem>>, vector<4x1x32xf32>,
    %221 = vector.extract_strided_slice %21 {offsets = [0, 3, 0], sizes = [4, 1, 128], strides = [1, 1, 1]} : vector<4x8x128xf32> to vector<4x1x128xf32>
    %222 = vector.shape_cast %221 : vector<4x1x128xf32> to vector<4x128xf32>
    %223 = arith.truncf %217 : vector<4x32xf32> to vector<4x32xbf16>
    %cst_71 = arith.constant dense<0.000000e+00> : vector<4x128xf32>
    %224 = tpu.matmul %223, %3, %cst_71 {dimension_numbers = #tpu.dot_dimension_numbers<[1], [0], [0], [1], [0, 0, 1, 1], [], []>} : vector<4x32xbf16>, vector<32x128xbf16>, vector<4x128xf32> -> vector<4x128xf32>
    %225 = arith.addf %222, %224 : vector<4x128xf32>
    %226 = arith.mulf %225, %225 : vector<4x128xf32>
    %227 = arith.mulf %225, %226 : vector<4x128xf32>
    %cst_72 = arith.constant 4.471500e-02 : f32
    %228 = vector.broadcast %cst_72 : f32 to vector<4x128xf32>
    %229 = arith.mulf %228, %227 : vector<4x128xf32>
    %230 = arith.addf %225, %229 : vector<4x128xf32>
    %cst_73 = arith.constant 0.797884583 : f32
    %231 = vector.broadcast %cst_73 : f32 to vector<4x128xf32>
    %232 = arith.mulf %231, %230 : vector<4x128xf32>
    %233 = math.tanh %232 : vector<4x128xf32>
    %cst_74 = arith.constant 1.000000e+00 : f32
    %234 = vector.broadcast %cst_74 : f32 to vector<4x128xf32>
    %235 = arith.addf %234, %233 : vector<4x128xf32>
    %cst_75 = arith.constant 5.000000e-01 : f32
    %236 = vector.broadcast %cst_75 : f32 to vector<4x128xf32>
    %237 = arith.mulf %236, %235 : vector<4x128xf32>
    %238 = arith.mulf %225, %237 : vector<4x128xf32>
    %239 = arith.truncf %238 : vector<4x128xf32> to vector<4x128xbf16>
    %cst_76 = arith.constant dense<0.000000e+00> : vector<4x128xf32>
    %240 = tpu.matmul %239, %5, %cst_76 {dimension_numbers = #tpu.dot_dimension_numbers<[1], [0], [0], [1], [0, 0, 1, 1], [], []>} : vector<4x128xbf16>, vector<128x128xbf16>, vector<4x128xf32> -> vector<4x128xf32>
    %241 = arith.addf %240, %9 : vector<4x128xf32>
    %242 = vector.extract_strided_slice %241 {offsets = [0, 0], sizes = [4, 96], strides = [1, 1]} : vector<4x128xf32> to vector<4x96xf32>
    %243 = arith.negf %242 : vector<4x96xf32>
    %244 = math.exp %243 : vector<4x96xf32>
    %cst_77 = arith.constant 1.000000e+00 : f32
    %245 = vector.broadcast %cst_77 : f32 to vector<4x96xf32>
    %246 = arith.addf %245, %244 : vector<4x96xf32>
    %247 = arith.divf %245, %246 : vector<4x96xf32>
    %248 = vector.extract_strided_slice %247 {offsets = [0, 0], sizes = [4, 32], strides = [1, 1]} : vector<4x96xf32> to vector<4x32xf32>
    %249 = vector.extract_strided_slice %247 {offsets = [0, 32], sizes = [4, 32], strides = [1, 1]} : vector<4x96xf32> to vector<4x32xf32>
    %250 = vector.extract_strided_slice %247 {offsets = [0, 64], sizes = [4, 32], strides = [1, 1]} : vector<4x96xf32> to vector<4x32xf32>
    %251 = vector.extract_strided_slice %241 {offsets = [0, 96], sizes = [4, 32], strides = [1, 1]} : vector<4x128xf32> to vector<4x32xf32>
    %252 = vector.extract_strided_slice %16 {offsets = [0, 3, 0], sizes = [4, 1, 32], strides = [1, 1, 1]} : vector<4x8x32xbf16> to vector<4x1x32xbf16>
    %253 = vector.shape_cast %252 : vector<4x1x32xbf16> to vector<4x32xbf16>
    %254 = arith.extf %253 : vector<4x32xbf16> to vector<4x32xf32>
    %255 = arith.mulf %248, %217 : vector<4x32xf32>
    %256 = arith.mulf %249, %254 : vector<4x32xf32>
    %257 = arith.addf %255, %256 : vector<4x32xf32>
    %258 = arith.mulf %250, %251 : vector<4x32xf32>
    %259 = arith.addf %257, %258 : vector<4x32xf32>
    %cst_78 = arith.constant dense<0.000000e+00> : vector<4xf32>
    %260 = vector.multi_reduction <add>, %259, %cst_78 [1] : vector<4x32xf32> to vector<4xf32>
    %261 = vector.shape_cast %260 : vector<4xf32> to vector<4x1xf32>
    %cst_79 = arith.constant 3.125000e-02 : f32
    %262 = vector.broadcast %cst_79 : f32 to vector<4x1xf32>
    %263 = arith.mulf %261, %262 : vector<4x1xf32>
    %264 = vector.broadcast %263 : vector<4x1xf32> to vector<4x32xf32>
    %265 = arith.subf %259, %264 : vector<4x32xf32>
    %266 = arith.mulf %265, %265 : vector<4x32xf32>
    %cst_80 = arith.constant dense<0.000000e+00> : vector<4xf32>
    %267 = vector.multi_reduction <add>, %266, %cst_80 [1] : vector<4x32xf32> to vector<4xf32>
    %268 = vector.shape_cast %267 : vector<4xf32> to vector<4x1xf32>
    %cst_81 = arith.constant 3.125000e-02 : f32
    %269 = vector.broadcast %cst_81 : f32 to vector<4x1xf32>
    %270 = arith.mulf %268, %269 : vector<4x1xf32>
    %cst_82 = arith.constant 9.99999974E-6 : f32
    %271 = vector.broadcast %cst_82 : f32 to vector<4x1xf32>
    %272 = arith.addf %270, %271 : vector<4x1xf32>
    %273 = math.rsqrt %272 : vector<4x1xf32>
    %274 = vector.broadcast %273 : vector<4x1xf32> to vector<4x32xf32>
    %275 = arith.mulf %265, %274 : vector<4x32xf32>
    %276 = arith.mulf %275, %12 : vector<4x32xf32>
    %277 = arith.addf %276, %15 : vector<4x32xf32>
    %c0_83 = arith.constant 0 : index
    %c3 = arith.constant 3 : index
    %c0_84 = arith.constant 0 : index
    %278 = vector.load %arg3[%c0_83, %c3, %c0_84] : memref<4x8x1xf32, #tpu.memory_space<vmem>>, vector<4x1x1xf32>
    %279 = vector.shape_cast %278 : vector<4x1x1xf32> to vector<4x1xf32>
    %280 = arith.subf %277, %217 : vector<4x32xf32>
    %281 = vector.broadcast %279 : vector<4x1xf32> to vector<4x32xf32>
    %282 = arith.mulf %281, %280 : vector<4x32xf32>
    %283 = arith.addf %217, %282 : vector<4x32xf32>
    %c0_85 = arith.constant 0 : index
    %c3_86 = arith.constant 3 : index
    %c0_87 = arith.constant 0 : index
    %284 = vector.load %arg11[%c0_85, %c3_86, %c0_87] : memref<4x8x32xf32, #tpu.memory_space<vmem>>, vector<4x1x32xf32>
    %285 = vector.shape_cast %284 : vector<4x1x32xf32> to vector<4x32xf32>
    %286 = vector.shape_cast %283 : vector<4x32xf32> to vector<4x1x32xf32>
    tpu.vector_store %arg11[%c0_85, %c3_86, %c0_87], %286 {strides = array<i32>} : memref<4x8x32xf32, #tpu.memory_space<vmem>>, vector<4x1x32xf32>,
    %287 = vector.extract_strided_slice %21 {offsets = [0, 4, 0], sizes = [4, 1, 128], strides = [1, 1, 1]} : vector<4x8x128xf32> to vector<4x1x128xf32>
    %288 = vector.shape_cast %287 : vector<4x1x128xf32> to vector<4x128xf32>
    %289 = arith.truncf %283 : vector<4x32xf32> to vector<4x32xbf16>
    %cst_88 = arith.constant dense<0.000000e+00> : vector<4x128xf32>
    %290 = tpu.matmul %289, %3, %cst_88 {dimension_numbers = #tpu.dot_dimension_numbers<[1], [0], [0], [1], [0, 0, 1, 1], [], []>} : vector<4x32xbf16>, vector<32x128xbf16>, vector<4x128xf32> -> vector<4x128xf32>
    %291 = arith.addf %288, %290 : vector<4x128xf32>
    %292 = arith.mulf %291, %291 : vector<4x128xf32>
    %293 = arith.mulf %291, %292 : vector<4x128xf32>
    %cst_89 = arith.constant 4.471500e-02 : f32
    %294 = vector.broadcast %cst_89 : f32 to vector<4x128xf32>
    %295 = arith.mulf %294, %293 : vector<4x128xf32>
    %296 = arith.addf %291, %295 : vector<4x128xf32>
    %cst_90 = arith.constant 0.797884583 : f32
    %297 = vector.broadcast %cst_90 : f32 to vector<4x128xf32>
    %298 = arith.mulf %297, %296 : vector<4x128xf32>
    %299 = math.tanh %298 : vector<4x128xf32>
    %cst_91 = arith.constant 1.000000e+00 : f32
    %300 = vector.broadcast %cst_91 : f32 to vector<4x128xf32>
    %301 = arith.addf %300, %299 : vector<4x128xf32>
    %cst_92 = arith.constant 5.000000e-01 : f32
    %302 = vector.broadcast %cst_92 : f32 to vector<4x128xf32>
    %303 = arith.mulf %302, %301 : vector<4x128xf32>
    %304 = arith.mulf %291, %303 : vector<4x128xf32>
    %305 = arith.truncf %304 : vector<4x128xf32> to vector<4x128xbf16>
    %cst_93 = arith.constant dense<0.000000e+00> : vector<4x128xf32>
    %306 = tpu.matmul %305, %5, %cst_93 {dimension_numbers = #tpu.dot_dimension_numbers<[1], [0], [0], [1], [0, 0, 1, 1], [], []>} : vector<4x128xbf16>, vector<128x128xbf16>, vector<4x128xf32> -> vector<4x128xf32>
    %307 = arith.addf %306, %9 : vector<4x128xf32>
    %308 = vector.extract_strided_slice %307 {offsets = [0, 0], sizes = [4, 96], strides = [1, 1]} : vector<4x128xf32> to vector<4x96xf32>
    %309 = arith.negf %308 : vector<4x96xf32>
    %310 = math.exp %309 : vector<4x96xf32>
    %cst_94 = arith.constant 1.000000e+00 : f32
    %311 = vector.broadcast %cst_94 : f32 to vector<4x96xf32>
    %312 = arith.addf %311, %310 : vector<4x96xf32>
    %313 = arith.divf %311, %312 : vector<4x96xf32>
    %314 = vector.extract_strided_slice %313 {offsets = [0, 0], sizes = [4, 32], strides = [1, 1]} : vector<4x96xf32> to vector<4x32xf32>
    %315 = vector.extract_strided_slice %313 {offsets = [0, 32], sizes = [4, 32], strides = [1, 1]} : vector<4x96xf32> to vector<4x32xf32>
    %316 = vector.extract_strided_slice %313 {offsets = [0, 64], sizes = [4, 32], strides = [1, 1]} : vector<4x96xf32> to vector<4x32xf32>
    %317 = vector.extract_strided_slice %307 {offsets = [0, 96], sizes = [4, 32], strides = [1, 1]} : vector<4x128xf32> to vector<4x32xf32>
    %318 = vector.extract_strided_slice %16 {offsets = [0, 4, 0], sizes = [4, 1, 32], strides = [1, 1, 1]} : vector<4x8x32xbf16> to vector<4x1x32xbf16>
    %319 = vector.shape_cast %318 : vector<4x1x32xbf16> to vector<4x32xbf16>
    %320 = arith.extf %319 : vector<4x32xbf16> to vector<4x32xf32>
    %321 = arith.mulf %314, %283 : vector<4x32xf32>
    %322 = arith.mulf %315, %320 : vector<4x32xf32>
    %323 = arith.addf %321, %322 : vector<4x32xf32>
    %324 = arith.mulf %316, %317 : vector<4x32xf32>
    %325 = arith.addf %323, %324 : vector<4x32xf32>
    %cst_95 = arith.constant dense<0.000000e+00> : vector<4xf32>
    %326 = vector.multi_reduction <add>, %325, %cst_95 [1] : vector<4x32xf32> to vector<4xf32>
    %327 = vector.shape_cast %326 : vector<4xf32> to vector<4x1xf32>
    %cst_96 = arith.constant 3.125000e-02 : f32
    %328 = vector.broadcast %cst_96 : f32 to vector<4x1xf32>
    %329 = arith.mulf %327, %328 : vector<4x1xf32>
    %330 = vector.broadcast %329 : vector<4x1xf32> to vector<4x32xf32>
    %331 = arith.subf %325, %330 : vector<4x32xf32>
    %332 = arith.mulf %331, %331 : vector<4x32xf32>
    %cst_97 = arith.constant dense<0.000000e+00> : vector<4xf32>
    %333 = vector.multi_reduction <add>, %332, %cst_97 [1] : vector<4x32xf32> to vector<4xf32>
    %334 = vector.shape_cast %333 : vector<4xf32> to vector<4x1xf32>
    %cst_98 = arith.constant 3.125000e-02 : f32
    %335 = vector.broadcast %cst_98 : f32 to vector<4x1xf32>
    %336 = arith.mulf %334, %335 : vector<4x1xf32>
    %cst_99 = arith.constant 9.99999974E-6 : f32
    %337 = vector.broadcast %cst_99 : f32 to vector<4x1xf32>
    %338 = arith.addf %336, %337 : vector<4x1xf32>
    %339 = math.rsqrt %338 : vector<4x1xf32>
    %340 = vector.broadcast %339 : vector<4x1xf32> to vector<4x32xf32>
    %341 = arith.mulf %331, %340 : vector<4x32xf32>
    %342 = arith.mulf %341, %12 : vector<4x32xf32>
    %343 = arith.addf %342, %15 : vector<4x32xf32>
    %c0_100 = arith.constant 0 : index
    %c4 = arith.constant 4 : index
    %c0_101 = arith.constant 0 : index
    %344 = vector.load %arg3[%c0_100, %c4, %c0_101] : memref<4x8x1xf32, #tpu.memory_space<vmem>>, vector<4x1x1xf32>
    %345 = vector.shape_cast %344 : vector<4x1x1xf32> to vector<4x1xf32>
    %346 = arith.subf %343, %283 : vector<4x32xf32>
    %347 = vector.broadcast %345 : vector<4x1xf32> to vector<4x32xf32>
    %348 = arith.mulf %347, %346 : vector<4x32xf32>
    %349 = arith.addf %283, %348 : vector<4x32xf32>
    %c0_102 = arith.constant 0 : index
    %c4_103 = arith.constant 4 : index
    %c0_104 = arith.constant 0 : index
    %350 = vector.load %arg11[%c0_102, %c4_103, %c0_104] : memref<4x8x32xf32, #tpu.memory_space<vmem>>, vector<4x1x32xf32>
    %351 = vector.shape_cast %350 : vector<4x1x32xf32> to vector<4x32xf32>
    %352 = vector.shape_cast %349 : vector<4x32xf32> to vector<4x1x32xf32>
    tpu.vector_store %arg11[%c0_102, %c4_103, %c0_104], %352 {strides = array<i32>} : memref<4x8x32xf32, #tpu.memory_space<vmem>>, vector<4x1x32xf32>,
    %353 = vector.extract_strided_slice %21 {offsets = [0, 5, 0], sizes = [4, 1, 128], strides = [1, 1, 1]} : vector<4x8x128xf32> to vector<4x1x128xf32>
    %354 = vector.shape_cast %353 : vector<4x1x128xf32> to vector<4x128xf32>
    %355 = arith.truncf %349 : vector<4x32xf32> to vector<4x32xbf16>
    %cst_105 = arith.constant dense<0.000000e+00> : vector<4x128xf32>
    %356 = tpu.matmul %355, %3, %cst_105 {dimension_numbers = #tpu.dot_dimension_numbers<[1], [0], [0], [1], [0, 0, 1, 1], [], []>} : vector<4x32xbf16>, vector<32x128xbf16>, vector<4x128xf32> -> vector<4x128xf32>
    %357 = arith.addf %354, %356 : vector<4x128xf32>
    %358 = arith.mulf %357, %357 : vector<4x128xf32>
    %359 = arith.mulf %357, %358 : vector<4x128xf32>
    %cst_106 = arith.constant 4.471500e-02 : f32
    %360 = vector.broadcast %cst_106 : f32 to vector<4x128xf32>
    %361 = arith.mulf %360, %359 : vector<4x128xf32>
    %362 = arith.addf %357, %361 : vector<4x128xf32>
    %cst_107 = arith.constant 0.797884583 : f32
    %363 = vector.broadcast %cst_107 : f32 to vector<4x128xf32>
    %364 = arith.mulf %363, %362 : vector<4x128xf32>
    %365 = math.tanh %364 : vector<4x128xf32>
    %cst_108 = arith.constant 1.000000e+00 : f32
    %366 = vector.broadcast %cst_108 : f32 to vector<4x128xf32>
    %367 = arith.addf %366, %365 : vector<4x128xf32>
    %cst_109 = arith.constant 5.000000e-01 : f32
    %368 = vector.broadcast %cst_109 : f32 to vector<4x128xf32>
    %369 = arith.mulf %368, %367 : vector<4x128xf32>
    %370 = arith.mulf %357, %369 : vector<4x128xf32>
    %371 = arith.truncf %370 : vector<4x128xf32> to vector<4x128xbf16>
    %cst_110 = arith.constant dense<0.000000e+00> : vector<4x128xf32>
    %372 = tpu.matmul %371, %5, %cst_110 {dimension_numbers = #tpu.dot_dimension_numbers<[1], [0], [0], [1], [0, 0, 1, 1], [], []>} : vector<4x128xbf16>, vector<128x128xbf16>, vector<4x128xf32> -> vector<4x128xf32>
    %373 = arith.addf %372, %9 : vector<4x128xf32>
    %374 = vector.extract_strided_slice %373 {offsets = [0, 0], sizes = [4, 96], strides = [1, 1]} : vector<4x128xf32> to vector<4x96xf32>
    %375 = arith.negf %374 : vector<4x96xf32>
    %376 = math.exp %375 : vector<4x96xf32>
    %cst_111 = arith.constant 1.000000e+00 : f32
    %377 = vector.broadcast %cst_111 : f32 to vector<4x96xf32>
    %378 = arith.addf %377, %376 : vector<4x96xf32>
    %379 = arith.divf %377, %378 : vector<4x96xf32>
    %380 = vector.extract_strided_slice %379 {offsets = [0, 0], sizes = [4, 32], strides = [1, 1]} : vector<4x96xf32> to vector<4x32xf32>
    %381 = vector.extract_strided_slice %379 {offsets = [0, 32], sizes = [4, 32], strides = [1, 1]} : vector<4x96xf32> to vector<4x32xf32>
    %382 = vector.extract_strided_slice %379 {offsets = [0, 64], sizes = [4, 32], strides = [1, 1]} : vector<4x96xf32> to vector<4x32xf32>
    %383 = vector.extract_strided_slice %373 {offsets = [0, 96], sizes = [4, 32], strides = [1, 1]} : vector<4x128xf32> to vector<4x32xf32>
    %384 = vector.extract_strided_slice %16 {offsets = [0, 5, 0], sizes = [4, 1, 32], strides = [1, 1, 1]} : vector<4x8x32xbf16> to vector<4x1x32xbf16>
    %385 = vector.shape_cast %384 : vector<4x1x32xbf16> to vector<4x32xbf16>
    %386 = arith.extf %385 : vector<4x32xbf16> to vector<4x32xf32>
    %387 = arith.mulf %380, %349 : vector<4x32xf32>
    %388 = arith.mulf %381, %386 : vector<4x32xf32>
    %389 = arith.addf %387, %388 : vector<4x32xf32>
    %390 = arith.mulf %382, %383 : vector<4x32xf32>
    %391 = arith.addf %389, %390 : vector<4x32xf32>
    %cst_112 = arith.constant dense<0.000000e+00> : vector<4xf32>
    %392 = vector.multi_reduction <add>, %391, %cst_112 [1] : vector<4x32xf32> to vector<4xf32>
    %393 = vector.shape_cast %392 : vector<4xf32> to vector<4x1xf32>
    %cst_113 = arith.constant 3.125000e-02 : f32
    %394 = vector.broadcast %cst_113 : f32 to vector<4x1xf32>
    %395 = arith.mulf %393, %394 : vector<4x1xf32>
    %396 = vector.broadcast %395 : vector<4x1xf32> to vector<4x32xf32>
    %397 = arith.subf %391, %396 : vector<4x32xf32>
    %398 = arith.mulf %397, %397 : vector<4x32xf32>
    %cst_114 = arith.constant dense<0.000000e+00> : vector<4xf32>
    %399 = vector.multi_reduction <add>, %398, %cst_114 [1] : vector<4x32xf32> to vector<4xf32>
    %400 = vector.shape_cast %399 : vector<4xf32> to vector<4x1xf32>
    %cst_115 = arith.constant 3.125000e-02 : f32
    %401 = vector.broadcast %cst_115 : f32 to vector<4x1xf32>
    %402 = arith.mulf %400, %401 : vector<4x1xf32>
    %cst_116 = arith.constant 9.99999974E-6 : f32
    %403 = vector.broadcast %cst_116 : f32 to vector<4x1xf32>
    %404 = arith.addf %402, %403 : vector<4x1xf32>
    %405 = math.rsqrt %404 : vector<4x1xf32>
    %406 = vector.broadcast %405 : vector<4x1xf32> to vector<4x32xf32>
    %407 = arith.mulf %397, %406 : vector<4x32xf32>
    %408 = arith.mulf %407, %12 : vector<4x32xf32>
    %409 = arith.addf %408, %15 : vector<4x32xf32>
    %c0_117 = arith.constant 0 : index
    %c5 = arith.constant 5 : index
    %c0_118 = arith.constant 0 : index
    %410 = vector.load %arg3[%c0_117, %c5, %c0_118] : memref<4x8x1xf32, #tpu.memory_space<vmem>>, vector<4x1x1xf32>
    %411 = vector.shape_cast %410 : vector<4x1x1xf32> to vector<4x1xf32>
    %412 = arith.subf %409, %349 : vector<4x32xf32>
    %413 = vector.broadcast %411 : vector<4x1xf32> to vector<4x32xf32>
    %414 = arith.mulf %413, %412 : vector<4x32xf32>
    %415 = arith.addf %349, %414 : vector<4x32xf32>
    %c0_119 = arith.constant 0 : index
    %c5_120 = arith.constant 5 : index
    %c0_121 = arith.constant 0 : index
    %416 = vector.load %arg11[%c0_119, %c5_120, %c0_121] : memref<4x8x32xf32, #tpu.memory_space<vmem>>, vector<4x1x32xf32>
    %417 = vector.shape_cast %416 : vector<4x1x32xf32> to vector<4x32xf32>
    %418 = vector.shape_cast %415 : vector<4x32xf32> to vector<4x1x32xf32>
    tpu.vector_store %arg11[%c0_119, %c5_120, %c0_121], %418 {strides = array<i32>} : memref<4x8x32xf32, #tpu.memory_space<vmem>>, vector<4x1x32xf32>,
    %419 = vector.extract_strided_slice %21 {offsets = [0, 6, 0], sizes = [4, 1, 128], strides = [1, 1, 1]} : vector<4x8x128xf32> to vector<4x1x128xf32>
    %420 = vector.shape_cast %419 : vector<4x1x128xf32> to vector<4x128xf32>
    %421 = arith.truncf %415 : vector<4x32xf32> to vector<4x32xbf16>
    %cst_122 = arith.constant dense<0.000000e+00> : vector<4x128xf32>
    %422 = tpu.matmul %421, %3, %cst_122 {dimension_numbers = #tpu.dot_dimension_numbers<[1], [0], [0], [1], [0, 0, 1, 1], [], []>} : vector<4x32xbf16>, vector<32x128xbf16>, vector<4x128xf32> -> vector<4x128xf32>
    %423 = arith.addf %420, %422 : vector<4x128xf32>
    %424 = arith.mulf %423, %423 : vector<4x128xf32>
    %425 = arith.mulf %423, %424 : vector<4x128xf32>
    %cst_123 = arith.constant 4.471500e-02 : f32
    %426 = vector.broadcast %cst_123 : f32 to vector<4x128xf32>
    %427 = arith.mulf %426, %425 : vector<4x128xf32>
    %428 = arith.addf %423, %427 : vector<4x128xf32>
    %cst_124 = arith.constant 0.797884583 : f32
    %429 = vector.broadcast %cst_124 : f32 to vector<4x128xf32>
    %430 = arith.mulf %429, %428 : vector<4x128xf32>
    %431 = math.tanh %430 : vector<4x128xf32>
    %cst_125 = arith.constant 1.000000e+00 : f32
    %432 = vector.broadcast %cst_125 : f32 to vector<4x128xf32>
    %433 = arith.addf %432, %431 : vector<4x128xf32>
    %cst_126 = arith.constant 5.000000e-01 : f32
    %434 = vector.broadcast %cst_126 : f32 to vector<4x128xf32>
    %435 = arith.mulf %434, %433 : vector<4x128xf32>
    %436 = arith.mulf %423, %435 : vector<4x128xf32>
    %437 = arith.truncf %436 : vector<4x128xf32> to vector<4x128xbf16>
    %cst_127 = arith.constant dense<0.000000e+00> : vector<4x128xf32>
    %438 = tpu.matmul %437, %5, %cst_127 {dimension_numbers = #tpu.dot_dimension_numbers<[1], [0], [0], [1], [0, 0, 1, 1], [], []>} : vector<4x128xbf16>, vector<128x128xbf16>, vector<4x128xf32> -> vector<4x128xf32>
    %439 = arith.addf %438, %9 : vector<4x128xf32>
    %440 = vector.extract_strided_slice %439 {offsets = [0, 0], sizes = [4, 96], strides = [1, 1]} : vector<4x128xf32> to vector<4x96xf32>
    %441 = arith.negf %440 : vector<4x96xf32>
    %442 = math.exp %441 : vector<4x96xf32>
    %cst_128 = arith.constant 1.000000e+00 : f32
    %443 = vector.broadcast %cst_128 : f32 to vector<4x96xf32>
    %444 = arith.addf %443, %442 : vector<4x96xf32>
    %445 = arith.divf %443, %444 : vector<4x96xf32>
    %446 = vector.extract_strided_slice %445 {offsets = [0, 0], sizes = [4, 32], strides = [1, 1]} : vector<4x96xf32> to vector<4x32xf32>
    %447 = vector.extract_strided_slice %445 {offsets = [0, 32], sizes = [4, 32], strides = [1, 1]} : vector<4x96xf32> to vector<4x32xf32>
    %448 = vector.extract_strided_slice %445 {offsets = [0, 64], sizes = [4, 32], strides = [1, 1]} : vector<4x96xf32> to vector<4x32xf32>
    %449 = vector.extract_strided_slice %439 {offsets = [0, 96], sizes = [4, 32], strides = [1, 1]} : vector<4x128xf32> to vector<4x32xf32>
    %450 = vector.extract_strided_slice %16 {offsets = [0, 6, 0], sizes = [4, 1, 32], strides = [1, 1, 1]} : vector<4x8x32xbf16> to vector<4x1x32xbf16>
    %451 = vector.shape_cast %450 : vector<4x1x32xbf16> to vector<4x32xbf16>
    %452 = arith.extf %451 : vector<4x32xbf16> to vector<4x32xf32>
    %453 = arith.mulf %446, %415 : vector<4x32xf32>
    %454 = arith.mulf %447, %452 : vector<4x32xf32>
    %455 = arith.addf %453, %454 : vector<4x32xf32>
    %456 = arith.mulf %448, %449 : vector<4x32xf32>
    %457 = arith.addf %455, %456 : vector<4x32xf32>
    %cst_129 = arith.constant dense<0.000000e+00> : vector<4xf32>
    %458 = vector.multi_reduction <add>, %457, %cst_129 [1] : vector<4x32xf32> to vector<4xf32>
    %459 = vector.shape_cast %458 : vector<4xf32> to vector<4x1xf32>
    %cst_130 = arith.constant 3.125000e-02 : f32
    %460 = vector.broadcast %cst_130 : f32 to vector<4x1xf32>
    %461 = arith.mulf %459, %460 : vector<4x1xf32>
    %462 = vector.broadcast %461 : vector<4x1xf32> to vector<4x32xf32>
    %463 = arith.subf %457, %462 : vector<4x32xf32>
    %464 = arith.mulf %463, %463 : vector<4x32xf32>
    %cst_131 = arith.constant dense<0.000000e+00> : vector<4xf32>
    %465 = vector.multi_reduction <add>, %464, %cst_131 [1] : vector<4x32xf32> to vector<4xf32>
    %466 = vector.shape_cast %465 : vector<4xf32> to vector<4x1xf32>
    %cst_132 = arith.constant 3.125000e-02 : f32
    %467 = vector.broadcast %cst_132 : f32 to vector<4x1xf32>
    %468 = arith.mulf %466, %467 : vector<4x1xf32>
    %cst_133 = arith.constant 9.99999974E-6 : f32
    %469 = vector.broadcast %cst_133 : f32 to vector<4x1xf32>
    %470 = arith.addf %468, %469 : vector<4x1xf32>
    %471 = math.rsqrt %470 : vector<4x1xf32>
    %472 = vector.broadcast %471 : vector<4x1xf32> to vector<4x32xf32>
    %473 = arith.mulf %463, %472 : vector<4x32xf32>
    %474 = arith.mulf %473, %12 : vector<4x32xf32>
    %475 = arith.addf %474, %15 : vector<4x32xf32>
    %c0_134 = arith.constant 0 : index
    %c6 = arith.constant 6 : index
    %c0_135 = arith.constant 0 : index
    %476 = vector.load %arg3[%c0_134, %c6, %c0_135] : memref<4x8x1xf32, #tpu.memory_space<vmem>>, vector<4x1x1xf32>
    %477 = vector.shape_cast %476 : vector<4x1x1xf32> to vector<4x1xf32>
    %478 = arith.subf %475, %415 : vector<4x32xf32>
    %479 = vector.broadcast %477 : vector<4x1xf32> to vector<4x32xf32>
    %480 = arith.mulf %479, %478 : vector<4x32xf32>
    %481 = arith.addf %415, %480 : vector<4x32xf32>
    %c0_136 = arith.constant 0 : index
    %c6_137 = arith.constant 6 : index
    %c0_138 = arith.constant 0 : index
    %482 = vector.load %arg11[%c0_136, %c6_137, %c0_138] : memref<4x8x32xf32, #tpu.memory_space<vmem>>, vector<4x1x32xf32>
    %483 = vector.shape_cast %482 : vector<4x1x32xf32> to vector<4x32xf32>
    %484 = vector.shape_cast %481 : vector<4x32xf32> to vector<4x1x32xf32>
    tpu.vector_store %arg11[%c0_136, %c6_137, %c0_138], %484 {strides = array<i32>} : memref<4x8x32xf32, #tpu.memory_space<vmem>>, vector<4x1x32xf32>,
    %485 = vector.extract_strided_slice %21 {offsets = [0, 7, 0], sizes = [4, 1, 128], strides = [1, 1, 1]} : vector<4x8x128xf32> to vector<4x1x128xf32>
    %486 = vector.shape_cast %485 : vector<4x1x128xf32> to vector<4x128xf32>
    %487 = arith.truncf %481 : vector<4x32xf32> to vector<4x32xbf16>
    %cst_139 = arith.constant dense<0.000000e+00> : vector<4x128xf32>
    %488 = tpu.matmul %487, %3, %cst_139 {dimension_numbers = #tpu.dot_dimension_numbers<[1], [0], [0], [1], [0, 0, 1, 1], [], []>} : vector<4x32xbf16>, vector<32x128xbf16>, vector<4x128xf32> -> vector<4x128xf32>
    %489 = arith.addf %486, %488 : vector<4x128xf32>
    %490 = arith.mulf %489, %489 : vector<4x128xf32>
    %491 = arith.mulf %489, %490 : vector<4x128xf32>
    %cst_140 = arith.constant 4.471500e-02 : f32
    %492 = vector.broadcast %cst_140 : f32 to vector<4x128xf32>
    %493 = arith.mulf %492, %491 : vector<4x128xf32>
    %494 = arith.addf %489, %493 : vector<4x128xf32>
    %cst_141 = arith.constant 0.797884583 : f32
    %495 = vector.broadcast %cst_141 : f32 to vector<4x128xf32>
    %496 = arith.mulf %495, %494 : vector<4x128xf32>
    %497 = math.tanh %496 : vector<4x128xf32>
    %cst_142 = arith.constant 1.000000e+00 : f32
    %498 = vector.broadcast %cst_142 : f32 to vector<4x128xf32>
    %499 = arith.addf %498, %497 : vector<4x128xf32>
    %cst_143 = arith.constant 5.000000e-01 : f32
    %500 = vector.broadcast %cst_143 : f32 to vector<4x128xf32>
    %501 = arith.mulf %500, %499 : vector<4x128xf32>
    %502 = arith.mulf %489, %501 : vector<4x128xf32>
    %503 = arith.truncf %502 : vector<4x128xf32> to vector<4x128xbf16>
    %cst_144 = arith.constant dense<0.000000e+00> : vector<4x128xf32>
    %504 = tpu.matmul %503, %5, %cst_144 {dimension_numbers = #tpu.dot_dimension_numbers<[1], [0], [0], [1], [0, 0, 1, 1], [], []>} : vector<4x128xbf16>, vector<128x128xbf16>, vector<4x128xf32> -> vector<4x128xf32>
    %505 = arith.addf %504, %9 : vector<4x128xf32>
    %506 = vector.extract_strided_slice %505 {offsets = [0, 0], sizes = [4, 96], strides = [1, 1]} : vector<4x128xf32> to vector<4x96xf32>
    %507 = arith.negf %506 : vector<4x96xf32>
    %508 = math.exp %507 : vector<4x96xf32>
    %cst_145 = arith.constant 1.000000e+00 : f32
    %509 = vector.broadcast %cst_145 : f32 to vector<4x96xf32>
    %510 = arith.addf %509, %508 : vector<4x96xf32>
    %511 = arith.divf %509, %510 : vector<4x96xf32>
    %512 = vector.extract_strided_slice %511 {offsets = [0, 0], sizes = [4, 32], strides = [1, 1]} : vector<4x96xf32> to vector<4x32xf32>
    %513 = vector.extract_strided_slice %511 {offsets = [0, 32], sizes = [4, 32], strides = [1, 1]} : vector<4x96xf32> to vector<4x32xf32>
    %514 = vector.extract_strided_slice %511 {offsets = [0, 64], sizes = [4, 32], strides = [1, 1]} : vector<4x96xf32> to vector<4x32xf32>
    %515 = vector.extract_strided_slice %505 {offsets = [0, 96], sizes = [4, 32], strides = [1, 1]} : vector<4x128xf32> to vector<4x32xf32>
    %516 = vector.extract_strided_slice %16 {offsets = [0, 7, 0], sizes = [4, 1, 32], strides = [1, 1, 1]} : vector<4x8x32xbf16> to vector<4x1x32xbf16>
    %517 = vector.shape_cast %516 : vector<4x1x32xbf16> to vector<4x32xbf16>
    %518 = arith.extf %517 : vector<4x32xbf16> to vector<4x32xf32>
    %519 = arith.mulf %512, %481 : vector<4x32xf32>
    %520 = arith.mulf %513, %518 : vector<4x32xf32>
    %521 = arith.addf %519, %520 : vector<4x32xf32>
    %522 = arith.mulf %514, %515 : vector<4x32xf32>
    %523 = arith.addf %521, %522 : vector<4x32xf32>
    %cst_146 = arith.constant dense<0.000000e+00> : vector<4xf32>
    %524 = vector.multi_reduction <add>, %523, %cst_146 [1] : vector<4x32xf32> to vector<4xf32>
    %525 = vector.shape_cast %524 : vector<4xf32> to vector<4x1xf32>
    %cst_147 = arith.constant 3.125000e-02 : f32
    %526 = vector.broadcast %cst_147 : f32 to vector<4x1xf32>
    %527 = arith.mulf %525, %526 : vector<4x1xf32>
    %528 = vector.broadcast %527 : vector<4x1xf32> to vector<4x32xf32>
    %529 = arith.subf %523, %528 : vector<4x32xf32>
    %530 = arith.mulf %529, %529 : vector<4x32xf32>
    %cst_148 = arith.constant dense<0.000000e+00> : vector<4xf32>
    %531 = vector.multi_reduction <add>, %530, %cst_148 [1] : vector<4x32xf32> to vector<4xf32>
    %532 = vector.shape_cast %531 : vector<4xf32> to vector<4x1xf32>
    %cst_149 = arith.constant 3.125000e-02 : f32
    %533 = vector.broadcast %cst_149 : f32 to vector<4x1xf32>
    %534 = arith.mulf %532, %533 : vector<4x1xf32>
    %cst_150 = arith.constant 9.99999974E-6 : f32
    %535 = vector.broadcast %cst_150 : f32 to vector<4x1xf32>
    %536 = arith.addf %534, %535 : vector<4x1xf32>
    %537 = math.rsqrt %536 : vector<4x1xf32>
    %538 = vector.broadcast %537 : vector<4x1xf32> to vector<4x32xf32>
    %539 = arith.mulf %529, %538 : vector<4x32xf32>
    %540 = arith.mulf %539, %12 : vector<4x32xf32>
    %541 = arith.addf %540, %15 : vector<4x32xf32>
    %c0_151 = arith.constant 0 : index
    %c7 = arith.constant 7 : index
    %c0_152 = arith.constant 0 : index
    %542 = vector.load %arg3[%c0_151, %c7, %c0_152] : memref<4x8x1xf32, #tpu.memory_space<vmem>>, vector<4x1x1xf32>
    %543 = vector.shape_cast %542 : vector<4x1x1xf32> to vector<4x1xf32>
    %544 = arith.subf %541, %481 : vector<4x32xf32>
    %545 = vector.broadcast %543 : vector<4x1xf32> to vector<4x32xf32>
    %546 = arith.mulf %545, %544 : vector<4x32xf32>
    %547 = arith.addf %481, %546 : vector<4x32xf32>
    %c0_153 = arith.constant 0 : index
    %c7_154 = arith.constant 7 : index
    %c0_155 = arith.constant 0 : index
    %548 = vector.load %arg11[%c0_153, %c7_154, %c0_155] : memref<4x8x32xf32, #tpu.memory_space<vmem>>, vector<4x1x32xf32>
    %549 = vector.shape_cast %548 : vector<4x1x32xf32> to vector<4x32xf32>
    %550 = vector.shape_cast %547 : vector<4x32xf32> to vector<4x1x32xf32>
    tpu.vector_store %arg11[%c0_153, %c7_154, %c0_155], %550 {strides = array<i32>} : memref<4x8x32xf32, #tpu.memory_space<vmem>>, vector<4x1x32xf32>,
    %c0_156 = arith.constant 0 : index
    %c0_157 = arith.constant 0 : index
    %551 = vector.load %arg13[%c0_156, %c0_157] : memref<4x32xf32, #tpu.memory_space<vmem>>, vector<4x32xf32>
    tpu.vector_store %arg13[%c0_156, %c0_157], %547 {strides = array<i32>} : memref<4x32xf32, #tpu.memory_space<vmem>>, vector<4x32xf32>,
    %c0_i32_158 = arith.constant 0 : i32
    %552 = arith.cmpi eq, %arg1, %c0_i32_158 : i32
    %553 = arith.extui %552 : i1 to i32
    %c0_i32_159 = arith.constant 0 : i32
    %554 = arith.cmpi ne, %553, %c0_i32_159 : i32
    scf.if %554 {
      %c0_160 = arith.constant 0 : index
      %c0_161 = arith.constant 0 : index
      %555 = vector.load %arg12[%c0_160, %c0_161] : memref<4x32xf32, #tpu.memory_space<vmem>>, vector<4x32xf32>
      tpu.vector_store %arg12[%c0_160, %c0_161], %547 {strides = array<i32>} : memref<4x32xf32, #tpu.memory_space<vmem>>, vector<4x32xf32>,
    } else {
    }
    return
  }
  func.func @transform_0(%arg0: i32, %arg1: i32) -> (i32, i32, i32) {
    %c0_i32 = arith.constant 0 : i32
    %c0_i32_0 = arith.constant 0 : i32
    return %arg0, %arg1, %c0_i32 : i32, i32, i32
  }
  func.func @transform_1(%arg0: i32, %arg1: i32) -> (i32, i32, i32) {
    %c0_i32 = arith.constant 0 : i32
    %c0_i32_0 = arith.constant 0 : i32
    return %arg0, %arg1, %c0_i32 : i32, i32, i32
  }
  func.func @transform_2(%arg0: i32, %arg1: i32) -> (i32, i32) {
    %c0_i32 = arith.constant 0 : i32
    %c0_i32_0 = arith.constant 0 : i32
    %c0_i32_1 = arith.constant 0 : i32
    return %c0_i32, %c0_i32_0 : i32, i32
  }
  func.func @transform_3(%arg0: i32, %arg1: i32) -> (i32, i32) {
    %c0_i32 = arith.constant 0 : i32
    %c0_i32_0 = arith.constant 0 : i32
    %c0_i32_1 = arith.constant 0 : i32
    return %c0_i32, %c0_i32_0 : i32, i32
  }
  func.func @transform_4(%arg0: i32, %arg1: i32) -> (i32, i32) {
    %c0_i32 = arith.constant 0 : i32
    %c0_i32_0 = arith.constant 0 : i32
    %c0_i32_1 = arith.constant 0 : i32
    return %c0_i32, %c0_i32_0 : i32, i32
  }
  func.func @transform_5(%arg0: i32, %arg1: i32) -> (i32, i32) {
    %c0_i32 = arith.constant 0 : i32
    %c0_i32_0 = arith.constant 0 : i32
    %c0_i32_1 = arith.constant 0 : i32
    return %c0_i32, %c0_i32_0 : i32, i32
  }
  func.func @transform_6(%arg0: i32, %arg1: i32) -> (i32, i32) {
    %c0_i32 = arith.constant 0 : i32
    %c0_i32_0 = arith.constant 0 : i32
    %c0_i32_1 = arith.constant 0 : i32
    return %c0_i32, %c0_i32_0 : i32, i32
  }
  func.func @transform_7(%arg0: i32, %arg1: i32) -> (i32, i32) {
    %c0_i32 = arith.constant 0 : i32
    %c0_i32_0 = arith.constant 0 : i32
    %c0_i32_1 = arith.constant 0 : i32
    return %c0_i32, %c0_i32_0 : i32, i32
  }
  func.func @transform_8(%arg0: i32, %arg1: i32) -> (i32, i32) {
    %c0_i32 = arith.constant 0 : i32
    %c0_i32_0 = arith.constant 0 : i32
    %c0_i32_1 = arith.constant 0 : i32
    return %c0_i32, %c0_i32_0 : i32, i32
  }
  func.func @transform_9(%arg0: i32, %arg1: i32) -> (i32, i32, i32) {
    %c0_i32 = arith.constant 0 : i32
    %c0_i32_0 = arith.constant 0 : i32
    return %arg0, %arg1, %c0_i32 : i32, i32, i32
  }
  func.func @transform_10(%arg0: i32, %arg1: i32) -> (i32, i32) {
    %c0_i32 = arith.constant 0 : i32
    %c0_i32_0 = arith.constant 0 : i32
    return %arg0, %c0_i32 : i32, i32
  }
}

</mosaic_0001>

<llo_original>
// kernel: tpu_custom_call.1
$region0: #{tpu_custom_call.1}
  #allocation0 [shape = 'u32[]', space=smem, size = 0x4, offset = 0x4, fixed_abs, tag = 'smem constant byte address 0x4 - core index']
  #allocation1 [shape = 'u32[72,128]{1,0:T(1,128)}', space=vmem, size = 0x9000, scoped, tag = 'internal scratch']
  #allocation2 [shape = 'f32[4,32]{1,0:T(4,128)}', space=vmem, size = 0x800, scoped, tag = 'scratch operand']
  %s0 = inlined_call_operand.vmem [shape: bf16[4,8,32], index: 0, kind: input, shape index: {}]
  %s1 = inlined_call_operand.vmem [shape: f32[4,8,1], index: 1, kind: input, shape index: {}]
  %s2 = inlined_call_operand.vmem [shape: bf16[32,128], index: 2, kind: input, shape index: {}]
  %s3 = inlined_call_operand.hbm [shape: bf16[32,128], index: 3, kind: input, shape index: {}]
  %s4 = inlined_call_operand.vmem [shape: f32[1,128], index: 4, kind: input, shape index: {}]
  %s5 = inlined_call_operand.hbm [shape: bf16[128,128], index: 5, kind: input, shape index: {}]
  %s6 = inlined_call_operand.vmem [shape: f32[1,128], index: 6, kind: input, shape index: {}]
  %s7 = inlined_call_operand.vmem [shape: f32[1,32], index: 7, kind: input, shape index: {}]
  %s8 = inlined_call_operand.vmem [shape: f32[1,32], index: 8, kind: input, shape index: {}]
  %s9 = inlined_call_operand.hbm [shape: f32[4,8,32], index: 9, kind: output, shape index: {0}]
  %s10 = inlined_call_operand.hbm [shape: f32[4,32], index: 10, kind: output, shape index: {1}]
  %11 = xla_tuple %s9, %s10
  %s12 = sld [smem:[#allocation0]]
  $region70: #{tpu_custom_call.1} parent=0
    _
  %s14 = ssub.s32 1, %s12
  %s15 = scalar_select 0, %s14, %s12
  $region1: #{tpu_custom_call.1} parent=0
    #allocation3 [shape = 'u8[8192]{0}', space=vmem, size = 0x2000, scoped, tag = 'input window, operand 3, single buffered']
    #allocation4 [shape = 's32[1]{0}', space=sflag, size = 0x4, scoped, tag = 'scoped memory for tpu_custom_call.1']
    #allocation5 [shape = 's32[1]{0}', space=sflag, size = 0x4, scoped, tag = 'scoped memory for tpu_custom_call.1']
    #allocation6 [shape = 'u8[32768]{0}', space=vmem, size = 0x8000, scoped, tag = 'input window, operand 5, single buffered']
    #allocation7 [shape = 's32[1]{0}', space=sflag, size = 0x4, scoped, tag = 'scoped memory for tpu_custom_call.1']
    #allocation8 [shape = 'u8[16384]{0}', space=vmem, size = 0x4000, scoped, tag = 'output window, operand 0, single buffered']
    #allocation9 [shape = 'u8[2048]{0}', space=vmem, size = 0x800, scoped, tag = 'output window, operand 1, single buffered']
    #allocation10 [shape = 's32[1]{0}', space=sflag, size = 0x4, scoped, tag = 'scoped memory for tpu_custom_call.1']
    %16 = vsyncpa [#allocation4], 0
    %17 = vsyncpa [#allocation7], 0
    %18 = vsyncpa [#allocation5], 0
    %19 = vsyncpa [#allocation10], 0
    // Predicated region
    $region2: #{tpu_custom_call.1} parent=1 // pred_check
      _
    $region3: #{tpu_custom_call.1} parent=1 // pred_check_branch
      %21 = sbr.rel (0) target = $region5
    $region4: #{tpu_custom_call.1} parent=1 // pred_region
      _
    $region5: #{tpu_custom_call.1} parent=1 // pred_fallthru
      _
    // Predicated region
    $region6: #{tpu_custom_call.1} parent=1 // pred_check
      _
    $region7: #{tpu_custom_call.1} parent=1 // pred_check_branch
      %23 = sbr.rel (0) target = $region9
    $region8: #{tpu_custom_call.1} parent=1 // pred_region
      _
    $region9: #{tpu_custom_call.1} parent=1 // pred_fallthru
      _
    // Predicated region
    $region10: #{tpu_custom_call.1} parent=1 // pred_check
      _
    $region11: #{tpu_custom_call.1} parent=1 // pred_check_branch
      %25 = sbr.rel (0) target = $region13
    $region12: #{tpu_custom_call.1} parent=1 // pred_region
      _
    $region13: #{tpu_custom_call.1} parent=1 // pred_fallthru
      _
    // Predicated region
    $region14: #{tpu_custom_call.1} parent=1 // pred_check
      _
    $region15: #{tpu_custom_call.1} parent=1 // pred_check_branch
      %27 = sbr.rel (0) target = $region17
    $region16: #{tpu_custom_call.1} parent=1 // pred_region
      %29 = vsyncadd [#allocation4], 0
      %s30 = sshll.u32 %s3, 4
      %s31 = int_to_ptr.hbm [resolvable:$true] %s30
      %s32 = sshll.u32 [#allocation3], 4
      %s33 = int_to_ptr.vmem [resolvable:$true] %s32
      %38 = dma.hbm_to_vmem [thread:$0]  %s31, 256, %s33, [#allocation4], 64, 64, 4
    $region17: #{tpu_custom_call.1} parent=1 // pred_fallthru
      _
    // Predicated region
    $region18: #{tpu_custom_call.1} parent=1 // pred_check
      _
    $region19: #{tpu_custom_call.1} parent=1 // pred_check_branch
      %40 = sbr.rel (0) target = $region21
    $region20: #{tpu_custom_call.1} parent=1 // pred_region
      _
    $region21: #{tpu_custom_call.1} parent=1 // pred_fallthru
      _
    // Predicated region
    $region22: #{tpu_custom_call.1} parent=1 // pred_check
      _
    $region23: #{tpu_custom_call.1} parent=1 // pred_check_branch
      %42 = sbr.rel (0) target = $region25
    $region24: #{tpu_custom_call.1} parent=1 // pred_region
      %44 = vsyncadd [#allocation7], 0
      %s45 = sshll.u32 %s5, 4
      %s46 = int_to_ptr.hbm [resolvable:$true] %s45
      %s47 = sshll.u32 [#allocation6], 4
      %s48 = int_to_ptr.vmem [resolvable:$true] %s47
      %53 = dma.hbm_to_vmem [thread:$0]  %s46, 1024, %s48, [#allocation7], 64, 64, 4
    $region25: #{tpu_custom_call.1} parent=1 // pred_fallthru
      _
    // Predicated region
    $region26: #{tpu_custom_call.1} parent=1 // pred_check
      _
    $region27: #{tpu_custom_call.1} parent=1 // pred_check_branch
      %55 = sbr.rel (0) target = $region29
    $region28: #{tpu_custom_call.1} parent=1 // pred_region
      _
    $region29: #{tpu_custom_call.1} parent=1 // pred_fallthru
      _
    // Predicated region
    $region30: #{tpu_custom_call.1} parent=1 // pred_check
      _
    $region31: #{tpu_custom_call.1} parent=1 // pred_check_branch
      %57 = sbr.rel (0) target = $region33
    $region32: #{tpu_custom_call.1} parent=1 // pred_region
      _
    $region33: #{tpu_custom_call.1} parent=1 // pred_fallthru
      _
    // Predicated region
    $region34: #{tpu_custom_call.1} parent=1 // pred_check
      _
    $region35: #{tpu_custom_call.1} parent=1 // pred_check_branch
      %59 = sbr.rel (0) target = $region37
    $region36: #{tpu_custom_call.1} parent=1 // pred_region
      _
    $region37: #{tpu_custom_call.1} parent=1 // pred_fallthru
      _
    // Predicated region
    $region38: #{tpu_custom_call.1} parent=1 // pred_check
      _
    $region39: #{tpu_custom_call.1} parent=1 // pred_check_branch
      %61 = sbr.rel (0) target = $region41
    $region40: #{tpu_custom_call.1} parent=1 // pred_region
      %63 = dma.done [#allocation4], 256
    $region41: #{tpu_custom_call.1} parent=1 // pred_fallthru
      _
    // Predicated region
    $region42: #{tpu_custom_call.1} parent=1 // pred_check
      _
    $region43: #{tpu_custom_call.1} parent=1 // pred_check_branch
      %65 = sbr.rel (0) target = $region45
    $region44: #{tpu_custom_call.1} parent=1 // pred_region
      %67 = dma.done [#allocation7], 1024
    $region45: #{tpu_custom_call.1} parent=1 // pred_fallthru
      _
    %p69 = scmp.eq.s32.totalorder 0, 0
    // Predicated region
    $region46: #{tpu_custom_call.1} parent=1 // pred_check
      %p70 = pneg %p69
    $region47: #{tpu_custom_call.1} parent=1 // pred_check_branch
      %72 = sbr.rel (%p70) target = $region49
    $region48: #{tpu_custom_call.1} parent=1 // pred_region
      %vm73 = vcmask 257024
      %74 = vst.msk [vmem:[#allocation2] sm:$0xf] %vm73, 0.0
    $region49: #{tpu_custom_call.1} parent=1 // pred_fallthru
      _
    %v75 = vld [vmem:[%s2] sm:$0xf]
    %v76 = vld [vmem:[%s2 + $0x4] sm:$0xf]
    %v77 = vld [vmem:[%s2 + $0x8] sm:$0xf]
    %v78 = vld [vmem:[%s2 + $0xc] sm:$0xf]
    %v79 = vld [vmem:[#allocation3] sm:$0xf]
    %v80 = vld [vmem:[#allocation3 + $0x4] sm:$0xf]
    %v81 = vld [vmem:[#allocation3 + $0x8] sm:$0xf]
    %v82 = vld [vmem:[#allocation3 + $0xc] sm:$0xf]
    %v83 = vld [vmem:[#allocation6] sm:$0xf]
    %v84 = vld [vmem:[#allocation6 + $0x4] sm:$0xf]
    %v85 = vld [vmem:[#allocation6 + $0x8] sm:$0xf]
    %v86 = vld [vmem:[#allocation6 + $0xc] sm:$0xf]
    %v87 = vld [vmem:[#allocation6 + $0x10] sm:$0xf]
    %v88 = vld [vmem:[#allocation6 + $0x14] sm:$0xf]
    %v89 = vld [vmem:[#allocation6 + $0x18] sm:$0xf]
    %v90 = vld [vmem:[#allocation6 + $0x1c] sm:$0xf]
    %v91 = vld [vmem:[#allocation6 + $0x20] sm:$0xf]
    %v92 = vld [vmem:[#allocation6 + $0x24] sm:$0xf]
    %v93 = vld [vmem:[#allocation6 + $0x28] sm:$0xf]
    %v94 = vld [vmem:[#allocation6 + $0x2c] sm:$0xf]
    %v95 = vld [vmem:[#allocation6 + $0x30] sm:$0xf]
    %v96 = vld [vmem:[#allocation6 + $0x34] sm:$0xf]
    %v97 = vld [vmem:[#allocation6 + $0x38] sm:$0xf]
    %v98 = vld [vmem:[#allocation6 + $0x3c] sm:$0xf]
    %v99 = vld [vmem:[%s4] sm:$0x1]
    %v100 = vld [vmem:[%s6] sm:$0x1]
    %v102 = vperm.slane %v100, 0
    %v104 = vld [vmem:[%s7] sm:$0x1]
    %v106 = vperm.slane %v104, 0
    %v108 = vld [vmem:[%s8] sm:$0x1]
    %v110 = vperm.slane %v108, 0
    %v112 = vld [vmem:[%s0] sm:$0xf]
    %v113 = vld [vmem:[%s0 + $0x4] sm:$0xf]
    %v114 = vld [vmem:[%s0 + $0x8] sm:$0xf]
    %v115 = vld [vmem:[%s0 + $0xc] sm:$0xf]
    %v117 = vperm.slane %v99, 0
    %v123 = vunpack.c.l.b16 %v112
    %v124 = vunpack.c.l.b16 %v113
    %v125 = vunpack.c.l.b16 %v114
    %v126 = vunpack.c.l.b16 %v115
    %v127 = vpack.c.b16 %v124, %v123
    %v128 = vpack.c.b16 %v126, %v125
    %v133 = vunpack.c.l.b16 %v79
    %v134 = vunpack.c.l.b16 %v80
    %v135 = vunpack.c.l.b16 %v81
    %v136 = vunpack.c.l.b16 %v82
    %v137 = vpack.c.b16 %v134, %v133
    %v138 = vpack.c.b16 %v136, %v135
    %vm141 = vcmask 261120
    %v143 = vsel %vm141, %v127, 0
    %v146 = vsel %vm141, %v128, 0
    %148 = vmatpush.bf16.msra.mxu0 0
    %149 = vmatpush.bf16.msra.mxu0 0
    %150 = vmatpush.bf16.msra.mxu0 0
    %151 = vmatpush.bf16.msra.mxu0 0
    %152 = vmatpush.bf16.msra.mxu0 0
    %153 = vmatpush.bf16.msra.mxu0 0
    %154 = vmatpush.bf16.msra.mxu0 %v138
    %155 = vmatpush.bf16.msra.mxu0 %v137
    %156 = vmatmul.bf16.gmra.mxu0 %v143
    %v157 = vpop.f32.mrf.mxu0
    %v158 = vadd.f32 %v117, %v157
    %v159 = vpop.f32.mrf.mxu0
    %v160 = vadd.f32 %v117, %v159
    %161 = vmatmul.bf16.gmra.mxu0 %v146
    %v162 = vpop.f32.mrf.mxu0
    %v163 = vadd.f32 %v117, %v162
    %v164 = vpop.f32.mrf.mxu0
    %v165 = vadd.f32 %v117, %v164
    %166 = vdwg.mxu0
    %v167 = vld [vmem:[#allocation2] sm:$0xf]
    %v168 = vpack.c.bf16 %v167, %v167
    %v173 = vunpack.c.l.b16 %v75
    %v174 = vunpack.c.l.b16 %v76
    %v175 = vunpack.c.l.b16 %v77
    %v176 = vunpack.c.l.b16 %v78
    %v177 = vpack.c.b16 %v174, %v173
    %v178 = vpack.c.b16 %v176, %v175
    %v182 = vsel %vm141, %v168, 0
    %184 = vmatpush.bf16.msra.mxu0 0
    %185 = vmatpush.bf16.msra.mxu0 0
    %186 = vmatpush.bf16.msra.mxu0 0
    %187 = vmatpush.bf16.msra.mxu0 0
    %188 = vmatpush.bf16.msra.mxu0 0
    %189 = vmatpush.bf16.msra.mxu0 0
    %190 = vmatpush.bf16.msra.mxu0 %v178
    %191 = vmatpush.bf16.msra.mxu0 %v177
    %192 = vmatmul.bf16.gmra.mxu0 %v182
    %v193 = vpop.f32.mrf.mxu0
    %v194 = vadd.f32 0.0, %v193
    %v195 = vpop.f32.mrf.mxu0
    %196 = vdwg.mxu0
    %v198 = vrot.slane %v194, 1
    %v199 = vrot.slane %v194, 2
    %v200 = vrot.slane %v194, 3
    %v205 = vadd.f32 %v158, %v194
    %v206 = vadd.f32 %v160, %v198
    %v207 = vadd.f32 %v163, %v199
    %v208 = vadd.f32 %v165, %v200
    %v209 = vmul.f32 %v205, %v205
    %v210 = vmul.f32 %v206, %v206
    %v211 = vmul.f32 %v207, %v207
    %v212 = vmul.f32 %v208, %v208
    %v213 = vmul.f32 %v205, %v209
    %v214 = vmul.f32 %v206, %v210
    %v215 = vmul.f32 %v207, %v211
    %v216 = vmul.f32 %v208, %v212
    %v217 = vmul.f32 %v213, 0.044715
    %v218 = vmul.f32 %v214, 0.044715
    %v219 = vmul.f32 %v215, 0.044715
    %v220 = vmul.f32 %v216, 0.044715
    %v221 = vadd.f32 %v205, %v217
    %v222 = vadd.f32 %v206, %v218
    %v223 = vadd.f32 %v207, %v219
    %v224 = vadd.f32 %v208, %v220
    %v225 = vmul.f32 %v221, 0.7978846
    %v226 = vmul.f32 %v222, 0.7978846
    %v227 = vmul.f32 %v223, 0.7978846
    %v228 = vmul.f32 %v224, 0.7978846
    %v229 = vtanh.pop %v225
    %v230 = vtanh.pop %v226
    %v231 = vtanh.pop %v227
    %v232 = vtanh.pop %v228
    %v233 = vadd.f32 %v229, 1.0
    %v234 = vadd.f32 %v230, 1.0
    %v235 = vadd.f32 %v231, 1.0
    %v236 = vadd.f32 %v232, 1.0
    %v237 = vmul.f32 %v233, 0.5
    %v238 = vmul.f32 %v234, 0.5
    %v239 = vmul.f32 %v235, 0.5
    %v240 = vmul.f32 %v236, 0.5
    %v241 = vmul.f32 %v205, %v237
    %v242 = vmul.f32 %v206, %v238
    %v243 = vmul.f32 %v207, %v239
    %v244 = vmul.f32 %v208, %v240
    %v245 = vpack.c.bf16 %v241, %v241
    %v246 = vpack.c.bf16 %v242, %v242
    %v247 = vpack.c.bf16 %v243, %v243
    %v248 = vpack.c.bf16 %v244, %v244
    %v253 = vunpack.c.l.b16 %v245
    %v254 = vunpack.c.l.b16 %v246
    %v255 = vunpack.c.l.b16 %v247
    %v256 = vunpack.c.l.b16 %v248
    %v257 = vrot.slane %v254, 7
    %vm258 = vcmask 1041409
    %v259 = vsel %vm258, %v257, %v253
    %v260 = vrot.slane %v255, 6
    %vm261 = vcmask 1042434
    %v262 = vsel %vm261, %v260, %v259
    %v263 = vrot.slane %v256, 5
    %vm264 = vcmask 1043459
    %v265 = vsel %vm264, %v263, %v262
    %v266 = vpack.c.b16 %v265, %v265
    %v284 = vunpack.c.l.b16 %v83
    %v285 = vunpack.c.l.b16 %v84
    %v286 = vunpack.c.l.b16 %v85
    %v287 = vunpack.c.l.b16 %v86
    %v288 = vunpack.c.l.b16 %v87
    %v289 = vunpack.c.l.b16 %v88
    %v290 = vunpack.c.l.b16 %v89
    %v291 = vunpack.c.l.b16 %v90
    %v292 = vunpack.c.l.b16 %v91
    %v293 = vunpack.c.l.b16 %v92
    %v294 = vunpack.c.l.b16 %v93
    %v295 = vunpack.c.l.b16 %v94
    %v296 = vunpack.c.l.b16 %v95
    %v297 = vunpack.c.l.b16 %v96
    %v298 = vunpack.c.l.b16 %v97
    %v299 = vunpack.c.l.b16 %v98
    %v300 = vpack.c.b16 %v285, %v284
    %v301 = vpack.c.b16 %v287, %v286
    %v302 = vpack.c.b16 %v289, %v288
    %v303 = vpack.c.b16 %v291, %v290
    %v304 = vpack.c.b16 %v293, %v292
    %v305 = vpack.c.b16 %v295, %v294
    %v306 = vpack.c.b16 %v297, %v296
    %v307 = vpack.c.b16 %v299, %v298
    %316 = vmatpush.bf16.msra.mxu0 %v307
    %317 = vmatpush.bf16.msra.mxu0 %v306
    %318 = vmatpush.bf16.msra.mxu0 %v305
    %319 = vmatpush.bf16.msra.mxu0 %v304
    %320 = vmatpush.bf16.msra.mxu0 %v303
    %321 = vmatpush.bf16.msra.mxu0 %v302
    %322 = vmatpush.bf16.msra.mxu0 %v301
    %323 = vmatpush.bf16.msra.mxu0 %v300
    %324 = vmatmul.bf16.gmra.mxu0 %v266
    %v325 = vpop.f32.mrf.mxu0
    %v326 = vadd.f32 %v102, %v325
    %v327 = vpop.f32.mrf.mxu0
    %328 = vdwg.mxu0
    %v329 = vxor.u32 %v326, 2147483648
    %v330 = vmul.f32 %v329, 1.442695
    %v331 = vpow.pop %v330
    %v332 = vadd.f32 %v331, 1.0
    %v333 = vrcp.pop %v332
    %v334 = vmul.f32 %v332, %v333
    %v335 = vsub.f32 1.0, %v334
    %v336 = vmul.f32 %v333, %v335
    %v337 = vadd.f32 %v333, %v336
    %vm338 = vweird.f32 %v332
    %vm339 = vweird.f32 %v333
    %vm340 = vmor %vm338, %vm339
    %v341 = vsel %vm340, %v333, %v337
    %v342 = vand.u32 2147483647, %v332
    %vm343 = vcmp.eq.f32.partialorder %v342, 8.507059e+37
    %v344 = vand.u32 %v332, 2147483648
    %v345 = vor.u32 1.1754944e-38, %v344
    %v346 = vsel %vm343, %v345, %v341
    %v347 = vmul.f32 1.0, %v346
    %v348 = vunpack.c.l.bf16 %v112
    %v349 = vunpack.c.l.bf16 %v113
    %v350 = vunpack.c.l.bf16 %v114
    %v351 = vunpack.c.l.bf16 %v115
    %v352 = vmul.f32 %v347, %v167
    %v357 = vrot.slane %v349, 7
    %v358 = vsel %vm258, %v357, %v348
    %v359 = vrot.slane %v350, 6
    %v360 = vsel %vm261, %v359, %v358
    %v361 = vrot.slane %v351, 5
    %v362 = vsel %vm264, %v361, %v360
    %363 = vrot.lane.b32.xlu0 %v362, 32
    %v364 = vpop.permute.xlu0 %363
    %v366 = vmul.f32 %v347, %v364
    %368 = vrot.lane.b32.xlu0 %v366, 96
    %v369 = vpop.permute.xlu0 %368
    %v371 = vadd.f32 %v352, %v369
    %373 = vrot.lane.b32.xlu0 %v326, 96
    %v374 = vpop.permute.xlu0 %373
    %v376 = vmul.f32 %v347, %v374
    %378 = vrot.lane.b32.xlu0 %v376, 64
    %v379 = vpop.permute.xlu0 %378
    %v381 = vadd.f32 %v371, %v379
    %vm382 = vcmask 257024
    %v383 = vsel %vm382, %v381, 0.0
    %384 = vadd.xlane.f32.xlu0 %v383
    %v385 = vpop.xlane.xlu0 %384
    %v386 = vmul.f32 %v385, 0.03125
    %v387 = vsub.f32 %v381, %v386
    %v388 = vmul.f32 %v387, %v387
    %v389 = vsel %vm382, %v388, 0.0
    %390 = vadd.xlane.f32.xlu0 %v389
    %v391 = vpop.xlane.xlu0 %390
    %v392 = vmul.f32 %v391, 0.03125
    %v393 = vadd.f32 %v392, 1e-05
    %v394 = vrsqrt.pop %v393
    %v395 = vmul.f32 %v394, %v393
    %v396 = vmul.f32 %v395, %v394
    %v397 = vmul.f32 0.5, %v396
    %v398 = vsub.f32 1.5, %v397
    %v399 = vmul.f32 %v394, %v398
    %vm400 = vweird.f32 %v393
    %vm401 = vweird.f32 %v394
    %vm402 = vmor %vm400, %vm401
    %v403 = vsel %vm402, %v394, %v399
    %v404 = vmul.f32 %v387, %v403
    %v405 = vmul.f32 %v404, %v106
    %v406 = vadd.f32 %v405, %v110
    %v407 = vld [vmem:[%s1] sm:$0x1]
    %v408 = vld [vmem:[%s1 + $0x8] sm:$0x1]
    %v409 = vld [vmem:[%s1 + $0x10] sm:$0x1]
    %v410 = vld [vmem:[%s1 + $0x18] sm:$0x1]
    %v411 = vsub.f32 %v406, %v167
    %413 = vset.pattern.permute.xlu0 0
    %414 = vperm.xlu0 %413, %v407
    %v415 = vpop.permute.xlu0 %414
    %418 = vset.pattern.permute.xlu0 0
    %419 = vperm.xlu0 %418, %v408
    %v420 = vpop.permute.xlu0 %419
    %423 = vset.pattern.permute.xlu0 0
    %424 = vperm.xlu0 %423, %v409
    %v425 = vpop.permute.xlu0 %424
    %428 = vset.pattern.permute.xlu0 0
    %429 = vperm.xlu0 %428, %v410
    %v430 = vpop.permute.xlu0 %429
    %v433 = vrot.slane %v411, 1
    %v434 = vrot.slane %v411, 2
    %v435 = vrot.slane %v411, 3
    %v440 = vmul.f32 %v415, %v411
    %v441 = vmul.f32 %v420, %v433
    %v442 = vmul.f32 %v425, %v434
    %v443 = vmul.f32 %v430, %v435
    %v448 = vrot.slane %v441, 7
    %v449 = vsel %vm258, %v448, %v440
    %v450 = vrot.slane %v442, 6
    %v451 = vsel %vm261, %v450, %v449
    %v452 = vrot.slane %v443, 5
    %v453 = vsel %vm264, %v452, %v451
    %v455 = vadd.f32 %v167, %v453
    %v457 = vrot.slane %v455, 1
    %v458 = vrot.slane %v455, 2
    %v459 = vrot.slane %v455, 3
    %vm463 = vcmask 253952
    %464 = vst.msk [vmem:[#allocation8] sm:$0x1] %vm463, %v455
    %465 = vst.msk [vmem:[#allocation8 + $0x8] sm:$0x1] %vm463, %v457
    %466 = vst.msk [vmem:[#allocation8 + $0x10] sm:$0x1] %vm463, %v458
    %467 = vst.msk [vmem:[#allocation8 + $0x18] sm:$0x1] %vm463, %v459
    %v468 = vpack.c.bf16 %v455, %v455
    %v470 = vsel %vm141, %v468, 0
    %472 = vmatpush.bf16.msra.mxu0 0
    %473 = vmatpush.bf16.msra.mxu0 0
    %474 = vmatpush.bf16.msra.mxu0 0
    %475 = vmatpush.bf16.msra.mxu0 0
    %476 = vmatpush.bf16.msra.mxu0 0
    %477 = vmatpush.bf16.msra.mxu0 0
    %478 = vmatpush.bf16.msra.mxu0 %v178
    %479 = vmatpush.bf16.msra.mxu0 %v177
    %480 = vmatmul.bf16.gmra.mxu0 %v470
    %v481 = vpop.f32.mrf.mxu0
    %v482 = vadd.f32 0.0, %v481
    %v483 = vpop.f32.mrf.mxu0
    %484 = vdwg.mxu0
    %v486 = vrot.slane %v482, 7
    %v487 = vrot.slane %v482, 1
    %v488 = vrot.slane %v482, 2
    %v493 = vadd.f32 %v158, %v486
    %v494 = vadd.f32 %v160, %v482
    %v495 = vadd.f32 %v163, %v487
    %v496 = vadd.f32 %v165, %v488
    %v497 = vmul.f32 %v493, %v493
    %v498 = vmul.f32 %v494, %v494
    %v499 = vmul.f32 %v495, %v495
    %v500 = vmul.f32 %v496, %v496
    %v501 = vmul.f32 %v493, %v497
    %v502 = vmul.f32 %v494, %v498
    %v503 = vmul.f32 %v495, %v499
    %v504 = vmul.f32 %v496, %v500
    %v505 = vmul.f32 %v501, 0.044715
    %v506 = vmul.f32 %v502, 0.044715
    %v507 = vmul.f32 %v503, 0.044715
    %v508 = vmul.f32 %v504, 0.044715
    %v509 = vadd.f32 %v493, %v505
    %v510 = vadd.f32 %v494, %v506
    %v511 = vadd.f32 %v495, %v507
    %v512 = vadd.f32 %v496, %v508
    %v513 = vmul.f32 %v509, 0.7978846
    %v514 = vmul.f32 %v510, 0.7978846
    %v515 = vmul.f32 %v511, 0.7978846
    %v516 = vmul.f32 %v512, 0.7978846
    %v517 = vtanh.pop %v513
    %v518 = vtanh.pop %v514
    %v519 = vtanh.pop %v515
    %v520 = vtanh.pop %v516
    %v521 = vadd.f32 %v517, 1.0
    %v522 = vadd.f32 %v518, 1.0
    %v523 = vadd.f32 %v519, 1.0
    %v524 = vadd.f32 %v520, 1.0
    %v525 = vmul.f32 %v521, 0.5
    %v526 = vmul.f32 %v522, 0.5
    %v527 = vmul.f32 %v523, 0.5
    %v528 = vmul.f32 %v524, 0.5
    %v529 = vmul.f32 %v493, %v525
    %v530 = vmul.f32 %v494, %v526
    %v531 = vmul.f32 %v495, %v527
    %v532 = vmul.f32 %v496, %v528
    %v533 = vpack.c.bf16 %v529, %v529
    %v534 = vpack.c.bf16 %v530, %v530
    %v535 = vpack.c.bf16 %v531, %v531
    %v536 = vpack.c.bf16 %v532, %v532
    %v541 = vunpack.c.l.b16 %v533
    %v542 = vunpack.c.l.b16 %v534
    %v543 = vunpack.c.l.b16 %v535
    %v544 = vunpack.c.l.b16 %v536
    %v545 = vrot.slane %v541, 1
    %v546 = vsel %vm258, %v542, %v545
    %v547 = vrot.slane %v543, 7
    %v548 = vsel %vm261, %v547, %v546
    %v549 = vrot.slane %v544, 6
    %v550 = vsel %vm264, %v549, %v548
    %v551 = vpack.c.b16 %v550, %v550
    %553 = vmatpush.bf16.msra.mxu0 %v307
    %554 = vmatpush.bf16.msra.mxu0 %v306
    %555 = vmatpush.bf16.msra.mxu0 %v305
    %556 = vmatpush.bf16.msra.mxu0 %v304
    %557 = vmatpush.bf16.msra.mxu0 %v303
    %558 = vmatpush.bf16.msra.mxu0 %v302
    %559 = vmatpush.bf16.msra.mxu0 %v301
    %560 = vmatpush.bf16.msra.mxu0 %v300
    %561 = vmatmul.bf16.gmra.mxu0 %v551
    %v562 = vpop.f32.mrf.mxu0
    %v563 = vadd.f32 %v102, %v562
    %v564 = vpop.f32.mrf.mxu0
    %565 = vdwg.mxu0
    %v566 = vxor.u32 %v563, 2147483648
    %v567 = vmul.f32 %v566, 1.442695
    %v568 = vpow.pop %v567
    %v569 = vadd.f32 %v568, 1.0
    %v570 = vrcp.pop %v569
    %v571 = vmul.f32 %v569, %v570
    %v572 = vsub.f32 1.0, %v571
    %v573 = vmul.f32 %v570, %v572
    %v574 = vadd.f32 %v570, %v573
    %vm575 = vweird.f32 %v569
    %vm576 = vweird.f32 %v570
    %vm577 = vmor %vm575, %vm576
    %v578 = vsel %vm577, %v570, %v574
    %v579 = vand.u32 2147483647, %v569
    %vm580 = vcmp.eq.f32.partialorder %v579, 8.507059e+37
    %v581 = vand.u32 %v569, 2147483648
    %v582 = vor.u32 1.1754944e-38, %v581
    %v583 = vsel %vm580, %v582, %v578
    %v584 = vmul.f32 1.0, %v583
    %v585 = vmul.f32 %v584, %v455
    %v586 = vrot.slane %v348, 1
    %v587 = vsel %vm258, %v349, %v586
    %v588 = vrot.slane %v350, 7
    %v589 = vsel %vm261, %v588, %v587
    %v590 = vrot.slane %v351, 6
    %v591 = vsel %vm264, %v590, %v589
    %592 = vrot.lane.b32.xlu0 %v591, 32
    %v593 = vpop.permute.xlu0 %592
    %v595 = vmul.f32 %v584, %v593
    %597 = vrot.lane.b32.xlu0 %v595, 96
    %v598 = vpop.permute.xlu0 %597
    %v600 = vadd.f32 %v585, %v598
    %602 = vrot.lane.b32.xlu0 %v563, 96
    %v603 = vpop.permute.xlu0 %602
    %v605 = vmul.f32 %v584, %v603
    %607 = vrot.lane.b32.xlu0 %v605, 64
    %v608 = vpop.permute.xlu0 %607
    %v610 = vadd.f32 %v600, %v608
    %v611 = vsel %vm382, %v610, 0.0
    %612 = vadd.xlane.f32.xlu0 %v611
    %v613 = vpop.xlane.xlu0 %612
    %v614 = vmul.f32 %v613, 0.03125
    %v615 = vsub.f32 %v610, %v614
    %v616 = vmul.f32 %v615, %v615
    %v617 = vsel %vm382, %v616, 0.0
    %618 = vadd.xlane.f32.xlu0 %v617
    %v619 = vpop.xlane.xlu0 %618
    %v620 = vmul.f32 %v619, 0.03125
    %v621 = vadd.f32 %v620, 1e-05
    %v622 = vrsqrt.pop %v621
    %v623 = vmul.f32 %v622, %v621
    %v624 = vmul.f32 %v623, %v622
    %v625 = vmul.f32 0.5, %v624
    %v626 = vsub.f32 1.5, %v625
    %v627 = vmul.f32 %v622, %v626
    %vm628 = vweird.f32 %v621
    %vm629 = vweird.f32 %v622
    %vm630 = vmor %vm628, %vm629
    %v631 = vsel %vm630, %v622, %v627
    %v632 = vmul.f32 %v615, %v631
    %v633 = vmul.f32 %v632, %v106
    %v634 = vadd.f32 %v633, %v110
    %v635 = vld [vmem:[%s1 + $0x1] sm:$0x1]
    %v636 = vld [vmem:[%s1 + $0x9] sm:$0x1]
    %v637 = vld [vmem:[%s1 + $0x11] sm:$0x1]
    %v638 = vld [vmem:[%s1 + $0x19] sm:$0x1]
    %v639 = vsub.f32 %v634, %v455
    %641 = vset.pattern.permute.xlu0 0
    %642 = vperm.xlu0 %641, %v635
    %v643 = vpop.permute.xlu0 %642
    %646 = vset.pattern.permute.xlu0 0
    %647 = vperm.xlu0 %646, %v636
    %v648 = vpop.permute.xlu0 %647
    %651 = vset.pattern.permute.xlu0 0
    %652 = vperm.xlu0 %651, %v637
    %v653 = vpop.permute.xlu0 %652
    %656 = vset.pattern.permute.xlu0 0
    %657 = vperm.xlu0 %656, %v638
    %v658 = vpop.permute.xlu0 %657
    %v661 = vrot.slane %v639, 1
    %v662 = vrot.slane %v639, 2
    %v663 = vrot.slane %v639, 3
    %v668 = vmul.f32 %v643, %v639
    %v669 = vmul.f32 %v648, %v661
    %v670 = vmul.f32 %v653, %v662
    %v671 = vmul.f32 %v658, %v663
    %v676 = vrot.slane %v669, 7
    %v677 = vsel %vm258, %v676, %v668
    %v678 = vrot.slane %v670, 6
    %v679 = vsel %vm261, %v678, %v677
    %v680 = vrot.slane %v671, 5
    %v681 = vsel %vm264, %v680, %v679
    %v683 = vadd.f32 %v455, %v681
    %v685 = vrot.slane %v683, 1
    %v686 = vrot.slane %v683, 2
    %v687 = vrot.slane %v683, 3
    %691 = vst.msk [vmem:[#allocation8 + $0x1] sm:$0x1] %vm463, %v683
    %692 = vst.msk [vmem:[#allocation8 + $0x9] sm:$0x1] %vm463, %v685
    %693 = vst.msk [vmem:[#allocation8 + $0x11] sm:$0x1] %vm463, %v686
    %694 = vst.msk [vmem:[#allocation8 + $0x19] sm:$0x1] %vm463, %v687
    %v695 = vpack.c.bf16 %v683, %v683
    %v697 = vsel %vm141, %v695, 0
    %699 = vmatpush.bf16.msra.mxu0 0
    %700 = vmatpush.bf16.msra.mxu0 0
    %701 = vmatpush.bf16.msra.mxu0 0
    %702 = vmatpush.bf16.msra.mxu0 0
    %703 = vmatpush.bf16.msra.mxu0 0
    %704 = vmatpush.bf16.msra.mxu0 0
    %705 = vmatpush.bf16.msra.mxu0 %v178
    %706 = vmatpush.bf16.msra.mxu0 %v177
    %707 = vmatmul.bf16.gmra.mxu0 %v697
    %v708 = vpop.f32.mrf.mxu0
    %v709 = vadd.f32 0.0, %v708
    %v710 = vpop.f32.mrf.mxu0
    %711 = vdwg.mxu0
    %v713 = vrot.slane %v709, 6
    %v714 = vrot.slane %v709, 7
    %v715 = vrot.slane %v709, 1
    %v720 = vadd.f32 %v158, %v713
    %v721 = vadd.f32 %v160, %v714
    %v722 = vadd.f32 %v163, %v709
    %v723 = vadd.f32 %v165, %v715
    %v724 = vmul.f32 %v720, %v720
    %v725 = vmul.f32 %v721, %v721
    %v726 = vmul.f32 %v722, %v722
    %v727 = vmul.f32 %v723, %v723
    %v728 = vmul.f32 %v720, %v724
    %v729 = vmul.f32 %v721, %v725
    %v730 = vmul.f32 %v722, %v726
    %v731 = vmul.f32 %v723, %v727
    %v732 = vmul.f32 %v728, 0.044715
    %v733 = vmul.f32 %v729, 0.044715
    %v734 = vmul.f32 %v730, 0.044715
    %v735 = vmul.f32 %v731, 0.044715
    %v736 = vadd.f32 %v720, %v732
    %v737 = vadd.f32 %v721, %v733
    %v738 = vadd.f32 %v722, %v734
    %v739 = vadd.f32 %v723, %v735
    %v740 = vmul.f32 %v736, 0.7978846
    %v741 = vmul.f32 %v737, 0.7978846
    %v742 = vmul.f32 %v738, 0.7978846
    %v743 = vmul.f32 %v739, 0.7978846
    %v744 = vtanh.pop %v740
    %v745 = vtanh.pop %v741
    %v746 = vtanh.pop %v742
    %v747 = vtanh.pop %v743
    %v748 = vadd.f32 %v744, 1.0
    %v749 = vadd.f32 %v745, 1.0
    %v750 = vadd.f32 %v746, 1.0
    %v751 = vadd.f32 %v747, 1.0
    %v752 = vmul.f32 %v748, 0.5
    %v753 = vmul.f32 %v749, 0.5
    %v754 = vmul.f32 %v750, 0.5
    %v755 = vmul.f32 %v751, 0.5
    %v756 = vmul.f32 %v720, %v752
    %v757 = vmul.f32 %v721, %v753
    %v758 = vmul.f32 %v722, %v754
    %v759 = vmul.f32 %v723, %v755
    %v760 = vpack.c.bf16 %v756, %v756
    %v761 = vpack.c.bf16 %v757, %v757
    %v762 = vpack.c.bf16 %v758, %v758
    %v763 = vpack.c.bf16 %v759, %v759
    %v768 = vunpack.c.l.b16 %v760
    %v769 = vunpack.c.l.b16 %v761
    %v770 = vunpack.c.l.b16 %v762
    %v771 = vunpack.c.l.b16 %v763
    %v772 = vrot.slane %v768, 2
    %v773 = vrot.slane %v769, 1
    %v774 = vsel %vm258, %v773, %v772
    %v775 = vsel %vm261, %v770, %v774
    %v776 = vrot.slane %v771, 7
    %v777 = vsel %vm264, %v776, %v775
    %v778 = vpack.c.b16 %v777, %v777
    %780 = vmatpush.bf16.msra.mxu0 %v307
    %781 = vmatpush.bf16.msra.mxu0 %v306
    %782 = vmatpush.bf16.msra.mxu0 %v305
    %783 = vmatpush.bf16.msra.mxu0 %v304
    %784 = vmatpush.bf16.msra.mxu0 %v303
    %785 = vmatpush.bf16.msra.mxu0 %v302
    %786 = vmatpush.bf16.msra.mxu0 %v301
    %787 = vmatpush.bf16.msra.mxu0 %v300
    %788 = vmatmul.bf16.gmra.mxu0 %v778
    %v789 = vpop.f32.mrf.mxu0
    %v790 = vadd.f32 %v102, %v789
    %v791 = vpop.f32.mrf.mxu0
    %792 = vdwg.mxu0
    %v793 = vxor.u32 %v790, 2147483648
    %v794 = vmul.f32 %v793, 1.442695
    %v795 = vpow.pop %v794
    %v796 = vadd.f32 %v795, 1.0
    %v797 = vrcp.pop %v796
    %v798 = vmul.f32 %v796, %v797
    %v799 = vsub.f32 1.0, %v798
    %v800 = vmul.f32 %v797, %v799
    %v801 = vadd.f32 %v797, %v800
    %vm802 = vweird.f32 %v796
    %vm803 = vweird.f32 %v797
    %vm804 = vmor %vm802, %vm803
    %v805 = vsel %vm804, %v797, %v801
    %v806 = vand.u32 2147483647, %v796
    %vm807 = vcmp.eq.f32.partialorder %v806, 8.507059e+37
    %v808 = vand.u32 %v796, 2147483648
    %v809 = vor.u32 1.1754944e-38, %v808
    %v810 = vsel %vm807, %v809, %v805
    %v811 = vmul.f32 1.0, %v810
    %v812 = vmul.f32 %v811, %v683
    %v813 = vrot.slane %v348, 2
    %v814 = vrot.slane %v349, 1
    %v815 = vsel %vm258, %v814, %v813
    %v816 = vsel %vm261, %v350, %v815
    %v817 = vrot.slane %v351, 7
    %v818 = vsel %vm264, %v817, %v816
    %819 = vrot.lane.b32.xlu0 %v818, 32
    %v820 = vpop.permute.xlu0 %819
    %v822 = vmul.f32 %v811, %v820
    %824 = vrot.lane.b32.xlu0 %v822, 96
    %v825 = vpop.permute.xlu0 %824
    %v827 = vadd.f32 %v812, %v825
    %829 = vrot.lane.b32.xlu0 %v790, 96
    %v830 = vpop.permute.xlu0 %829
    %v832 = vmul.f32 %v811, %v830
    %834 = vrot.lane.b32.xlu0 %v832, 64
    %v835 = vpop.permute.xlu0 %834
    %v837 = vadd.f32 %v827, %v835
    %v838 = vsel %vm382, %v837, 0.0
    %839 = vadd.xlane.f32.xlu0 %v838
    %v840 = vpop.xlane.xlu0 %839
    %v841 = vmul.f32 %v840, 0.03125
    %v842 = vsub.f32 %v837, %v841
    %v843 = vmul.f32 %v842, %v842
    %v844 = vsel %vm382, %v843, 0.0
    %845 = vadd.xlane.f32.xlu0 %v844
    %v846 = vpop.xlane.xlu0 %845
    %v847 = vmul.f32 %v846, 0.03125
    %v848 = vadd.f32 %v847, 1e-05
    %v849 = vrsqrt.pop %v848
    %v850 = vmul.f32 %v849, %v848
    %v851 = vmul.f32 %v850, %v849
    %v852 = vmul.f32 0.5, %v851
    %v853 = vsub.f32 1.5, %v852
    %v854 = vmul.f32 %v849, %v853
    %vm855 = vweird.f32 %v848
    %vm856 = vweird.f32 %v849
    %vm857 = vmor %vm855, %vm856
    %v858 = vsel %vm857, %v849, %v854
    %v859 = vmul.f32 %v842, %v858
    %v860 = vmul.f32 %v859, %v106
    %v861 = vadd.f32 %v860, %v110
    %v862 = vld [vmem:[%s1 + $0x2] sm:$0x1]
    %v863 = vld [vmem:[%s1 + $0xa] sm:$0x1]
    %v864 = vld [vmem:[%s1 + $0x12] sm:$0x1]
    %v865 = vld [vmem:[%s1 + $0x1a] sm:$0x1]
    %v866 = vsub.f32 %v861, %v683
    %868 = vset.pattern.permute.xlu0 0
    %869 = vperm.xlu0 %868, %v862
    %v870 = vpop.permute.xlu0 %869
    %873 = vset.pattern.permute.xlu0 0
    %874 = vperm.xlu0 %873, %v863
    %v875 = vpop.permute.xlu0 %874
    %878 = vset.pattern.permute.xlu0 0
    %879 = vperm.xlu0 %878, %v864
    %v880 = vpop.permute.xlu0 %879
    %883 = vset.pattern.permute.xlu0 0
    %884 = vperm.xlu0 %883, %v865
    %v885 = vpop.permute.xlu0 %884
    %v888 = vrot.slane %v866, 1
    %v889 = vrot.slane %v866, 2
    %v890 = vrot.slane %v866, 3
    %v895 = vmul.f32 %v870, %v866
    %v896 = vmul.f32 %v875, %v888
    %v897 = vmul.f32 %v880, %v889
    %v898 = vmul.f32 %v885, %v890
    %v903 = vrot.slane %v896, 7
    %v904 = vsel %vm258, %v903, %v895
    %v905 = vrot.slane %v897, 6
    %v906 = vsel %vm261, %v905, %v904
    %v907 = vrot.slane %v898, 5
    %v908 = vsel %vm264, %v907, %v906
    %v910 = vadd.f32 %v683, %v908
    %v912 = vrot.slane %v910, 1
    %v913 = vrot.slane %v910, 2
    %v914 = vrot.slane %v910, 3
    %918 = vst.msk [vmem:[#allocation8 + $0x2] sm:$0x1] %vm463, %v910
    %919 = vst.msk [vmem:[#allocation8 + $0xa] sm:$0x1] %vm463, %v912
    %920 = vst.msk [vmem:[#allocation8 + $0x12] sm:$0x1] %vm463, %v913
    %921 = vst.msk [vmem:[#allocation8 + $0x1a] sm:$0x1] %vm463, %v914
    %v922 = vpack.c.bf16 %v910, %v910
    %v924 = vsel %vm141, %v922, 0
    %926 = vmatpush.bf16.msra.mxu0 0
    %927 = vmatpush.bf16.msra.mxu0 0
    %928 = vmatpush.bf16.msra.mxu0 0
    %929 = vmatpush.bf16.msra.mxu0 0
    %930 = vmatpush.bf16.msra.mxu0 0
    %931 = vmatpush.bf16.msra.mxu0 0
    %932 = vmatpush.bf16.msra.mxu0 %v178
    %933 = vmatpush.bf16.msra.mxu0 %v177
    %934 = vmatmul.bf16.gmra.mxu0 %v924
    %v935 = vpop.f32.mrf.mxu0
    %v936 = vadd.f32 0.0, %v935
    %v937 = vpop.f32.mrf.mxu0
    %938 = vdwg.mxu0
    %v940 = vrot.slane %v936, 5
    %v941 = vrot.slane %v936, 6
    %v942 = vrot.slane %v936, 7
    %v947 = vadd.f32 %v158, %v940
    %v948 = vadd.f32 %v160, %v941
    %v949 = vadd.f32 %v163, %v942
    %v950 = vadd.f32 %v165, %v936
    %v951 = vmul.f32 %v947, %v947
    %v952 = vmul.f32 %v948, %v948
    %v953 = vmul.f32 %v949, %v949
    %v954 = vmul.f32 %v950, %v950
    %v955 = vmul.f32 %v947, %v951
    %v956 = vmul.f32 %v948, %v952
    %v957 = vmul.f32 %v949, %v953
    %v958 = vmul.f32 %v950, %v954
    %v959 = vmul.f32 %v955, 0.044715
    %v960 = vmul.f32 %v956, 0.044715
    %v961 = vmul.f32 %v957, 0.044715
    %v962 = vmul.f32 %v958, 0.044715
    %v963 = vadd.f32 %v947, %v959
    %v964 = vadd.f32 %v948, %v960
    %v965 = vadd.f32 %v949, %v961
    %v966 = vadd.f32 %v950, %v962
    %v967 = vmul.f32 %v963, 0.7978846
    %v968 = vmul.f32 %v964, 0.7978846
    %v969 = vmul.f32 %v965, 0.7978846
    %v970 = vmul.f32 %v966, 0.7978846
    %v971 = vtanh.pop %v967
    %v972 = vtanh.pop %v968
    %v973 = vtanh.pop %v969
    %v974 = vtanh.pop %v970
    %v975 = vadd.f32 %v971, 1.0
    %v976 = vadd.f32 %v972, 1.0
    %v977 = vadd.f32 %v973, 1.0
    %v978 = vadd.f32 %v974, 1.0
    %v979 = vmul.f32 %v975, 0.5
    %v980 = vmul.f32 %v976, 0.5
    %v981 = vmul.f32 %v977, 0.5
    %v982 = vmul.f32 %v978, 0.5
    %v983 = vmul.f32 %v947, %v979
    %v984 = vmul.f32 %v948, %v980
    %v985 = vmul.f32 %v949, %v981
    %v986 = vmul.f32 %v950, %v982
    %v987 = vpack.c.bf16 %v983, %v983
    %v988 = vpack.c.bf16 %v984, %v984
    %v989 = vpack.c.bf16 %v985, %v985
    %v990 = vpack.c.bf16 %v986, %v986
    %v995 = vunpack.c.l.b16 %v987
    %v996 = vunpack.c.l.b16 %v988
    %v997 = vunpack.c.l.b16 %v989
    %v998 = vunpack.c.l.b16 %v990
    %v999 = vrot.slane %v995, 3
    %v1000 = vrot.slane %v996, 2
    %v1001 = vsel %vm258, %v1000, %v999
    %v1002 = vrot.slane %v997, 1
    %v1003 = vsel %vm261, %v1002, %v1001
    %v1004 = vsel %vm264, %v998, %v1003
    %v1005 = vpack.c.b16 %v1004, %v1004
    %1007 = vmatpush.bf16.msra.mxu0 %v307
    %1008 = vmatpush.bf16.msra.mxu0 %v306
    %1009 = vmatpush.bf16.msra.mxu0 %v305
    %1010 = vmatpush.bf16.msra.mxu0 %v304
    %1011 = vmatpush.bf16.msra.mxu0 %v303
    %1012 = vmatpush.bf16.msra.mxu0 %v302
    %1013 = vmatpush.bf16.msra.mxu0 %v301
    %1014 = vmatpush.bf16.msra.mxu0 %v300
    %1015 = vmatmul.bf16.gmra.mxu0 %v1005
    %v1016 = vpop.f32.mrf.mxu0
    %v1017 = vadd.f32 %v102, %v1016
    %v1018 = vpop.f32.mrf.mxu0
    %1019 = vdwg.mxu0
    %v1020 = vxor.u32 %v1017, 2147483648
    %v1021 = vmul.f32 %v1020, 1.442695
    %v1022 = vpow.pop %v1021
    %v1023 = vadd.f32 %v1022, 1.0
    %v1024 = vrcp.pop %v1023
    %v1025 = vmul.f32 %v1023, %v1024
    %v1026 = vsub.f32 1.0, %v1025
    %v1027 = vmul.f32 %v1024, %v1026
    %v1028 = vadd.f32 %v1024, %v1027
    %vm1029 = vweird.f32 %v1023
    %vm1030 = vweird.f32 %v1024
    %vm1031 = vmor %vm1029, %vm1030
    %v1032 = vsel %vm1031, %v1024, %v1028
    %v1033 = vand.u32 2147483647, %v1023
    %vm1034 = vcmp.eq.f32.partialorder %v1033, 8.507059e+37
    %v1035 = vand.u32 %v1023, 2147483648
    %v1036 = vor.u32 1.1754944e-38, %v1035
    %v1037 = vsel %vm1034, %v1036, %v1032
    %v1038 = vmul.f32 1.0, %v1037
    %v1039 = vmul.f32 %v1038, %v910
    %v1040 = vrot.slane %v348, 3
    %v1041 = vrot.slane %v349, 2
    %v1042 = vsel %vm258, %v1041, %v1040
    %v1043 = vrot.slane %v350, 1
    %v1044 = vsel %vm261, %v1043, %v1042
    %v1045 = vsel %vm264, %v351, %v1044
    %1046 = vrot.lane.b32.xlu0 %v1045, 32
    %v1047 = vpop.permute.xlu0 %1046
    %v1049 = vmul.f32 %v1038, %v1047
    %1051 = vrot.lane.b32.xlu0 %v1049, 96
    %v1052 = vpop.permute.xlu0 %1051
    %v1054 = vadd.f32 %v1039, %v1052
    %1056 = vrot.lane.b32.xlu0 %v1017, 96
    %v1057 = vpop.permute.xlu0 %1056
    %v1059 = vmul.f32 %v1038, %v1057
    %1061 = vrot.lane.b32.xlu0 %v1059, 64
    %v1062 = vpop.permute.xlu0 %1061
    %v1064 = vadd.f32 %v1054, %v1062
    %v1065 = vsel %vm382, %v1064, 0.0
    %1066 = vadd.xlane.f32.xlu0 %v1065
    %v1067 = vpop.xlane.xlu0 %1066
    %v1068 = vmul.f32 %v1067, 0.03125
    %v1069 = vsub.f32 %v1064, %v1068
    %v1070 = vmul.f32 %v1069, %v1069
    %v1071 = vsel %vm382, %v1070, 0.0
    %1072 = vadd.xlane.f32.xlu0 %v1071
    %v1073 = vpop.xlane.xlu0 %1072
    %v1074 = vmul.f32 %v1073, 0.03125
    %v1075 = vadd.f32 %v1074, 1e-05
    %v1076 = vrsqrt.pop %v1075
    %v1077 = vmul.f32 %v1076, %v1075
    %v1078 = vmul.f32 %v1077, %v1076
    %v1079 = vmul.f32 0.5, %v1078
    %v1080 = vsub.f32 1.5, %v1079
    %v1081 = vmul.f32 %v1076, %v1080
    %vm1082 = vweird.f32 %v1075
    %vm1083 = vweird.f32 %v1076
    %vm1084 = vmor %vm1082, %vm1083
    %v1085 = vsel %vm1084, %v1076, %v1081
    %v1086 = vmul.f32 %v1069, %v1085
    %v1087 = vmul.f32 %v1086, %v106
    %v1088 = vadd.f32 %v1087, %v110
    %v1089 = vld [vmem:[%s1 + $0x3] sm:$0x1]
    %v1090 = vld [vmem:[%s1 + $0xb] sm:$0x1]
    %v1091 = vld [vmem:[%s1 + $0x13] sm:$0x1]
    %v1092 = vld [vmem:[%s1 + $0x1b] sm:$0x1]
    %v1093 = vsub.f32 %v1088, %v910
    %1095 = vset.pattern.permute.xlu0 0
    %1096 = vperm.xlu0 %1095, %v1089
    %v1097 = vpop.permute.xlu0 %1096
    %1100 = vset.pattern.permute.xlu0 0
    %1101 = vperm.xlu0 %1100, %v1090
    %v1102 = vpop.permute.xlu0 %1101
    %1105 = vset.pattern.permute.xlu0 0
    %1106 = vperm.xlu0 %1105, %v1091
    %v1107 = vpop.permute.xlu0 %1106
    %1110 = vset.pattern.permute.xlu0 0
    %1111 = vperm.xlu0 %1110, %v1092
    %v1112 = vpop.permute.xlu0 %1111
    %v1115 = vrot.slane %v1093, 1
    %v1116 = vrot.slane %v1093, 2
    %v1117 = vrot.slane %v1093, 3
    %v1122 = vmul.f32 %v1097, %v1093
    %v1123 = vmul.f32 %v1102, %v1115
    %v1124 = vmul.f32 %v1107, %v1116
    %v1125 = vmul.f32 %v1112, %v1117
    %v1130 = vrot.slane %v1123, 7
    %v1131 = vsel %vm258, %v1130, %v1122
    %v1132 = vrot.slane %v1124, 6
    %v1133 = vsel %vm261, %v1132, %v1131
    %v1134 = vrot.slane %v1125, 5
    %v1135 = vsel %vm264, %v1134, %v1133
    %v1137 = vadd.f32 %v910, %v1135
    %v1139 = vrot.slane %v1137, 1
    %v1140 = vrot.slane %v1137, 2
    %v1141 = vrot.slane %v1137, 3
    %1145 = vst.msk [vmem:[#allocation8 + $0x3] sm:$0x1] %vm463, %v1137
    %1146 = vst.msk [vmem:[#allocation8 + $0xb] sm:$0x1] %vm463, %v1139
    %1147 = vst.msk [vmem:[#allocation8 + $0x13] sm:$0x1] %vm463, %v1140
    %1148 = vst.msk [vmem:[#allocation8 + $0x1b] sm:$0x1] %vm463, %v1141
    %v1149 = vpack.c.bf16 %v1137, %v1137
    %v1151 = vsel %vm141, %v1149, 0
    %1153 = vmatpush.bf16.msra.mxu0 0
    %1154 = vmatpush.bf16.msra.mxu0 0
    %1155 = vmatpush.bf16.msra.mxu0 0
    %1156 = vmatpush.bf16.msra.mxu0 0
    %1157 = vmatpush.bf16.msra.mxu0 0
    %1158 = vmatpush.bf16.msra.mxu0 0
    %1159 = vmatpush.bf16.msra.mxu0 %v178
    %1160 = vmatpush.bf16.msra.mxu0 %v177
    %1161 = vmatmul.bf16.gmra.mxu0 %v1151
    %v1162 = vpop.f32.mrf.mxu0
    %v1163 = vadd.f32 0.0, %v1162
    %v1164 = vpop.f32.mrf.mxu0
    %1165 = vdwg.mxu0
    %v1167 = vrot.slane %v1163, 4
    %v1168 = vrot.slane %v1163, 5
    %v1169 = vrot.slane %v1163, 6
    %v1170 = vrot.slane %v1163, 7
    %v1175 = vadd.f32 %v158, %v1167
    %v1176 = vadd.f32 %v160, %v1168
    %v1177 = vadd.f32 %v163, %v1169
    %v1178 = vadd.f32 %v165, %v1170
    %v1179 = vmul.f32 %v1175, %v1175
    %v1180 = vmul.f32 %v1176, %v1176
    %v1181 = vmul.f32 %v1177, %v1177
    %v1182 = vmul.f32 %v1178, %v1178
    %v1183 = vmul.f32 %v1175, %v1179
    %v1184 = vmul.f32 %v1176, %v1180
    %v1185 = vmul.f32 %v1177, %v1181
    %v1186 = vmul.f32 %v1178, %v1182
    %v1187 = vmul.f32 %v1183, 0.044715
    %v1188 = vmul.f32 %v1184, 0.044715
    %v1189 = vmul.f32 %v1185, 0.044715
    %v1190 = vmul.f32 %v1186, 0.044715
    %v1191 = vadd.f32 %v1175, %v1187
    %v1192 = vadd.f32 %v1176, %v1188
    %v1193 = vadd.f32 %v1177, %v1189
    %v1194 = vadd.f32 %v1178, %v1190
    %v1195 = vmul.f32 %v1191, 0.7978846
    %v1196 = vmul.f32 %v1192, 0.7978846
    %v1197 = vmul.f32 %v1193, 0.7978846
    %v1198 = vmul.f32 %v1194, 0.7978846
    %v1199 = vtanh.pop %v1195
    %v1200 = vtanh.pop %v1196
    %v1201 = vtanh.pop %v1197
    %v1202 = vtanh.pop %v1198
    %v1203 = vadd.f32 %v1199, 1.0
    %v1204 = vadd.f32 %v1200, 1.0
    %v1205 = vadd.f32 %v1201, 1.0
    %v1206 = vadd.f32 %v1202, 1.0
    %v1207 = vmul.f32 %v1203, 0.5
    %v1208 = vmul.f32 %v1204, 0.5
    %v1209 = vmul.f32 %v1205, 0.5
    %v1210 = vmul.f32 %v1206, 0.5
    %v1211 = vmul.f32 %v1175, %v1207
    %v1212 = vmul.f32 %v1176, %v1208
    %v1213 = vmul.f32 %v1177, %v1209
    %v1214 = vmul.f32 %v1178, %v1210
    %v1215 = vpack.c.bf16 %v1211, %v1211
    %v1216 = vpack.c.bf16 %v1212, %v1212
    %v1217 = vpack.c.bf16 %v1213, %v1213
    %v1218 = vpack.c.bf16 %v1214, %v1214
    %v1223 = vunpack.c.l.b16 %v1215
    %v1224 = vunpack.c.l.b16 %v1216
    %v1225 = vunpack.c.l.b16 %v1217
    %v1226 = vunpack.c.l.b16 %v1218
    %v1227 = vrot.slane %v1223, 4
    %v1228 = vrot.slane %v1224, 3
    %v1229 = vsel %vm258, %v1228, %v1227
    %v1230 = vrot.slane %v1225, 2
    %v1231 = vsel %vm261, %v1230, %v1229
    %v1232 = vrot.slane %v1226, 1
    %v1233 = vsel %vm264, %v1232, %v1231
    %v1234 = vpack.c.b16 %v1233, %v1233
    %1236 = vmatpush.bf16.msra.mxu0 %v307
    %1237 = vmatpush.bf16.msra.mxu0 %v306
    %1238 = vmatpush.bf16.msra.mxu0 %v305
    %1239 = vmatpush.bf16.msra.mxu0 %v304
    %1240 = vmatpush.bf16.msra.mxu0 %v303
    %1241 = vmatpush.bf16.msra.mxu0 %v302
    %1242 = vmatpush.bf16.msra.mxu0 %v301
    %1243 = vmatpush.bf16.msra.mxu0 %v300
    %1244 = vmatmul.bf16.gmra.mxu0 %v1234
    %v1245 = vpop.f32.mrf.mxu0
    %v1246 = vadd.f32 %v102, %v1245
    %v1247 = vpop.f32.mrf.mxu0
    %1248 = vdwg.mxu0
    %v1249 = vxor.u32 %v1246, 2147483648
    %v1250 = vmul.f32 %v1249, 1.442695
    %v1251 = vpow.pop %v1250
    %v1252 = vadd.f32 %v1251, 1.0
    %v1253 = vrcp.pop %v1252
    %v1254 = vmul.f32 %v1252, %v1253
    %v1255 = vsub.f32 1.0, %v1254
    %v1256 = vmul.f32 %v1253, %v1255
    %v1257 = vadd.f32 %v1253, %v1256
    %vm1258 = vweird.f32 %v1252
    %vm1259 = vweird.f32 %v1253
    %vm1260 = vmor %vm1258, %vm1259
    %v1261 = vsel %vm1260, %v1253, %v1257
    %v1262 = vand.u32 2147483647, %v1252
    %vm1263 = vcmp.eq.f32.partialorder %v1262, 8.507059e+37
    %v1264 = vand.u32 %v1252, 2147483648
    %v1265 = vor.u32 1.1754944e-38, %v1264
    %v1266 = vsel %vm1263, %v1265, %v1261
    %v1267 = vmul.f32 1.0, %v1266
    %v1268 = vmul.f32 %v1267, %v1137
    %v1269 = vrot.slane %v348, 4
    %v1270 = vrot.slane %v349, 3
    %v1271 = vsel %vm258, %v1270, %v1269
    %v1272 = vrot.slane %v350, 2
    %v1273 = vsel %vm261, %v1272, %v1271
    %v1274 = vrot.slane %v351, 1
    %v1275 = vsel %vm264, %v1274, %v1273
    %1276 = vrot.lane.b32.xlu0 %v1275, 32
    %v1277 = vpop.permute.xlu0 %1276
    %v1279 = vmul.f32 %v1267, %v1277
    %1281 = vrot.lane.b32.xlu0 %v1279, 96
    %v1282 = vpop.permute.xlu0 %1281
    %v1284 = vadd.f32 %v1268, %v1282
    %1286 = vrot.lane.b32.xlu0 %v1246, 96
    %v1287 = vpop.permute.xlu0 %1286
    %v1289 = vmul.f32 %v1267, %v1287
    %1291 = vrot.lane.b32.xlu0 %v1289, 64
    %v1292 = vpop.permute.xlu0 %1291
    %v1294 = vadd.f32 %v1284, %v1292
    %v1295 = vsel %vm382, %v1294, 0.0
    %1296 = vadd.xlane.f32.xlu0 %v1295
    %v1297 = vpop.xlane.xlu0 %1296
    %v1298 = vmul.f32 %v1297, 0.03125
    %v1299 = vsub.f32 %v1294, %v1298
    %v1300 = vmul.f32 %v1299, %v1299
    %v1301 = vsel %vm382, %v1300, 0.0
    %1302 = vadd.xlane.f32.xlu0 %v1301
    %v1303 = vpop.xlane.xlu0 %1302
    %v1304 = vmul.f32 %v1303, 0.03125
    %v1305 = vadd.f32 %v1304, 1e-05
    %v1306 = vrsqrt.pop %v1305
    %v1307 = vmul.f32 %v1306, %v1305
    %v1308 = vmul.f32 %v1307, %v1306
    %v1309 = vmul.f32 0.5, %v1308
    %v1310 = vsub.f32 1.5, %v1309
    %v1311 = vmul.f32 %v1306, %v1310
    %vm1312 = vweird.f32 %v1305
    %vm1313 = vweird.f32 %v1306
    %vm1314 = vmor %vm1312, %vm1313
    %v1315 = vsel %vm1314, %v1306, %v1311
    %v1316 = vmul.f32 %v1299, %v1315
    %v1317 = vmul.f32 %v1316, %v106
    %v1318 = vadd.f32 %v1317, %v110
    %v1319 = vld [vmem:[%s1 + $0x4] sm:$0x1]
    %v1320 = vld [vmem:[%s1 + $0xc] sm:$0x1]
    %v1321 = vld [vmem:[%s1 + $0x14] sm:$0x1]
    %v1322 = vld [vmem:[%s1 + $0x1c] sm:$0x1]
    %v1323 = vsub.f32 %v1318, %v1137
    %1325 = vset.pattern.permute.xlu0 0
    %1326 = vperm.xlu0 %1325, %v1319
    %v1327 = vpop.permute.xlu0 %1326
    %1330 = vset.pattern.permute.xlu0 0
    %1331 = vperm.xlu0 %1330, %v1320
    %v1332 = vpop.permute.xlu0 %1331
    %1335 = vset.pattern.permute.xlu0 0
    %1336 = vperm.xlu0 %1335, %v1321
    %v1337 = vpop.permute.xlu0 %1336
    %1340 = vset.pattern.permute.xlu0 0
    %1341 = vperm.xlu0 %1340, %v1322
    %v1342 = vpop.permute.xlu0 %1341
    %v1345 = vrot.slane %v1323, 1
    %v1346 = vrot.slane %v1323, 2
    %v1347 = vrot.slane %v1323, 3
    %v1352 = vmul.f32 %v1327, %v1323
    %v1353 = vmul.f32 %v1332, %v1345
    %v1354 = vmul.f32 %v1337, %v1346
    %v1355 = vmul.f32 %v1342, %v1347
    %v1360 = vrot.slane %v1353, 7
    %v1361 = vsel %vm258, %v1360, %v1352
    %v1362 = vrot.slane %v1354, 6
    %v1363 = vsel %vm261, %v1362, %v1361
    %v1364 = vrot.slane %v1355, 5
    %v1365 = vsel %vm264, %v1364, %v1363
    %v1367 = vadd.f32 %v1137, %v1365
    %v1369 = vrot.slane %v1367, 1
    %v1370 = vrot.slane %v1367, 2
    %v1371 = vrot.slane %v1367, 3
    %1375 = vst.msk [vmem:[#allocation8 + $0x4] sm:$0x1] %vm463, %v1367
    %1376 = vst.msk [vmem:[#allocation8 + $0xc] sm:$0x1] %vm463, %v1369
    %1377 = vst.msk [vmem:[#allocation8 + $0x14] sm:$0x1] %vm463, %v1370
    %1378 = vst.msk [vmem:[#allocation8 + $0x1c] sm:$0x1] %vm463, %v1371
    %v1379 = vpack.c.bf16 %v1367, %v1367
    %v1381 = vsel %vm141, %v1379, 0
    %1383 = vmatpush.bf16.msra.mxu0 0
    %1384 = vmatpush.bf16.msra.mxu0 0
    %1385 = vmatpush.bf16.msra.mxu0 0
    %1386 = vmatpush.bf16.msra.mxu0 0
    %1387 = vmatpush.bf16.msra.mxu0 0
    %1388 = vmatpush.bf16.msra.mxu0 0
    %1389 = vmatpush.bf16.msra.mxu0 %v178
    %1390 = vmatpush.bf16.msra.mxu0 %v177
    %1391 = vmatmul.bf16.gmra.mxu0 %v1381
    %v1392 = vpop.f32.mrf.mxu0
    %v1393 = vadd.f32 0.0, %v1392
    %v1394 = vpop.f32.mrf.mxu0
    %1395 = vdwg.mxu0
    %v1397 = vrot.slane %v1393, 3
    %v1398 = vrot.slane %v1393, 4
    %v1399 = vrot.slane %v1393, 5
    %v1400 = vrot.slane %v1393, 6
    %v1405 = vadd.f32 %v158, %v1397
    %v1406 = vadd.f32 %v160, %v1398
    %v1407 = vadd.f32 %v163, %v1399
    %v1408 = vadd.f32 %v165, %v1400
    %v1409 = vmul.f32 %v1405, %v1405
    %v1410 = vmul.f32 %v1406, %v1406
    %v1411 = vmul.f32 %v1407, %v1407
    %v1412 = vmul.f32 %v1408, %v1408
    %v1413 = vmul.f32 %v1405, %v1409
    %v1414 = vmul.f32 %v1406, %v1410
    %v1415 = vmul.f32 %v1407, %v1411
    %v1416 = vmul.f32 %v1408, %v1412
    %v1417 = vmul.f32 %v1413, 0.044715
    %v1418 = vmul.f32 %v1414, 0.044715
    %v1419 = vmul.f32 %v1415, 0.044715
    %v1420 = vmul.f32 %v1416, 0.044715
    %v1421 = vadd.f32 %v1405, %v1417
    %v1422 = vadd.f32 %v1406, %v1418
    %v1423 = vadd.f32 %v1407, %v1419
    %v1424 = vadd.f32 %v1408, %v1420
    %v1425 = vmul.f32 %v1421, 0.7978846
    %v1426 = vmul.f32 %v1422, 0.7978846
    %v1427 = vmul.f32 %v1423, 0.7978846
    %v1428 = vmul.f32 %v1424, 0.7978846
    %v1429 = vtanh.pop %v1425
    %v1430 = vtanh.pop %v1426
    %v1431 = vtanh.pop %v1427
    %v1432 = vtanh.pop %v1428
    %v1433 = vadd.f32 %v1429, 1.0
    %v1434 = vadd.f32 %v1430, 1.0
    %v1435 = vadd.f32 %v1431, 1.0
    %v1436 = vadd.f32 %v1432, 1.0
    %v1437 = vmul.f32 %v1433, 0.5
    %v1438 = vmul.f32 %v1434, 0.5
    %v1439 = vmul.f32 %v1435, 0.5
    %v1440 = vmul.f32 %v1436, 0.5
    %v1441 = vmul.f32 %v1405, %v1437
    %v1442 = vmul.f32 %v1406, %v1438
    %v1443 = vmul.f32 %v1407, %v1439
    %v1444 = vmul.f32 %v1408, %v1440
    %v1445 = vpack.c.bf16 %v1441, %v1441
    %v1446 = vpack.c.bf16 %v1442, %v1442
    %v1447 = vpack.c.bf16 %v1443, %v1443
    %v1448 = vpack.c.bf16 %v1444, %v1444
    %v1453 = vunpack.c.l.b16 %v1445
    %v1454 = vunpack.c.l.b16 %v1446
    %v1455 = vunpack.c.l.b16 %v1447
    %v1456 = vunpack.c.l.b16 %v1448
    %v1457 = vrot.slane %v1453, 5
    %v1458 = vrot.slane %v1454, 4
    %v1459 = vsel %vm258, %v1458, %v1457
    %v1460 = vrot.slane %v1455, 3
    %v1461 = vsel %vm261, %v1460, %v1459
    %v1462 = vrot.slane %v1456, 2
    %v1463 = vsel %vm264, %v1462, %v1461
    %v1464 = vpack.c.b16 %v1463, %v1463
    %1466 = vmatpush.bf16.msra.mxu0 %v307
    %1467 = vmatpush.bf16.msra.mxu0 %v306
    %1468 = vmatpush.bf16.msra.mxu0 %v305
    %1469 = vmatpush.bf16.msra.mxu0 %v304
    %1470 = vmatpush.bf16.msra.mxu0 %v303
    %1471 = vmatpush.bf16.msra.mxu0 %v302
    %1472 = vmatpush.bf16.msra.mxu0 %v301
    %1473 = vmatpush.bf16.msra.mxu0 %v300
    %1474 = vmatmul.bf16.gmra.mxu0 %v1464
    %v1475 = vpop.f32.mrf.mxu0
    %v1476 = vadd.f32 %v102, %v1475
    %v1477 = vpop.f32.mrf.mxu0
    %1478 = vdwg.mxu0
    %v1479 = vxor.u32 %v1476, 2147483648
    %v1480 = vmul.f32 %v1479, 1.442695
    %v1481 = vpow.pop %v1480
    %v1482 = vadd.f32 %v1481, 1.0
    %v1483 = vrcp.pop %v1482
    %v1484 = vmul.f32 %v1482, %v1483
    %v1485 = vsub.f32 1.0, %v1484
    %v1486 = vmul.f32 %v1483, %v1485
    %v1487 = vadd.f32 %v1483, %v1486
    %vm1488 = vweird.f32 %v1482
    %vm1489 = vweird.f32 %v1483
    %vm1490 = vmor %vm1488, %vm1489
    %v1491 = vsel %vm1490, %v1483, %v1487
    %v1492 = vand.u32 2147483647, %v1482
    %vm1493 = vcmp.eq.f32.partialorder %v1492, 8.507059e+37
    %v1494 = vand.u32 %v1482, 2147483648
    %v1495 = vor.u32 1.1754944e-38, %v1494
    %v1496 = vsel %vm1493, %v1495, %v1491
    %v1497 = vmul.f32 1.0, %v1496
    %v1498 = vmul.f32 %v1497, %v1367
    %v1499 = vrot.slane %v348, 5
    %v1500 = vrot.slane %v349, 4
    %v1501 = vsel %vm258, %v1500, %v1499
    %v1502 = vrot.slane %v350, 3
    %v1503 = vsel %vm261, %v1502, %v1501
    %v1504 = vrot.slane %v351, 2
    %v1505 = vsel %vm264, %v1504, %v1503
    %1506 = vrot.lane.b32.xlu0 %v1505, 32
    %v1507 = vpop.permute.xlu0 %1506
    %v1509 = vmul.f32 %v1497, %v1507
    %1511 = vrot.lane.b32.xlu0 %v1509, 96
    %v1512 = vpop.permute.xlu0 %1511
    %v1514 = vadd.f32 %v1498, %v1512
    %1516 = vrot.lane.b32.xlu0 %v1476, 96
    %v1517 = vpop.permute.xlu0 %1516
    %v1519 = vmul.f32 %v1497, %v1517
    %1521 = vrot.lane.b32.xlu0 %v1519, 64
    %v1522 = vpop.permute.xlu0 %1521
    %v1524 = vadd.f32 %v1514, %v1522
    %v1525 = vsel %vm382, %v1524, 0.0
    %1526 = vadd.xlane.f32.xlu0 %v1525
    %v1527 = vpop.xlane.xlu0 %1526
    %v1528 = vmul.f32 %v1527, 0.03125
    %v1529 = vsub.f32 %v1524, %v1528
    %v1530 = vmul.f32 %v1529, %v1529
    %v1531 = vsel %vm382, %v1530, 0.0
    %1532 = vadd.xlane.f32.xlu0 %v1531
    %v1533 = vpop.xlane.xlu0 %1532
    %v1534 = vmul.f32 %v1533, 0.03125
    %v1535 = vadd.f32 %v1534, 1e-05
    %v1536 = vrsqrt.pop %v1535
    %v1537 = vmul.f32 %v1536, %v1535
    %v1538 = vmul.f32 %v1537, %v1536
    %v1539 = vmul.f32 0.5, %v1538
    %v1540 = vsub.f32 1.5, %v1539
    %v1541 = vmul.f32 %v1536, %v1540
    %vm1542 = vweird.f32 %v1535
    %vm1543 = vweird.f32 %v1536
    %vm1544 = vmor %vm1542, %vm1543
    %v1545 = vsel %vm1544, %v1536, %v1541
    %v1546 = vmul.f32 %v1529, %v1545
    %v1547 = vmul.f32 %v1546, %v106
    %v1548 = vadd.f32 %v1547, %v110
    %v1549 = vld [vmem:[%s1 + $0x5] sm:$0x1]
    %v1550 = vld [vmem:[%s1 + $0xd] sm:$0x1]
    %v1551 = vld [vmem:[%s1 + $0x15] sm:$0x1]
    %v1552 = vld [vmem:[%s1 + $0x1d] sm:$0x1]
    %v1553 = vsub.f32 %v1548, %v1367
    %1555 = vset.pattern.permute.xlu0 0
    %1556 = vperm.xlu0 %1555, %v1549
    %v1557 = vpop.permute.xlu0 %1556
    %1560 = vset.pattern.permute.xlu0 0
    %1561 = vperm.xlu0 %1560, %v1550
    %v1562 = vpop.permute.xlu0 %1561
    %1565 = vset.pattern.permute.xlu0 0
    %1566 = vperm.xlu0 %1565, %v1551
    %v1567 = vpop.permute.xlu0 %1566
    %1570 = vset.pattern.permute.xlu0 0
    %1571 = vperm.xlu0 %1570, %v1552
    %v1572 = vpop.permute.xlu0 %1571
    %v1575 = vrot.slane %v1553, 1
    %v1576 = vrot.slane %v1553, 2
    %v1577 = vrot.slane %v1553, 3
    %v1582 = vmul.f32 %v1557, %v1553
    %v1583 = vmul.f32 %v1562, %v1575
    %v1584 = vmul.f32 %v1567, %v1576
    %v1585 = vmul.f32 %v1572, %v1577
    %v1590 = vrot.slane %v1583, 7
    %v1591 = vsel %vm258, %v1590, %v1582
    %v1592 = vrot.slane %v1584, 6
    %v1593 = vsel %vm261, %v1592, %v1591
    %v1594 = vrot.slane %v1585, 5
    %v1595 = vsel %vm264, %v1594, %v1593
    %v1597 = vadd.f32 %v1367, %v1595
    %v1599 = vrot.slane %v1597, 1
    %v1600 = vrot.slane %v1597, 2
    %v1601 = vrot.slane %v1597, 3
    %1605 = vst.msk [vmem:[#allocation8 + $0x5] sm:$0x1] %vm463, %v1597
    %1606 = vst.msk [vmem:[#allocation8 + $0xd] sm:$0x1] %vm463, %v1599
    %1607 = vst.msk [vmem:[#allocation8 + $0x15] sm:$0x1] %vm463, %v1600
    %1608 = vst.msk [vmem:[#allocation8 + $0x1d] sm:$0x1] %vm463, %v1601
    %v1609 = vpack.c.bf16 %v1597, %v1597
    %v1611 = vsel %vm141, %v1609, 0
    %1613 = vmatpush.bf16.msra.mxu0 0
    %1614 = vmatpush.bf16.msra.mxu0 0
    %1615 = vmatpush.bf16.msra.mxu0 0
    %1616 = vmatpush.bf16.msra.mxu0 0
    %1617 = vmatpush.bf16.msra.mxu0 0
    %1618 = vmatpush.bf16.msra.mxu0 0
    %1619 = vmatpush.bf16.msra.mxu0 %v178
    %1620 = vmatpush.bf16.msra.mxu0 %v177
    %1621 = vmatmul.bf16.gmra.mxu0 %v1611
    %v1622 = vpop.f32.mrf.mxu0
    %v1623 = vadd.f32 0.0, %v1622
    %v1624 = vpop.f32.mrf.mxu0
    %1625 = vdwg.mxu0
    %v1627 = vrot.slane %v1623, 2
    %v1628 = vrot.slane %v1623, 3
    %v1629 = vrot.slane %v1623, 4
    %v1630 = vrot.slane %v1623, 5
    %v1635 = vadd.f32 %v158, %v1627
    %v1636 = vadd.f32 %v160, %v1628
    %v1637 = vadd.f32 %v163, %v1629
    %v1638 = vadd.f32 %v165, %v1630
    %v1639 = vmul.f32 %v1635, %v1635
    %v1640 = vmul.f32 %v1636, %v1636
    %v1641 = vmul.f32 %v1637, %v1637
    %v1642 = vmul.f32 %v1638, %v1638
    %v1643 = vmul.f32 %v1635, %v1639
    %v1644 = vmul.f32 %v1636, %v1640
    %v1645 = vmul.f32 %v1637, %v1641
    %v1646 = vmul.f32 %v1638, %v1642
    %v1647 = vmul.f32 %v1643, 0.044715
    %v1648 = vmul.f32 %v1644, 0.044715
    %v1649 = vmul.f32 %v1645, 0.044715
    %v1650 = vmul.f32 %v1646, 0.044715
    %v1651 = vadd.f32 %v1635, %v1647
    %v1652 = vadd.f32 %v1636, %v1648
    %v1653 = vadd.f32 %v1637, %v1649
    %v1654 = vadd.f32 %v1638, %v1650
    %v1655 = vmul.f32 %v1651, 0.7978846
    %v1656 = vmul.f32 %v1652, 0.7978846
    %v1657 = vmul.f32 %v1653, 0.7978846
    %v1658 = vmul.f32 %v1654, 0.7978846
    %v1659 = vtanh.pop %v1655
    %v1660 = vtanh.pop %v1656
    %v1661 = vtanh.pop %v1657
    %v1662 = vtanh.pop %v1658
    %v1663 = vadd.f32 %v1659, 1.0
    %v1664 = vadd.f32 %v1660, 1.0
    %v1665 = vadd.f32 %v1661, 1.0
    %v1666 = vadd.f32 %v1662, 1.0
    %v1667 = vmul.f32 %v1663, 0.5
    %v1668 = vmul.f32 %v1664, 0.5
    %v1669 = vmul.f32 %v1665, 0.5
    %v1670 = vmul.f32 %v1666, 0.5
    %v1671 = vmul.f32 %v1635, %v1667
    %v1672 = vmul.f32 %v1636, %v1668
    %v1673 = vmul.f32 %v1637, %v1669
    %v1674 = vmul.f32 %v1638, %v1670
    %v1675 = vpack.c.bf16 %v1671, %v1671
    %v1676 = vpack.c.bf16 %v1672, %v1672
    %v1677 = vpack.c.bf16 %v1673, %v1673
    %v1678 = vpack.c.bf16 %v1674, %v1674
    %v1683 = vunpack.c.l.b16 %v1675
    %v1684 = vunpack.c.l.b16 %v1676
    %v1685 = vunpack.c.l.b16 %v1677
    %v1686 = vunpack.c.l.b16 %v1678
    %v1687 = vrot.slane %v1683, 6
    %v1688 = vrot.slane %v1684, 5
    %v1689 = vsel %vm258, %v1688, %v1687
    %v1690 = vrot.slane %v1685, 4
    %v1691 = vsel %vm261, %v1690, %v1689
    %v1692 = vrot.slane %v1686, 3
    %v1693 = vsel %vm264, %v1692, %v1691
    %v1694 = vpack.c.b16 %v1693, %v1693
    %1696 = vmatpush.bf16.msra.mxu0 %v307
    %1697 = vmatpush.bf16.msra.mxu0 %v306
    %1698 = vmatpush.bf16.msra.mxu0 %v305
    %1699 = vmatpush.bf16.msra.mxu0 %v304
    %1700 = vmatpush.bf16.msra.mxu0 %v303
    %1701 = vmatpush.bf16.msra.mxu0 %v302
    %1702 = vmatpush.bf16.msra.mxu0 %v301
    %1703 = vmatpush.bf16.msra.mxu0 %v300
    %1704 = vmatmul.bf16.gmra.mxu0 %v1694
    %v1705 = vpop.f32.mrf.mxu0
    %v1706 = vadd.f32 %v102, %v1705
    %v1707 = vpop.f32.mrf.mxu0
    %1708 = vdwg.mxu0
    %v1709 = vxor.u32 %v1706, 2147483648
    %v1710 = vmul.f32 %v1709, 1.442695
    %v1711 = vpow.pop %v1710
    %v1712 = vadd.f32 %v1711, 1.0
    %v1713 = vrcp.pop %v1712
    %v1714 = vmul.f32 %v1712, %v1713
    %v1715 = vsub.f32 1.0, %v1714
    %v1716 = vmul.f32 %v1713, %v1715
    %v1717 = vadd.f32 %v1713, %v1716
    %vm1718 = vweird.f32 %v1712
    %vm1719 = vweird.f32 %v1713
    %vm1720 = vmor %vm1718, %vm1719
    %v1721 = vsel %vm1720, %v1713, %v1717
    %v1722 = vand.u32 2147483647, %v1712
    %vm1723 = vcmp.eq.f32.partialorder %v1722, 8.507059e+37
    %v1724 = vand.u32 %v1712, 2147483648
    %v1725 = vor.u32 1.1754944e-38, %v1724
    %v1726 = vsel %vm1723, %v1725, %v1721
    %v1727 = vmul.f32 1.0, %v1726
    %v1728 = vmul.f32 %v1727, %v1597
    %v1729 = vrot.slane %v348, 6
    %v1730 = vrot.slane %v349, 5
    %v1731 = vsel %vm258, %v1730, %v1729
    %v1732 = vrot.slane %v350, 4
    %v1733 = vsel %vm261, %v1732, %v1731
    %v1734 = vrot.slane %v351, 3
    %v1735 = vsel %vm264, %v1734, %v1733
    %1736 = vrot.lane.b32.xlu0 %v1735, 32
    %v1737 = vpop.permute.xlu0 %1736
    %v1739 = vmul.f32 %v1727, %v1737
    %1741 = vrot.lane.b32.xlu0 %v1739, 96
    %v1742 = vpop.permute.xlu0 %1741
    %v1744 = vadd.f32 %v1728, %v1742
    %1746 = vrot.lane.b32.xlu0 %v1706, 96
    %v1747 = vpop.permute.xlu0 %1746
    %v1749 = vmul.f32 %v1727, %v1747
    %1751 = vrot.lane.b32.xlu0 %v1749, 64
    %v1752 = vpop.permute.xlu0 %1751
    %v1754 = vadd.f32 %v1744, %v1752
    %v1755 = vsel %vm382, %v1754, 0.0
    %1756 = vadd.xlane.f32.xlu0 %v1755
    %v1757 = vpop.xlane.xlu0 %1756
    %v1758 = vmul.f32 %v1757, 0.03125
    %v1759 = vsub.f32 %v1754, %v1758
    %v1760 = vmul.f32 %v1759, %v1759
    %v1761 = vsel %vm382, %v1760, 0.0
    %1762 = vadd.xlane.f32.xlu0 %v1761
    %v1763 = vpop.xlane.xlu0 %1762
    %v1764 = vmul.f32 %v1763, 0.03125
    %v1765 = vadd.f32 %v1764, 1e-05
    %v1766 = vrsqrt.pop %v1765
    %v1767 = vmul.f32 %v1766, %v1765
    %v1768 = vmul.f32 %v1767, %v1766
    %v1769 = vmul.f32 0.5, %v1768
    %v1770 = vsub.f32 1.5, %v1769
    %v1771 = vmul.f32 %v1766, %v1770
    %vm1772 = vweird.f32 %v1765
    %vm1773 = vweird.f32 %v1766
    %vm1774 = vmor %vm1772, %vm1773
    %v1775 = vsel %vm1774, %v1766, %v1771
    %v1776 = vmul.f32 %v1759, %v1775
    %v1777 = vmul.f32 %v1776, %v106
    %v1778 = vadd.f32 %v1777, %v110
    %v1779 = vld [vmem:[%s1 + $0x6] sm:$0x1]
    %v1780 = vld [vmem:[%s1 + $0xe] sm:$0x1]
    %v1781 = vld [vmem:[%s1 + $0x16] sm:$0x1]
    %v1782 = vld [vmem:[%s1 + $0x1e] sm:$0x1]
    %v1783 = vsub.f32 %v1778, %v1597
    %1785 = vset.pattern.permute.xlu0 0
    %1786 = vperm.xlu0 %1785, %v1779
    %v1787 = vpop.permute.xlu0 %1786
    %1790 = vset.pattern.permute.xlu0 0
    %1791 = vperm.xlu0 %1790, %v1780
    %v1792 = vpop.permute.xlu0 %1791
    %1795 = vset.pattern.permute.xlu0 0
    %1796 = vperm.xlu0 %1795, %v1781
    %v1797 = vpop.permute.xlu0 %1796
    %1800 = vset.pattern.permute.xlu0 0
    %1801 = vperm.xlu0 %1800, %v1782
    %v1802 = vpop.permute.xlu0 %1801
    %v1805 = vrot.slane %v1783, 1
    %v1806 = vrot.slane %v1783, 2
    %v1807 = vrot.slane %v1783, 3
    %v1812 = vmul.f32 %v1787, %v1783
    %v1813 = vmul.f32 %v1792, %v1805
    %v1814 = vmul.f32 %v1797, %v1806
    %v1815 = vmul.f32 %v1802, %v1807
    %v1820 = vrot.slane %v1813, 7
    %v1821 = vsel %vm258, %v1820, %v1812
    %v1822 = vrot.slane %v1814, 6
    %v1823 = vsel %vm261, %v1822, %v1821
    %v1824 = vrot.slane %v1815, 5
    %v1825 = vsel %vm264, %v1824, %v1823
    %v1827 = vadd.f32 %v1597, %v1825
    %v1829 = vrot.slane %v1827, 1
    %v1830 = vrot.slane %v1827, 2
    %v1831 = vrot.slane %v1827, 3
    %1835 = vst.msk [vmem:[#allocation8 + $0x6] sm:$0x1] %vm463, %v1827
    %1836 = vst.msk [vmem:[#allocation8 + $0xe] sm:$0x1] %vm463, %v1829
    %1837 = vst.msk [vmem:[#allocation8 + $0x16] sm:$0x1] %vm463, %v1830
    %1838 = vst.msk [vmem:[#allocation8 + $0x1e] sm:$0x1] %vm463, %v1831
    %v1839 = vpack.c.bf16 %v1827, %v1827
    %v1841 = vsel %vm141, %v1839, 0
    %1843 = vmatpush.bf16.msra.mxu0 0
    %1844 = vmatpush.bf16.msra.mxu0 0
    %1845 = vmatpush.bf16.msra.mxu0 0
    %1846 = vmatpush.bf16.msra.mxu0 0
    %1847 = vmatpush.bf16.msra.mxu0 0
    %1848 = vmatpush.bf16.msra.mxu0 0
    %1849 = vmatpush.bf16.msra.mxu0 %v178
    %1850 = vmatpush.bf16.msra.mxu0 %v177
    %1851 = vmatmul.bf16.gmra.mxu0 %v1841
    %v1852 = vpop.f32.mrf.mxu0
    %v1853 = vadd.f32 0.0, %v1852
    %v1854 = vpop.f32.mrf.mxu0
    %1855 = vdwg.mxu0
    %v1857 = vrot.slane %v1853, 1
    %v1858 = vrot.slane %v1853, 2
    %v1859 = vrot.slane %v1853, 3
    %v1860 = vrot.slane %v1853, 4
    %v1865 = vadd.f32 %v158, %v1857
    %v1866 = vadd.f32 %v160, %v1858
    %v1867 = vadd.f32 %v163, %v1859
    %v1868 = vadd.f32 %v165, %v1860
    %v1869 = vmul.f32 %v1865, %v1865
    %v1870 = vmul.f32 %v1866, %v1866
    %v1871 = vmul.f32 %v1867, %v1867
    %v1872 = vmul.f32 %v1868, %v1868
    %v1873 = vmul.f32 %v1865, %v1869
    %v1874 = vmul.f32 %v1866, %v1870
    %v1875 = vmul.f32 %v1867, %v1871
    %v1876 = vmul.f32 %v1868, %v1872
    %v1877 = vmul.f32 %v1873, 0.044715
    %v1878 = vmul.f32 %v1874, 0.044715
    %v1879 = vmul.f32 %v1875, 0.044715
    %v1880 = vmul.f32 %v1876, 0.044715
    %v1881 = vadd.f32 %v1865, %v1877
    %v1882 = vadd.f32 %v1866, %v1878
    %v1883 = vadd.f32 %v1867, %v1879
    %v1884 = vadd.f32 %v1868, %v1880
    %v1885 = vmul.f32 %v1881, 0.7978846
    %v1886 = vmul.f32 %v1882, 0.7978846
    %v1887 = vmul.f32 %v1883, 0.7978846
    %v1888 = vmul.f32 %v1884, 0.7978846
    %v1889 = vtanh.pop %v1885
    %v1890 = vtanh.pop %v1886
    %v1891 = vtanh.pop %v1887
    %v1892 = vtanh.pop %v1888
    %v1893 = vadd.f32 %v1889, 1.0
    %v1894 = vadd.f32 %v1890, 1.0
    %v1895 = vadd.f32 %v1891, 1.0
    %v1896 = vadd.f32 %v1892, 1.0
    %v1897 = vmul.f32 %v1893, 0.5
    %v1898 = vmul.f32 %v1894, 0.5
    %v1899 = vmul.f32 %v1895, 0.5
    %v1900 = vmul.f32 %v1896, 0.5
    %v1901 = vmul.f32 %v1865, %v1897
    %v1902 = vmul.f32 %v1866, %v1898
    %v1903 = vmul.f32 %v1867, %v1899
    %v1904 = vmul.f32 %v1868, %v1900
    %v1905 = vpack.c.bf16 %v1901, %v1901
    %v1906 = vpack.c.bf16 %v1902, %v1902
    %v1907 = vpack.c.bf16 %v1903, %v1903
    %v1908 = vpack.c.bf16 %v1904, %v1904
    %v1913 = vunpack.c.l.b16 %v1905
    %v1914 = vunpack.c.l.b16 %v1906
    %v1915 = vunpack.c.l.b16 %v1907
    %v1916 = vunpack.c.l.b16 %v1908
    %v1917 = vrot.slane %v1913, 7
    %v1918 = vrot.slane %v1914, 6
    %v1919 = vsel %vm258, %v1918, %v1917
    %v1920 = vrot.slane %v1915, 5
    %v1921 = vsel %vm261, %v1920, %v1919
    %v1922 = vrot.slane %v1916, 4
    %v1923 = vsel %vm264, %v1922, %v1921
    %v1924 = vpack.c.b16 %v1923, %v1923
    %1926 = vmatpush.bf16.msra.mxu0 %v307
    %1927 = vmatpush.bf16.msra.mxu0 %v306
    %1928 = vmatpush.bf16.msra.mxu0 %v305
    %1929 = vmatpush.bf16.msra.mxu0 %v304
    %1930 = vmatpush.bf16.msra.mxu0 %v303
    %1931 = vmatpush.bf16.msra.mxu0 %v302
    %1932 = vmatpush.bf16.msra.mxu0 %v301
    %1933 = vmatpush.bf16.msra.mxu0 %v300
    %1934 = vmatmul.bf16.gmra.mxu0 %v1924
    %v1935 = vpop.f32.mrf.mxu0
    %v1936 = vadd.f32 %v102, %v1935
    %v1937 = vpop.f32.mrf.mxu0
    %1938 = vdwg.mxu0
    %v1939 = vxor.u32 %v1936, 2147483648
    %v1940 = vmul.f32 %v1939, 1.442695
    %v1941 = vpow.pop %v1940
    %v1942 = vadd.f32 %v1941, 1.0
    %v1943 = vrcp.pop %v1942
    %v1944 = vmul.f32 %v1942, %v1943
    %v1945 = vsub.f32 1.0, %v1944
    %v1946 = vmul.f32 %v1943, %v1945
    %v1947 = vadd.f32 %v1943, %v1946
    %vm1948 = vweird.f32 %v1942
    %vm1949 = vweird.f32 %v1943
    %vm1950 = vmor %vm1948, %vm1949
    %v1951 = vsel %vm1950, %v1943, %v1947
    %v1952 = vand.u32 2147483647, %v1942
    %vm1953 = vcmp.eq.f32.partialorder %v1952, 8.507059e+37
    %v1954 = vand.u32 %v1942, 2147483648
    %v1955 = vor.u32 1.1754944e-38, %v1954
    %v1956 = vsel %vm1953, %v1955, %v1951
    %v1957 = vmul.f32 1.0, %v1956
    %v1958 = vmul.f32 %v1957, %v1827
    %v1959 = vrot.slane %v348, 7
    %v1960 = vrot.slane %v349, 6
    %v1961 = vsel %vm258, %v1960, %v1959
    %v1962 = vrot.slane %v350, 5
    %v1963 = vsel %vm261, %v1962, %v1961
    %v1964 = vrot.slane %v351, 4
    %v1965 = vsel %vm264, %v1964, %v1963
    %1966 = vrot.lane.b32.xlu0 %v1965, 32
    %v1967 = vpop.permute.xlu0 %1966
    %v1969 = vmul.f32 %v1957, %v1967
    %1971 = vrot.lane.b32.xlu0 %v1969, 96
    %v1972 = vpop.permute.xlu0 %1971
    %v1974 = vadd.f32 %v1958, %v1972
    %1976 = vrot.lane.b32.xlu0 %v1936, 96
    %v1977 = vpop.permute.xlu0 %1976
    %v1979 = vmul.f32 %v1957, %v1977
    %1981 = vrot.lane.b32.xlu0 %v1979, 64
    %v1982 = vpop.permute.xlu0 %1981
    %v1984 = vadd.f32 %v1974, %v1982
    %v1985 = vsel %vm382, %v1984, 0.0
    %1986 = vadd.xlane.f32.xlu0 %v1985
    %v1987 = vpop.xlane.xlu0 %1986
    %v1988 = vmul.f32 %v1987, 0.03125
    %v1989 = vsub.f32 %v1984, %v1988
    %v1990 = vmul.f32 %v1989, %v1989
    %v1991 = vsel %vm382, %v1990, 0.0
    %1992 = vadd.xlane.f32.xlu0 %v1991
    %v1993 = vpop.xlane.xlu0 %1992
    %v1994 = vmul.f32 %v1993, 0.03125
    %v1995 = vadd.f32 %v1994, 1e-05
    %v1996 = vrsqrt.pop %v1995
    %v1997 = vmul.f32 %v1996, %v1995
    %v1998 = vmul.f32 %v1997, %v1996
    %v1999 = vmul.f32 0.5, %v1998
    %v2000 = vsub.f32 1.5, %v1999
    %v2001 = vmul.f32 %v1996, %v2000
    %vm2002 = vweird.f32 %v1995
    %vm2003 = vweird.f32 %v1996
    %vm2004 = vmor %vm2002, %vm2003
    %v2005 = vsel %vm2004, %v1996, %v2001
    %v2006 = vmul.f32 %v1989, %v2005
    %v2007 = vmul.f32 %v2006, %v106
    %v2008 = vadd.f32 %v2007, %v110
    %v2009 = vld [vmem:[%s1 + $0x7] sm:$0x1]
    %v2010 = vld [vmem:[%s1 + $0xf] sm:$0x1]
    %v2011 = vld [vmem:[%s1 + $0x17] sm:$0x1]
    %v2012 = vld [vmem:[%s1 + $0x1f] sm:$0x1]
    %v2013 = vsub.f32 %v2008, %v1827
    %2015 = vset.pattern.permute.xlu0 0
    %2016 = vperm.xlu0 %2015, %v2009
    %v2017 = vpop.permute.xlu0 %2016
    %2020 = vset.pattern.permute.xlu0 0
    %2021 = vperm.xlu0 %2020, %v2010
    %v2022 = vpop.permute.xlu0 %2021
    %2025 = vset.pattern.permute.xlu0 0
    %2026 = vperm.xlu0 %2025, %v2011
    %v2027 = vpop.permute.xlu0 %2026
    %2030 = vset.pattern.permute.xlu0 0
    %2031 = vperm.xlu0 %2030, %v2012
    %v2032 = vpop.permute.xlu0 %2031
    %v2035 = vrot.slane %v2013, 1
    %v2036 = vrot.slane %v2013, 2
    %v2037 = vrot.slane %v2013, 3
    %v2042 = vmul.f32 %v2017, %v2013
    %v2043 = vmul.f32 %v2022, %v2035
    %v2044 = vmul.f32 %v2027, %v2036
    %v2045 = vmul.f32 %v2032, %v2037
    %v2050 = vrot.slane %v2043, 7
    %v2051 = vsel %vm258, %v2050, %v2042
    %v2052 = vrot.slane %v2044, 6
    %v2053 = vsel %vm261, %v2052, %v2051
    %v2054 = vrot.slane %v2045, 5
    %v2055 = vsel %vm264, %v2054, %v2053
    %v2057 = vadd.f32 %v1827, %v2055
    %v2059 = vrot.slane %v2057, 1
    %v2060 = vrot.slane %v2057, 2
    %v2061 = vrot.slane %v2057, 3
    %2065 = vst.msk [vmem:[#allocation8 + $0x7] sm:$0x1] %vm463, %v2057
    %2066 = vst.msk [vmem:[#allocation8 + $0xf] sm:$0x1] %vm463, %v2059
    %2067 = vst.msk [vmem:[#allocation8 + $0x17] sm:$0x1] %vm463, %v2060
    %2068 = vst.msk [vmem:[#allocation8 + $0x1f] sm:$0x1] %vm463, %v2061
    %2069 = vst.msk [vmem:[#allocation2] sm:$0xf] %vm382, %v2057
    // Predicated region
    $region50: #{tpu_custom_call.1} parent=1 // pred_check
      %p2070 = pneg %p69
    $region51: #{tpu_custom_call.1} parent=1 // pred_check_branch
      %2072 = sbr.rel (%p2070) target = $region53
    $region52: #{tpu_custom_call.1} parent=1 // pred_region
      %2073 = vst.msk [vmem:[#allocation9] sm:$0xf] %vm382, %v2057
    $region53: #{tpu_custom_call.1} parent=1 // pred_fallthru
      _
    // Predicated region
    $region54: #{tpu_custom_call.1} parent=1 // pred_check
      _
    $region55: #{tpu_custom_call.1} parent=1 // pred_check_branch
      %2075 = sbr.rel (0) target = $region57
    $region56: #{tpu_custom_call.1} parent=1 // pred_region
      %2077 = vsyncadd [#allocation5], 0
      %s2078 = sshll.u32 [#allocation8], 4
      %s2079 = int_to_ptr.vmem [resolvable:$true] %s2078
      %s2080 = sshll.u32 %s9, 4
      %s2081 = int_to_ptr.hbm [resolvable:$true] %s2080
      %2086 = dma.vmem_to_hbm [thread:$0]  %s2079, 512, %s2081, [#allocation5], 128, 128, 8
    $region57: #{tpu_custom_call.1} parent=1 // pred_fallthru
      _
    // Predicated region
    $region58: #{tpu_custom_call.1} parent=1 // pred_check
      _
    $region59: #{tpu_custom_call.1} parent=1 // pred_check_branch
      %2088 = sbr.rel (0) target = $region61
    $region60: #{tpu_custom_call.1} parent=1 // pred_region
      %2090 = vsyncadd [#allocation10], 0
      %s2092 = sshll.u32 [#allocation9], 4
      %s2093 = int_to_ptr.vmem [resolvable:$true] %s2092
      %s2094 = sshll.u32 %s10, 4
      %s2095 = int_to_ptr.hbm [resolvable:$true] %s2094
      %2097 = dma.vmem_to_hbm [thread:$0]  %s2093, 64, %s2095, [#allocation10]
    $region61: #{tpu_custom_call.1} parent=1 // pred_fallthru
      _
    // Predicated region
    $region62: #{tpu_custom_call.1} parent=1 // pred_check
      _
    $region63: #{tpu_custom_call.1} parent=1 // pred_check_branch
      %2099 = sbr.rel (0) target = $region65
    $region64: #{tpu_custom_call.1} parent=1 // pred_region
      %2101 = dma.done [#allocation5], 512
    $region65: #{tpu_custom_call.1} parent=1 // pred_fallthru
      _
    // Predicated region
    $region66: #{tpu_custom_call.1} parent=1 // pred_check
      _
    $region67: #{tpu_custom_call.1} parent=1 // pred_check_branch
      %2103 = sbr.rel (0) target = $region69
    $region68: #{tpu_custom_call.1} parent=1 // pred_region
      %2105 = dma.done [#allocation10], 64
    $region69: #{tpu_custom_call.1} parent=1 // pred_fallthru
      _
    %2106 = vsyncpa [#allocation4], 1
    %2107 = vsyncpa [#allocation7], 1
    %2108 = vsyncpa [#allocation5], 1
    %2109 = vsyncpa [#allocation10], 1

// kernel: tpu_custom_call.1
$region0: #{tpu_custom_call.1}
  #allocation0 [shape = 'u32[]', space=smem, size = 0x4, offset = 0x4, fixed_abs, tag = 'smem constant byte address 0x4 - core index']
  #allocation1 [shape = 'u32[72,128]{1,0:T(1,128)}', space=vmem, size = 0x9000, scoped, tag = 'internal scratch']
  #allocation2 [shape = 'f32[4,32]{1,0:T(4,128)}', space=vmem, size = 0x800, scoped, tag = 'scratch operand']
  %s0 = inlined_call_operand.vmem [shape: bf16[4,8,32], index: 0, kind: input, shape index: {}]
  %s1 = inlined_call_operand.vmem [shape: f32[4,8,1], index: 1, kind: input, shape index: {}]
  %s2 = inlined_call_operand.vmem [shape: bf16[32,128], index: 2, kind: input, shape index: {}]
  %s3 = inlined_call_operand.hbm [shape: bf16[32,128], index: 3, kind: input, shape index: {}]
  %s4 = inlined_call_operand.vmem [shape: f32[1,128], index: 4, kind: input, shape index: {}]
  %s5 = inlined_call_operand.hbm [shape: bf16[128,128], index: 5, kind: input, shape index: {}]
  %s6 = inlined_call_operand.vmem [shape: f32[1,128], index: 6, kind: input, shape index: {}]
  %s7 = inlined_call_operand.vmem [shape: f32[1,32], index: 7, kind: input, shape index: {}]
  %s8 = inlined_call_operand.vmem [shape: f32[1,32], index: 8, kind: input, shape index: {}]
  %s9 = inlined_call_operand.hbm [shape: f32[4,8,32], index: 9, kind: output, shape index: {0}]
  %s10 = inlined_call_operand.hbm [shape: f32[4,32], index: 10, kind: output, shape index: {1}]
  %11 = xla_tuple %s9, %s10
  %s12 = sld [smem:[#allocation0]]
  $region70: #{tpu_custom_call.1} parent=0
    _
  %s14 = ssub.s32 1, %s12
  %s15 = scalar_select 0, %s14, %s12
  $region1: #{tpu_custom_call.1} parent=0
    #allocation3 [shape = 'u8[8192]{0}', space=vmem, size = 0x2000, scoped, tag = 'input window, operand 3, single buffered']
    #allocation4 [shape = 's32[1]{0}', space=sflag, size = 0x4, scoped, tag = 'scoped memory for tpu_custom_call.1']
    #allocation5 [shape = 's32[1]{0}', space=sflag, size = 0x4, scoped, tag = 'scoped memory for tpu_custom_call.1']
    #allocation6 [shape = 'u8[32768]{0}', space=vmem, size = 0x8000, scoped, tag = 'input window, operand 5, single buffered']
    #allocation7 [shape = 's32[1]{0}', space=sflag, size = 0x4, scoped, tag = 'scoped memory for tpu_custom_call.1']
    #allocation8 [shape = 'u8[16384]{0}', space=vmem, size = 0x4000, scoped, tag = 'output window, operand 0, single buffered']
    #allocation9 [shape = 'u8[2048]{0}', space=vmem, size = 0x800, scoped, tag = 'output window, operand 1, single buffered']
    #allocation10 [shape = 's32[1]{0}', space=sflag, size = 0x4, scoped, tag = 'scoped memory for tpu_custom_call.1']
    %16 = vsyncpa [#allocation4], 0
    %17 = vsyncpa [#allocation7], 0
    %18 = vsyncpa [#allocation5], 0
    %19 = vsyncpa [#allocation10], 0
    // Predicated region
    $region2: #{tpu_custom_call.1} parent=1 // pred_check
      _
    $region3: #{tpu_custom_call.1} parent=1 // pred_check_branch
      %21 = sbr.rel (0) target = $region5
    $region4: #{tpu_custom_call.1} parent=1 // pred_region
      _
    $region5: #{tpu_custom_call.1} parent=1 // pred_fallthru
      _
    // Predicated region
    $region6: #{tpu_custom_call.1} parent=1 // pred_check
      _
    $region7: #{tpu_custom_call.1} parent=1 // pred_check_branch
      %23 = sbr.rel (0) target = $region9
    $region8: #{tpu_custom_call.1} parent=1 // pred_region
      _
    $region9: #{tpu_custom_call.1} parent=1 // pred_fallthru
      _
    // Predicated region
    $region10: #{tpu_custom_call.1} parent=1 // pred_check
      _
    $region11: #{tpu_custom_call.1} parent=1 // pred_check_branch
      %25 = sbr.rel (0) target = $region13
    $region12: #{tpu_custom_call.1} parent=1 // pred_region
      _
    $region13: #{tpu_custom_call.1} parent=1 // pred_fallthru
      _
    // Predicated region
    $region14: #{tpu_custom_call.1} parent=1 // pred_check
      _
    $region15: #{tpu_custom_call.1} parent=1 // pred_check_branch
      %27 = sbr.rel (0) target = $region17
    $region16: #{tpu_custom_call.1} parent=1 // pred_region
      %29 = vsyncadd [#allocation4], 0
      %s30 = sshll.u32 %s3, 4
      %s31 = int_to_ptr.hbm [resolvable:$true] %s30
      %s32 = sshll.u32 [#allocation3], 4
      %s33 = int_to_ptr.vmem [resolvable:$true] %s32
      %38 = dma.hbm_to_vmem [thread:$0]  %s31, 256, %s33, [#allocation4], 64, 64, 4
    $region17: #{tpu_custom_call.1} parent=1 // pred_fallthru
      _
    // Predicated region
    $region18: #{tpu_custom_call.1} parent=1 // pred_check
      _
    $region19: #{tpu_custom_call.1} parent=1 // pred_check_branch
      %40 = sbr.rel (0) target = $region21
    $region20: #{tpu_custom_call.1} parent=1 // pred_region
      _
    $region21: #{tpu_custom_call.1} parent=1 // pred_fallthru
      _
    // Predicated region
    $region22: #{tpu_custom_call.1} parent=1 // pred_check
      _
    $region23: #{tpu_custom_call.1} parent=1 // pred_check_branch
      %42 = sbr.rel (0) target = $region25
    $region24: #{tpu_custom_call.1} parent=1 // pred_region
      %44 = vsyncadd [#allocation7], 0
      %s45 = sshll.u32 %s5, 4
      %s46 = int_to_ptr.hbm [resolvable:$true] %s45
      %s47 = sshll.u32 [#allocation6], 4
      %s48 = int_to_ptr.vmem [resolvable:$true] %s47
      %53 = dma.hbm_to_vmem [thread:$0]  %s46, 1024, %s48, [#allocation7], 64, 64, 4
    $region25: #{tpu_custom_call.1} parent=1 // pred_fallthru
      _
    // Predicated region
    $region26: #{tpu_custom_call.1} parent=1 // pred_check
      _
    $region27: #{tpu_custom_call.1} parent=1 // pred_check_branch
      %55 = sbr.rel (0) target = $region29
    $region28: #{tpu_custom_call.1} parent=1 // pred_region
      _
    $region29: #{tpu_custom_call.1} parent=1 // pred_fallthru
      _
    // Predicated region
    $region30: #{tpu_custom_call.1} parent=1 // pred_check
      _
    $region31: #{tpu_custom_call.1} parent=1 // pred_check_branch
      %57 = sbr.rel (0) target = $region33
    $region32: #{tpu_custom_call.1} parent=1 // pred_region
      _
    $region33: #{tpu_custom_call.1} parent=1 // pred_fallthru
      _
    // Predicated region
    $region34: #{tpu_custom_call.1} parent=1 // pred_check
      _
    $region35: #{tpu_custom_call.1} parent=1 // pred_check_branch
      %59 = sbr.rel (0) target = $region37
    $region36: #{tpu_custom_call.1} parent=1 // pred_region
      _
    $region37: #{tpu_custom_call.1} parent=1 // pred_fallthru
      _
    // Predicated region
    $region38: #{tpu_custom_call.1} parent=1 // pred_check
      _
    $region39: #{tpu_custom_call.1} parent=1 // pred_check_branch
      %61 = sbr.rel (0) target = $region41
    $region40: #{tpu_custom_call.1} parent=1 // pred_region
      %63 = dma.done [#allocation4], 256
    $region41: #{tpu_custom_call.1} parent=1 // pred_fallthru
      _
    // Predicated region
    $region42: #{tpu_custom_call.1} parent=1 // pred_check
      _
    $region43: #{tpu_custom_call.1} parent=1 // pred_check_branch
      %65 = sbr.rel (0) target = $region45
    $region44: #{tpu_custom_call.1} parent=1 // pred_region
      %67 = dma.done [#allocation7], 1024
    $region45: #{tpu_custom_call.1} parent=1 // pred_fallthru
      _
    %p69 = scmp.eq.s32.totalorder 0, 0
    // Predicated region
    $region46: #{tpu_custom_call.1} parent=1 // pred_check
      %p70 = pneg %p69
    $region47: #{tpu_custom_call.1} parent=1 // pred_check_branch
      %72 = sbr.rel (%p70) target = $region49
    $region48: #{tpu_custom_call.1} parent=1 // pred_region
      %vm73 = vcmask 257024
      %74 = vst.msk [vmem:[#allocation2] sm:$0xf] %vm73, 0.0
    $region49: #{tpu_custom_call.1} parent=1 // pred_fallthru
      _
    %v75 = vld [vmem:[%s2] sm:$0xf]
    %v76 = vld [vmem:[%s2 + $0x4] sm:$0xf]
    %v77 = vld [vmem:[%s2 + $0x8] sm:$0xf]
    %v78 = vld [vmem:[%s2 + $0xc] sm:$0xf]
    %v79 = vld [vmem:[#allocation3] sm:$0xf]
    %v80 = vld [vmem:[#allocation3 + $0x4] sm:$0xf]
    %v81 = vld [vmem:[#allocation3 + $0x8] sm:$0xf]
    %v82 = vld [vmem:[#allocation3 + $0xc] sm:$0xf]
    %v83 = vld [vmem:[#allocation6] sm:$0xf]
    %v84 = vld [vmem:[#allocation6 + $0x4] sm:$0xf]
    %v85 = vld [vmem:[#allocation6 + $0x8] sm:$0xf]
    %v86 = vld [vmem:[#allocation6 + $0xc] sm:$0xf]
    %v87 = vld [vmem:[#allocation6 + $0x10] sm:$0xf]
    %v88 = vld [vmem:[#allocation6 + $0x14] sm:$0xf]
    %v89 = vld [vmem:[#allocation6 + $0x18] sm:$0xf]
    %v90 = vld [vmem:[#allocation6 + $0x1c] sm:$0xf]
    %v91 = vld [vmem:[#allocation6 + $0x20] sm:$0xf]
    %v92 = vld [vmem:[#allocation6 + $0x24] sm:$0xf]
    %v93 = vld [vmem:[#allocation6 + $0x28] sm:$0xf]
    %v94 = vld [vmem:[#allocation6 + $0x2c] sm:$0xf]
    %v95 = vld [vmem:[#allocation6 + $0x30] sm:$0xf]
    %v96 = vld [vmem:[#allocation6 + $0x34] sm:$0xf]
    %v97 = vld [vmem:[#allocation6 + $0x38] sm:$0xf]
    %v98 = vld [vmem:[#allocation6 + $0x3c] sm:$0xf]
    %v99 = vld [vmem:[%s4] sm:$0x1]
    %v100 = vld [vmem:[%s6] sm:$0x1]
    %v102 = vperm.slane %v100, 0
    %v104 = vld [vmem:[%s7] sm:$0x1]
    %v106 = vperm.slane %v104, 0
    %v108 = vld [vmem:[%s8] sm:$0x1]
    %v110 = vperm.slane %v108, 0
    %v112 = vld [vmem:[%s0] sm:$0xf]
    %v113 = vld [vmem:[%s0 + $0x4] sm:$0xf]
    %v114 = vld [vmem:[%s0 + $0x8] sm:$0xf]
    %v115 = vld [vmem:[%s0 + $0xc] sm:$0xf]
    %v117 = vperm.slane %v99, 0
    %v123 = vunpack.c.l.b16 %v112
    %v124 = vunpack.c.l.b16 %v113
    %v125 = vunpack.c.l.b16 %v114
    %v126 = vunpack.c.l.b16 %v115
    %v127 = vpack.c.b16 %v124, %v123
    %v128 = vpack.c.b16 %v126, %v125
    %v133 = vunpack.c.l.b16 %v79
    %v134 = vunpack.c.l.b16 %v80
    %v135 = vunpack.c.l.b16 %v81
    %v136 = vunpack.c.l.b16 %v82
    %v137 = vpack.c.b16 %v134, %v133
    %v138 = vpack.c.b16 %v136, %v135
    %vm141 = vcmask 261120
    %v143 = vsel %vm141, %v127, 0
    %v146 = vsel %vm141, %v128, 0
    %148 = vmatpush.bf16.msra.mxu0 0
    %149 = vmatpush.bf16.msra.mxu0 0
    %150 = vmatpush.bf16.msra.mxu0 0
    %151 = vmatpush.bf16.msra.mxu0 0
    %152 = vmatpush.bf16.msra.mxu0 0
    %153 = vmatpush.bf16.msra.mxu0 0
    %154 = vmatpush.bf16.msra.mxu0 %v138
    %155 = vmatpush.bf16.msra.mxu0 %v137
    %156 = vmatmul.bf16.gmra.mxu0 %v143
    %v157 = vpop.f32.mrf.mxu0
    %v158 = vadd.f32 %v117, %v157
    %v159 = vpop.f32.mrf.mxu0
    %v160 = vadd.f32 %v117, %v159
    %161 = vmatmul.bf16.gmra.mxu0 %v146
    %v162 = vpop.f32.mrf.mxu0
    %v163 = vadd.f32 %v117, %v162
    %v164 = vpop.f32.mrf.mxu0
    %v165 = vadd.f32 %v117, %v164
    %166 = vdwg.mxu0
    %v167 = vld [vmem:[#allocation2] sm:$0xf]
    %v168 = vpack.c.bf16 %v167, %v167
    %v173 = vunpack.c.l.b16 %v75
    %v174 = vunpack.c.l.b16 %v76
    %v175 = vunpack.c.l.b16 %v77
    %v176 = vunpack.c.l.b16 %v78
    %v177 = vpack.c.b16 %v174, %v173
    %v178 = vpack.c.b16 %v176, %v175
    %v182 = vsel %vm141, %v168, 0
    %184 = vmatpush.bf16.msra.mxu0 0
    %185 = vmatpush.bf16.msra.mxu0 0
    %186 = vmatpush.bf16.msra.mxu0 0
    %187 = vmatpush.bf16.msra.mxu0 0
    %188 = vmatpush.bf16.msra.mxu0 0
    %189 = vmatpush.bf16.msra.mxu0 0
    %190 = vmatpush.bf16.msra.mxu0 %v178
    %191 = vmatpush.bf16.msra.mxu0 %v177
    %192 = vmatmul.bf16.gmra.mxu0 %v182
    %v193 = vpop.f32.mrf.mxu0
    %v194 = vadd.f32 0.0, %v193
    %v195 = vpop.f32.mrf.mxu0
    %196 = vdwg.mxu0
    %v198 = vrot.slane %v194, 1
    %v199 = vrot.slane %v194, 2
    %v200 = vrot.slane %v194, 3
    %v205 = vadd.f32 %v158, %v194
    %v206 = vadd.f32 %v160, %v198
    %v207 = vadd.f32 %v163, %v199
    %v208 = vadd.f32 %v165, %v200
    %v209 = vmul.f32 %v205, %v205
    %v210 = vmul.f32 %v206, %v206
    %v211 = vmul.f32 %v207, %v207
    %v212 = vmul.f32 %v208, %v208
    %v213 = vmul.f32 %v205, %v209
    %v214 = vmul.f32 %v206, %v210
    %v215 = vmul.f32 %v207, %v211
    %v216 = vmul.f32 %v208, %v212
    %v217 = vmul.f32 %v213, 0.044715
    %v218 = vmul.f32 %v214, 0.044715
    %v219 = vmul.f32 %v215, 0.044715
    %v220 = vmul.f32 %v216, 0.044715
    %v221 = vadd.f32 %v205, %v217
    %v222 = vadd.f32 %v206, %v218
    %v223 = vadd.f32 %v207, %v219
    %v224 = vadd.f32 %v208, %v220
    %v225 = vmul.f32 %v221, 0.7978846
    %v226 = vmul.f32 %v222, 0.7978846
    %v227 = vmul.f32 %v223, 0.7978846
    %v228 = vmul.f32 %v224, 0.7978846
    %v229 = vtanh.pop %v225
    %v230 = vtanh.pop %v226
    %v231 = vtanh.pop %v227
    %v232 = vtanh.pop %v228
    %v233 = vadd.f32 %v229, 1.0
    %v234 = vadd.f32 %v230, 1.0
    %v235 = vadd.f32 %v231, 1.0
    %v236 = vadd.f32 %v232, 1.0
    %v237 = vmul.f32 %v233, 0.5
    %v238 = vmul.f32 %v234, 0.5
    %v239 = vmul.f32 %v235, 0.5
    %v240 = vmul.f32 %v236, 0.5
    %v241 = vmul.f32 %v205, %v237
    %v242 = vmul.f32 %v206, %v238
    %v243 = vmul.f32 %v207, %v239
    %v244 = vmul.f32 %v208, %v240
    %v245 = vpack.c.bf16 %v241, %v241
    %v246 = vpack.c.bf16 %v242, %v242
    %v247 = vpack.c.bf16 %v243, %v243
    %v248 = vpack.c.bf16 %v244, %v244
    %v253 = vunpack.c.l.b16 %v245
    %v254 = vunpack.c.l.b16 %v246
    %v255 = vunpack.c.l.b16 %v247
    %v256 = vunpack.c.l.b16 %v248
    %v257 = vrot.slane %v254, 7
    %vm258 = vcmask 1041409
    %v259 = vsel %vm258, %v257, %v253
    %v260 = vrot.slane %v255, 6
    %vm261 = vcmask 1042434
    %v262 = vsel %vm261, %v260, %v259
    %v263 = vrot.slane %v256, 5
    %vm264 = vcmask 1043459
    %v265 = vsel %vm264, %v263, %v262
    %v266 = vpack.c.b16 %v265, %v265
    %v284 = vunpack.c.l.b16 %v83
    %v285 = vunpack.c.l.b16 %v84
    %v286 = vunpack.c.l.b16 %v85
    %v287 = vunpack.c.l.b16 %v86
    %v288 = vunpack.c.l.b16 %v87
    %v289 = vunpack.c.l.b16 %v88
    %v290 = vunpack.c.l.b16 %v89
    %v291 = vunpack.c.l.b16 %v90
    %v292 = vunpack.c.l.b16 %v91
    %v293 = vunpack.c.l.b16 %v92
    %v294 = vunpack.c.l.b16 %v93
    %v295 = vunpack.c.l.b16 %v94
    %v296 = vunpack.c.l.b16 %v95
    %v297 = vunpack.c.l.b16 %v96
    %v298 = vunpack.c.l.b16 %v97
    %v299 = vunpack.c.l.b16 %v98
    %v300 = vpack.c.b16 %v285, %v284
    %v301 = vpack.c.b16 %v287, %v286
    %v302 = vpack.c.b16 %v289, %v288
    %v303 = vpack.c.b16 %v291, %v290
    %v304 = vpack.c.b16 %v293, %v292
    %v305 = vpack.c.b16 %v295, %v294
    %v306 = vpack.c.b16 %v297, %v296
    %v307 = vpack.c.b16 %v299, %v298
    %316 = vmatpush.bf16.msra.mxu0 %v307
    %317 = vmatpush.bf16.msra.mxu0 %v306
    %318 = vmatpush.bf16.msra.mxu0 %v305
    %319 = vmatpush.bf16.msra.mxu0 %v304
    %320 = vmatpush.bf16.msra.mxu0 %v303
    %321 = vmatpush.bf16.msra.mxu0 %v302
    %322 = vmatpush.bf16.msra.mxu0 %v301
    %323 = vmatpush.bf16.msra.mxu0 %v300
    %324 = vmatmul.bf16.gmra.mxu0 %v266
    %v325 = vpop.f32.mrf.mxu0
    %v326 = vadd.f32 %v102, %v325
    %v327 = vpop.f32.mrf.mxu0
    %328 = vdwg.mxu0
    %v329 = vxor.u32 %v326, 2147483648
    %v330 = vmul.f32 %v329, 1.442695
    %v331 = vpow.pop %v330
    %v332 = vadd.f32 %v331, 1.0
    %v333 = vrcp.pop %v332
    %v334 = vmul.f32 %v332, %v333
    %v335 = vsub.f32 1.0, %v334
    %v336 = vmul.f32 %v333, %v335
    %v337 = vadd.f32 %v333, %v336
    %vm338 = vweird.f32 %v332
    %vm339 = vweird.f32 %v333
    %vm340 = vmor %vm338, %vm339
    %v341 = vsel %vm340, %v333, %v337
    %v342 = vand.u32 2147483647, %v332
    %vm343 = vcmp.eq.f32.partialorder %v342, 8.507059e+37
    %v344 = vand.u32 %v332, 2147483648
    %v345 = vor.u32 1.1754944e-38, %v344
    %v346 = vsel %vm343, %v345, %v341
    %v347 = vmul.f32 1.0, %v346
    %v348 = vunpack.c.l.bf16 %v112
    %v349 = vunpack.c.l.bf16 %v113
    %v350 = vunpack.c.l.bf16 %v114
    %v351 = vunpack.c.l.bf16 %v115
    %v352 = vmul.f32 %v347, %v167
    %v357 = vrot.slane %v349, 7
    %v358 = vsel %vm258, %v357, %v348
    %v359 = vrot.slane %v350, 6
    %v360 = vsel %vm261, %v359, %v358
    %v361 = vrot.slane %v351, 5
    %v362 = vsel %vm264, %v361, %v360
    %363 = vrot.lane.b32.xlu0 %v362, 32
    %v364 = vpop.permute.xlu0 %363
    %v366 = vmul.f32 %v347, %v364
    %368 = vrot.lane.b32.xlu0 %v366, 96
    %v369 = vpop.permute.xlu0 %368
    %v371 = vadd.f32 %v352, %v369
    %373 = vrot.lane.b32.xlu0 %v326, 96
    %v374 = vpop.permute.xlu0 %373
    %v376 = vmul.f32 %v347, %v374
    %378 = vrot.lane.b32.xlu0 %v376, 64
    %v379 = vpop.permute.xlu0 %378
    %v381 = vadd.f32 %v371, %v379
    %vm382 = vcmask 257024
    %v383 = vsel %vm382, %v381, 0.0
    %384 = vadd.xlane.f32.xlu0 %v383
    %v385 = vpop.xlane.xlu0 %384
    %v386 = vmul.f32 %v385, 0.03125
    %v387 = vsub.f32 %v381, %v386
    %v388 = vmul.f32 %v387, %v387
    %v389 = vsel %vm382, %v388, 0.0
    %390 = vadd.xlane.f32.xlu0 %v389
    %v391 = vpop.xlane.xlu0 %390
    %v392 = vmul.f32 %v391, 0.03125
    %v393 = vadd.f32 %v392, 1e-05
    %v394 = vrsqrt.pop %v393
    %v395 = vmul.f32 %v394, %v393
    %v396 = vmul.f32 %v395, %v394
    %v397 = vmul.f32 0.5, %v396
    %v398 = vsub.f32 1.5, %v397
    %v399 = vmul.f32 %v394, %v398
    %vm400 = vweird.f32 %v393
    %vm401 = vweird.f32 %v394
    %vm402 = vmor %vm400, %vm401
    %v403 = vsel %vm402, %v394, %v399
    %v404 = vmul.f32 %v387, %v403
    %v405 = vmul.f32 %v404, %v106
    %v406 = vadd.f32 %v405, %v110
    %v407 = vld [vmem:[%s1] sm:$0x1]
    %v408 = vld [vmem:[%s1 + $0x8] sm:$0x1]
    %v409 = vld [vmem:[%s1 + $0x10] sm:$0x1]
    %v410 = vld [vmem:[%s1 + $0x18] sm:$0x1]
    %v411 = vsub.f32 %v406, %v167
    %413 = vset.pattern.permute.xlu0 0
    %414 = vperm.xlu0 %413, %v407
    %v415 = vpop.permute.xlu0 %414
    %418 = vset.pattern.permute.xlu0 0
    %419 = vperm.xlu0 %418, %v408
    %v420 = vpop.permute.xlu0 %419
    %423 = vset.pattern.permute.xlu0 0
    %424 = vperm.xlu0 %423, %v409
    %v425 = vpop.permute.xlu0 %424
    %428 = vset.pattern.permute.xlu0 0
    %429 = vperm.xlu0 %428, %v410
    %v430 = vpop.permute.xlu0 %429
    %v433 = vrot.slane %v411, 1
    %v434 = vrot.slane %v411, 2
    %v435 = vrot.slane %v411, 3
    %v440 = vmul.f32 %v415, %v411
    %v441 = vmul.f32 %v420, %v433
    %v442 = vmul.f32 %v425, %v434
    %v443 = vmul.f32 %v430, %v435
    %v448 = vrot.slane %v441, 7
    %v449 = vsel %vm258, %v448, %v440
    %v450 = vrot.slane %v442, 6
    %v451 = vsel %vm261, %v450, %v449
    %v452 = vrot.slane %v443, 5
    %v453 = vsel %vm264, %v452, %v451
    %v455 = vadd.f32 %v167, %v453
    %v457 = vrot.slane %v455, 1
    %v458 = vrot.slane %v455, 2
    %v459 = vrot.slane %v455, 3
    %vm463 = vcmask 253952
    %464 = vst.msk [vmem:[#allocation8] sm:$0x1] %vm463, %v455
    %465 = vst.msk [vmem:[#allocation8 + $0x8] sm:$0x1] %vm463, %v457
    %466 = vst.msk [vmem:[#allocation8 + $0x10] sm:$0x1] %vm463, %v458
    %467 = vst.msk [vmem:[#allocation8 + $0x18] sm:$0x1] %vm463, %v459
    %v468 = vpack.c.bf16 %v455, %v455
    %v470 = vsel %vm141, %v468, 0
    %472 = vmatpush.bf16.msra.mxu0 0
    %473 = vmatpush.bf16.msra.mxu0 0
    %474 = vmatpush.bf16.msra.mxu0 0
    %475 = vmatpush.bf16.msra.mxu0 0
    %476 = vmatpush.bf16.msra.mxu0 0
    %477 = vmatpush.bf16.msra.mxu0 0
    %478 = vmatpush.bf16.msra.mxu0 %v178
    %479 = vmatpush.bf16.msra.mxu0 %v177
    %480 = vmatmul.bf16.gmra.mxu0 %v470
    %v481 = vpop.f32.mrf.mxu0
    %v482 = vadd.f32 0.0, %v481
    %v483 = vpop.f32.mrf.mxu0
    %484 = vdwg.mxu0
    %v486 = vrot.slane %v482, 7
    %v487 = vrot.slane %v482, 1
    %v488 = vrot.slane %v482, 2
    %v493 = vadd.f32 %v158, %v486
    %v494 = vadd.f32 %v160, %v482
    %v495 = vadd.f32 %v163, %v487
    %v496 = vadd.f32 %v165, %v488
    %v497 = vmul.f32 %v493, %v493
    %v498 = vmul.f32 %v494, %v494
    %v499 = vmul.f32 %v495, %v495
    %v500 = vmul.f32 %v496, %v496
    %v501 = vmul.f32 %v493, %v497
    %v502 = vmul.f32 %v494, %v498
    %v503 = vmul.f32 %v495, %v499
    %v504 = vmul.f32 %v496, %v500
    %v505 = vmul.f32 %v501, 0.044715
    %v506 = vmul.f32 %v502, 0.044715
    %v507 = vmul.f32 %v503, 0.044715
    %v508 = vmul.f32 %v504, 0.044715
    %v509 = vadd.f32 %v493, %v505
    %v510 = vadd.f32 %v494, %v506
    %v511 = vadd.f32 %v495, %v507
    %v512 = vadd.f32 %v496, %v508
    %v513 = vmul.f32 %v509, 0.7978846
    %v514 = vmul.f32 %v510, 0.7978846
    %v515 = vmul.f32 %v511, 0.7978846
    %v516 = vmul.f32 %v512, 0.7978846
    %v517 = vtanh.pop %v513
    %v518 = vtanh.pop %v514
    %v519 = vtanh.pop %v515
    %v520 = vtanh.pop %v516
    %v521 = vadd.f32 %v517, 1.0
    %v522 = vadd.f32 %v518, 1.0
    %v523 = vadd.f32 %v519, 1.0
    %v524 = vadd.f32 %v520, 1.0
    %v525 = vmul.f32 %v521, 0.5
    %v526 = vmul.f32 %v522, 0.5
    %v527 = vmul.f32 %v523, 0.5
    %v528 = vmul.f32 %v524, 0.5
    %v529 = vmul.f32 %v493, %v525
    %v530 = vmul.f32 %v494, %v526
    %v531 = vmul.f32 %v495, %v527
    %v532 = vmul.f32 %v496, %v528
    %v533 = vpack.c.bf16 %v529, %v529
    %v534 = vpack.c.bf16 %v530, %v530
    %v535 = vpack.c.bf16 %v531, %v531
    %v536 = vpack.c.bf16 %v532, %v532
    %v541 = vunpack.c.l.b16 %v533
    %v542 = vunpack.c.l.b16 %v534
    %v543 = vunpack.c.l.b16 %v535
    %v544 = vunpack.c.l.b16 %v536
    %v545 = vrot.slane %v541, 1
    %v546 = vsel %vm258, %v542, %v545
    %v547 = vrot.slane %v543, 7
    %v548 = vsel %vm261, %v547, %v546
    %v549 = vrot.slane %v544, 6
    %v550 = vsel %vm264, %v549, %v548
    %v551 = vpack.c.b16 %v550, %v550
    %553 = vmatpush.bf16.msra.mxu0 %v307
    %554 = vmatpush.bf16.msra.mxu0 %v306
    %555 = vmatpush.bf16.msra.mxu0 %v305
    %556 = vmatpush.bf16.msra.mxu0 %v304
    %557 = vmatpush.bf16.msra.mxu0 %v303
    %558 = vmatpush.bf16.msra.mxu0 %v302
    %559 = vmatpush.bf16.msra.mxu0 %v301
    %560 = vmatpush.bf16.msra.mxu0 %v300
    %561 = vmatmul.bf16.gmra.mxu0 %v551
    %v562 = vpop.f32.mrf.mxu0
    %v563 = vadd.f32 %v102, %v562
    %v564 = vpop.f32.mrf.mxu0
    %565 = vdwg.mxu0
    %v566 = vxor.u32 %v563, 2147483648
    %v567 = vmul.f32 %v566, 1.442695
    %v568 = vpow.pop %v567
    %v569 = vadd.f32 %v568, 1.0
    %v570 = vrcp.pop %v569
    %v571 = vmul.f32 %v569, %v570
    %v572 = vsub.f32 1.0, %v571
    %v573 = vmul.f32 %v570, %v572
    %v574 = vadd.f32 %v570, %v573
    %vm575 = vweird.f32 %v569
    %vm576 = vweird.f32 %v570
    %vm577 = vmor %vm575, %vm576
    %v578 = vsel %vm577, %v570, %v574
    %v579 = vand.u32 2147483647, %v569
    %vm580 = vcmp.eq.f32.partialorder %v579, 8.507059e+37
    %v581 = vand.u32 %v569, 2147483648
    %v582 = vor.u32 1.1754944e-38, %v581
    %v583 = vsel %vm580, %v582, %v578
    %v584 = vmul.f32 1.0, %v583
    %v585 = vmul.f32 %v584, %v455
    %v586 = vrot.slane %v348, 1
    %v587 = vsel %vm258, %v349, %v586
    %v588 = vrot.slane %v350, 7
    %v589 = vsel %vm261, %v588, %v587
    %v590 = vrot.slane %v351, 6
    %v591 = vsel %vm264, %v590, %v589
    %592 = vrot.lane.b32.xlu0 %v591, 32
    %v593 = vpop.permute.xlu0 %592
    %v595 = vmul.f32 %v584, %v593
    %597 = vrot.lane.b32.xlu0 %v595, 96
    %v598 = vpop.permute.xlu0 %597
    %v600 = vadd.f32 %v585, %v598
    %602 = vrot.lane.b32.xlu0 %v563, 96
    %v603 = vpop.permute.xlu0 %602
    %v605 = vmul.f32 %v584, %v603
    %607 = vrot.lane.b32.xlu0 %v605, 64
    %v608 = vpop.permute.xlu0 %607
    %v610 = vadd.f32 %v600, %v608
    %v611 = vsel %vm382, %v610, 0.0
    %612 = vadd.xlane.f32.xlu0 %v611
    %v613 = vpop.xlane.xlu0 %612
    %v614 = vmul.f32 %v613, 0.03125
    %v615 = vsub.f32 %v610, %v614
    %v616 = vmul.f32 %v615, %v615
    %v617 = vsel %vm382, %v616, 0.0
    %618 = vadd.xlane.f32.xlu0 %v617
    %v619 = vpop.xlane.xlu0 %618
    %v620 = vmul.f32 %v619, 0.03125
    %v621 = vadd.f32 %v620, 1e-05
    %v622 = vrsqrt.pop %v621
    %v623 = vmul.f32 %v622, %v621
    %v624 = vmul.f32 %v623, %v622
    %v625 = vmul.f32 0.5, %v624
    %v626 = vsub.f32 1.5, %v625
    %v627 = vmul.f32 %v622, %v626
    %vm628 = vweird.f32 %v621
    %vm629 = vweird.f32 %v622
    %vm630 = vmor %vm628, %vm629
    %v631 = vsel %vm630, %v622, %v627
    %v632 = vmul.f32 %v615, %v631
    %v633 = vmul.f32 %v632, %v106
    %v634 = vadd.f32 %v633, %v110
    %v635 = vld [vmem:[%s1 + $0x1] sm:$0x1]
    %v636 = vld [vmem:[%s1 + $0x9] sm:$0x1]
    %v637 = vld [vmem:[%s1 + $0x11] sm:$0x1]
    %v638 = vld [vmem:[%s1 + $0x19] sm:$0x1]
    %v639 = vsub.f32 %v634, %v455
    %641 = vset.pattern.permute.xlu0 0
    %642 = vperm.xlu0 %641, %v635
    %v643 = vpop.permute.xlu0 %642
    %646 = vset.pattern.permute.xlu0 0
    %647 = vperm.xlu0 %646, %v636
    %v648 = vpop.permute.xlu0 %647
    %651 = vset.pattern.permute.xlu0 0
    %652 = vperm.xlu0 %651, %v637
    %v653 = vpop.permute.xlu0 %652
    %656 = vset.pattern.permute.xlu0 0
    %657 = vperm.xlu0 %656, %v638
    %v658 = vpop.permute.xlu0 %657
    %v661 = vrot.slane %v639, 1
    %v662 = vrot.slane %v639, 2
    %v663 = vrot.slane %v639, 3
    %v668 = vmul.f32 %v643, %v639
    %v669 = vmul.f32 %v648, %v661
    %v670 = vmul.f32 %v653, %v662
    %v671 = vmul.f32 %v658, %v663
    %v676 = vrot.slane %v669, 7
    %v677 = vsel %vm258, %v676, %v668
    %v678 = vrot.slane %v670, 6
    %v679 = vsel %vm261, %v678, %v677
    %v680 = vrot.slane %v671, 5
    %v681 = vsel %vm264, %v680, %v679
    %v683 = vadd.f32 %v455, %v681
    %v685 = vrot.slane %v683, 1
    %v686 = vrot.slane %v683, 2
    %v687 = vrot.slane %v683, 3
    %691 = vst.msk [vmem:[#allocation8 + $0x1] sm:$0x1] %vm463, %v683
    %692 = vst.msk [vmem:[#allocation8 + $0x9] sm:$0x1] %vm463, %v685
    %693 = vst.msk [vmem:[#allocation8 + $0x11] sm:$0x1] %vm463, %v686
    %694 = vst.msk [vmem:[#allocation8 + $0x19] sm:$0x1] %vm463, %v687
    %v695 = vpack.c.bf16 %v683, %v683
    %v697 = vsel %vm141, %v695, 0
    %699 = vmatpush.bf16.msra.mxu0 0
    %700 = vmatpush.bf16.msra.mxu0 0
    %701 = vmatpush.bf16.msra.mxu0 0
    %702 = vmatpush.bf16.msra.mxu0 0
    %703 = vmatpush.bf16.msra.mxu0 0
    %704 = vmatpush.bf16.msra.mxu0 0
    %705 = vmatpush.bf16.msra.mxu0 %v178
    %706 = vmatpush.bf16.msra.mxu0 %v177
    %707 = vmatmul.bf16.gmra.mxu0 %v697
    %v708 = vpop.f32.mrf.mxu0
    %v709 = vadd.f32 0.0, %v708
    %v710 = vpop.f32.mrf.mxu0
    %711 = vdwg.mxu0
    %v713 = vrot.slane %v709, 6
    %v714 = vrot.slane %v709, 7
    %v715 = vrot.slane %v709, 1
    %v720 = vadd.f32 %v158, %v713
    %v721 = vadd.f32 %v160, %v714
    %v722 = vadd.f32 %v163, %v709
    %v723 = vadd.f32 %v165, %v715
    %v724 = vmul.f32 %v720, %v720
    %v725 = vmul.f32 %v721, %v721
    %v726 = vmul.f32 %v722, %v722
    %v727 = vmul.f32 %v723, %v723
    %v728 = vmul.f32 %v720, %v724
    %v729 = vmul.f32 %v721, %v725
    %v730 = vmul.f32 %v722, %v726
    %v731 = vmul.f32 %v723, %v727
    %v732 = vmul.f32 %v728, 0.044715
    %v733 = vmul.f32 %v729, 0.044715
    %v734 = vmul.f32 %v730, 0.044715
    %v735 = vmul.f32 %v731, 0.044715
    %v736 = vadd.f32 %v720, %v732
    %v737 = vadd.f32 %v721, %v733
    %v738 = vadd.f32 %v722, %v734
    %v739 = vadd.f32 %v723, %v735
    %v740 = vmul.f32 %v736, 0.7978846
    %v741 = vmul.f32 %v737, 0.7978846
    %v742 = vmul.f32 %v738, 0.7978846
    %v743 = vmul.f32 %v739, 0.7978846
    %v744 = vtanh.pop %v740
    %v745 = vtanh.pop %v741
    %v746 = vtanh.pop %v742
    %v747 = vtanh.pop %v743
    %v748 = vadd.f32 %v744, 1.0
    %v749 = vadd.f32 %v745, 1.0
    %v750 = vadd.f32 %v746, 1.0
    %v751 = vadd.f32 %v747, 1.0
    %v752 = vmul.f32 %v748, 0.5
    %v753 = vmul.f32 %v749, 0.5
    %v754 = vmul.f32 %v750, 0.5
    %v755 = vmul.f32 %v751, 0.5
    %v756 = vmul.f32 %v720, %v752
    %v757 = vmul.f32 %v721, %v753
    %v758 = vmul.f32 %v722, %v754
    %v759 = vmul.f32 %v723, %v755
    %v760 = vpack.c.bf16 %v756, %v756
    %v761 = vpack.c.bf16 %v757, %v757
    %v762 = vpack.c.bf16 %v758, %v758
    %v763 = vpack.c.bf16 %v759, %v759
    %v768 = vunpack.c.l.b16 %v760
    %v769 = vunpack.c.l.b16 %v761
    %v770 = vunpack.c.l.b16 %v762
    %v771 = vunpack.c.l.b16 %v763
    %v772 = vrot.slane %v768, 2
    %v773 = vrot.slane %v769, 1
    %v774 = vsel %vm258, %v773, %v772
    %v775 = vsel %vm261, %v770, %v774
    %v776 = vrot.slane %v771, 7
    %v777 = vsel %vm264, %v776, %v775
    %v778 = vpack.c.b16 %v777, %v777
    %780 = vmatpush.bf16.msra.mxu0 %v307
    %781 = vmatpush.bf16.msra.mxu0 %v306
    %782 = vmatpush.bf16.msra.mxu0 %v305
    %783 = vmatpush.bf16.msra.mxu0 %v304
    %784 = vmatpush.bf16.msra.mxu0 %v303
    %785 = vmatpush.bf16.msra.mxu0 %v302
    %786 = vmatpush.bf16.msra.mxu0 %v301
    %787 = vmatpush.bf16.msra.mxu0 %v300
    %788 = vmatmul.bf16.gmra.mxu0 %v778
    %v789 = vpop.f32.mrf.mxu0
    %v790 = vadd.f32 %v102, %v789
    %v791 = vpop.f32.mrf.mxu0
    %792 = vdwg.mxu0
    %v793 = vxor.u32 %v790, 2147483648
    %v794 = vmul.f32 %v793, 1.442695
    %v795 = vpow.pop %v794
    %v796 = vadd.f32 %v795, 1.0
    %v797 = vrcp.pop %v796
    %v798 = vmul.f32 %v796, %v797
    %v799 = vsub.f32 1.0, %v798
    %v800 = vmul.f32 %v797, %v799
    %v801 = vadd.f32 %v797, %v800
    %vm802 = vweird.f32 %v796
    %vm803 = vweird.f32 %v797
    %vm804 = vmor %vm802, %vm803
    %v805 = vsel %vm804, %v797, %v801
    %v806 = vand.u32 2147483647, %v796
    %vm807 = vcmp.eq.f32.partialorder %v806, 8.507059e+37
    %v808 = vand.u32 %v796, 2147483648
    %v809 = vor.u32 1.1754944e-38, %v808
    %v810 = vsel %vm807, %v809, %v805
    %v811 = vmul.f32 1.0, %v810
    %v812 = vmul.f32 %v811, %v683
    %v813 = vrot.slane %v348, 2
    %v814 = vrot.slane %v349, 1
    %v815 = vsel %vm258, %v814, %v813
    %v816 = vsel %vm261, %v350, %v815
    %v817 = vrot.slane %v351, 7
    %v818 = vsel %vm264, %v817, %v816
    %819 = vrot.lane.b32.xlu0 %v818, 32
    %v820 = vpop.permute.xlu0 %819
    %v822 = vmul.f32 %v811, %v820
    %824 = vrot.lane.b32.xlu0 %v822, 96
    %v825 = vpop.permute.xlu0 %824
    %v827 = vadd.f32 %v812, %v825
    %829 = vrot.lane.b32.xlu0 %v790, 96
    %v830 = vpop.permute.xlu0 %829
    %v832 = vmul.f32 %v811, %v830
    %834 = vrot.lane.b32.xlu0 %v832, 64
    %v835 = vpop.permute.xlu0 %834
    %v837 = vadd.f32 %v827, %v835
    %v838 = vsel %vm382, %v837, 0.0
    %839 = vadd.xlane.f32.xlu0 %v838
    %v840 = vpop.xlane.xlu0 %839
    %v841 = vmul.f32 %v840, 0.03125
    %v842 = vsub.f32 %v837, %v841
    %v843 = vmul.f32 %v842, %v842
    %v844 = vsel %vm382, %v843, 0.0
    %845 = vadd.xlane.f32.xlu0 %v844
    %v846 = vpop.xlane.xlu0 %845
    %v847 = vmul.f32 %v846, 0.03125
    %v848 = vadd.f32 %v847, 1e-05
    %v849 = vrsqrt.pop %v848
    %v850 = vmul.f32 %v849, %v848
    %v851 = vmul.f32 %v850, %v849
    %v852 = vmul.f32 0.5, %v851
    %v853 = vsub.f32 1.5, %v852
    %v854 = vmul.f32 %v849, %v853
    %vm855 = vweird.f32 %v848
    %vm856 = vweird.f32 %v849
    %vm857 = vmor %vm855, %vm856
    %v858 = vsel %vm857, %v849, %v854
    %v859 = vmul.f32 %v842, %v858
    %v860 = vmul.f32 %v859, %v106
    %v861 = vadd.f32 %v860, %v110
    %v862 = vld [vmem:[%s1 + $0x2] sm:$0x1]
    %v863 = vld [vmem:[%s1 + $0xa] sm:$0x1]
    %v864 = vld [vmem:[%s1 + $0x12] sm:$0x1]
    %v865 = vld [vmem:[%s1 + $0x1a] sm:$0x1]
    %v866 = vsub.f32 %v861, %v683
    %868 = vset.pattern.permute.xlu0 0
    %869 = vperm.xlu0 %868, %v862
    %v870 = vpop.permute.xlu0 %869
    %873 = vset.pattern.permute.xlu0 0
    %874 = vperm.xlu0 %873, %v863
    %v875 = vpop.permute.xlu0 %874
    %878 = vset.pattern.permute.xlu0 0
    %879 = vperm.xlu0 %878, %v864
    %v880 = vpop.permute.xlu0 %879
    %883 = vset.pattern.permute.xlu0 0
    %884 = vperm.xlu0 %883, %v865
    %v885 = vpop.permute.xlu0 %884
    %v888 = vrot.slane %v866, 1
    %v889 = vrot.slane %v866, 2
    %v890 = vrot.slane %v866, 3
    %v895 = vmul.f32 %v870, %v866
    %v896 = vmul.f32 %v875, %v888
    %v897 = vmul.f32 %v880, %v889
    %v898 = vmul.f32 %v885, %v890
    %v903 = vrot.slane %v896, 7
    %v904 = vsel %vm258, %v903, %v895
    %v905 = vrot.slane %v897, 6
    %v906 = vsel %vm261, %v905, %v904
    %v907 = vrot.slane %v898, 5
    %v908 = vsel %vm264, %v907, %v906
    %v910 = vadd.f32 %v683, %v908
    %v912 = vrot.slane %v910, 1
    %v913 = vrot.slane %v910, 2
    %v914 = vrot.slane %v910, 3
    %918 = vst.msk [vmem:[#allocation8 + $0x2] sm:$0x1] %vm463, %v910
    %919 = vst.msk [vmem:[#allocation8 + $0xa] sm:$0x1] %vm463, %v912
    %920 = vst.msk [vmem:[#allocation8 + $0x12] sm:$0x1] %vm463, %v913
    %921 = vst.msk [vmem:[#allocation8 + $0x1a] sm:$0x1] %vm463, %v914
    %v922 = vpack.c.bf16 %v910, %v910
    %v924 = vsel %vm141, %v922, 0
    %926 = vmatpush.bf16.msra.mxu0 0
    %927 = vmatpush.bf16.msra.mxu0 0
    %928 = vmatpush.bf16.msra.mxu0 0
    %929 = vmatpush.bf16.msra.mxu0 0
    %930 = vmatpush.bf16.msra.mxu0 0
    %931 = vmatpush.bf16.msra.mxu0 0
    %932 = vmatpush.bf16.msra.mxu0 %v178
    %933 = vmatpush.bf16.msra.mxu0 %v177
    %934 = vmatmul.bf16.gmra.mxu0 %v924
    %v935 = vpop.f32.mrf.mxu0
    %v936 = vadd.f32 0.0, %v935
    %v937 = vpop.f32.mrf.mxu0
    %938 = vdwg.mxu0
    %v940 = vrot.slane %v936, 5
    %v941 = vrot.slane %v936, 6
    %v942 = vrot.slane %v936, 7
    %v947 = vadd.f32 %v158, %v940
    %v948 = vadd.f32 %v160, %v941
    %v949 = vadd.f32 %v163, %v942
    %v950 = vadd.f32 %v165, %v936
    %v951 = vmul.f32 %v947, %v947
    %v952 = vmul.f32 %v948, %v948
    %v953 = vmul.f32 %v949, %v949
    %v954 = vmul.f32 %v950, %v950
    %v955 = vmul.f32 %v947, %v951
    %v956 = vmul.f32 %v948, %v952
    %v957 = vmul.f32 %v949, %v953
    %v958 = vmul.f32 %v950, %v954
    %v959 = vmul.f32 %v955, 0.044715
    %v960 = vmul.f32 %v956, 0.044715
    %v961 = vmul.f32 %v957, 0.044715
    %v962 = vmul.f32 %v958, 0.044715
    %v963 = vadd.f32 %v947, %v959
    %v964 = vadd.f32 %v948, %v960
    %v965 = vadd.f32 %v949, %v961
    %v966 = vadd.f32 %v950, %v962
    %v967 = vmul.f32 %v963, 0.7978846
    %v968 = vmul.f32 %v964, 0.7978846
    %v969 = vmul.f32 %v965, 0.7978846
    %v970 = vmul.f32 %v966, 0.7978846
    %v971 = vtanh.pop %v967
    %v972 = vtanh.pop %v968
    %v973 = vtanh.pop %v969
    %v974 = vtanh.pop %v970
    %v975 = vadd.f32 %v971, 1.0
    %v976 = vadd.f32 %v972, 1.0
    %v977 = vadd.f32 %v973, 1.0
    %v978 = vadd.f32 %v974, 1.0
    %v979 = vmul.f32 %v975, 0.5
    %v980 = vmul.f32 %v976, 0.5
    %v981 = vmul.f32 %v977, 0.5
    %v982 = vmul.f32 %v978, 0.5
    %v983 = vmul.f32 %v947, %v979
    %v984 = vmul.f32 %v948, %v980
    %v985 = vmul.f32 %v949, %v981
    %v986 = vmul.f32 %v950, %v982
    %v987 = vpack.c.bf16 %v983, %v983
    %v988 = vpack.c.bf16 %v984, %v984
    %v989 = vpack.c.bf16 %v985, %v985
    %v990 = vpack.c.bf16 %v986, %v986
    %v995 = vunpack.c.l.b16 %v987
    %v996 = vunpack.c.l.b16 %v988
    %v997 = vunpack.c.l.b16 %v989
    %v998 = vunpack.c.l.b16 %v990
    %v999 = vrot.slane %v995, 3
    %v1000 = vrot.slane %v996, 2
    %v1001 = vsel %vm258, %v1000, %v999
    %v1002 = vrot.slane %v997, 1
    %v1003 = vsel %vm261, %v1002, %v1001
    %v1004 = vsel %vm264, %v998, %v1003
    %v1005 = vpack.c.b16 %v1004, %v1004
    %1007 = vmatpush.bf16.msra.mxu0 %v307
    %1008 = vmatpush.bf16.msra.mxu0 %v306
    %1009 = vmatpush.bf16.msra.mxu0 %v305
    %1010 = vmatpush.bf16.msra.mxu0 %v304
    %1011 = vmatpush.bf16.msra.mxu0 %v303
    %1012 = vmatpush.bf16.msra.mxu0 %v302
    %1013 = vmatpush.bf16.msra.mxu0 %v301
    %1014 = vmatpush.bf16.msra.mxu0 %v300
    %1015 = vmatmul.bf16.gmra.mxu0 %v1005
    %v1016 = vpop.f32.mrf.mxu0
    %v1017 = vadd.f32 %v102, %v1016
    %v1018 = vpop.f32.mrf.mxu0
    %1019 = vdwg.mxu0
    %v1020 = vxor.u32 %v1017, 2147483648
    %v1021 = vmul.f32 %v1020, 1.442695
    %v1022 = vpow.pop %v1021
    %v1023 = vadd.f32 %v1022, 1.0
    %v1024 = vrcp.pop %v1023
    %v1025 = vmul.f32 %v1023, %v1024
    %v1026 = vsub.f32 1.0, %v1025
    %v1027 = vmul.f32 %v1024, %v1026
    %v1028 = vadd.f32 %v1024, %v1027
    %vm1029 = vweird.f32 %v1023
    %vm1030 = vweird.f32 %v1024
    %vm1031 = vmor %vm1029, %vm1030
    %v1032 = vsel %vm1031, %v1024, %v1028
    %v1033 = vand.u32 2147483647, %v1023
    %vm1034 = vcmp.eq.f32.partialorder %v1033, 8.507059e+37
    %v1035 = vand.u32 %v1023, 2147483648
    %v1036 = vor.u32 1.1754944e-38, %v1035
    %v1037 = vsel %vm1034, %v1036, %v1032
    %v1038 = vmul.f32 1.0, %v1037
    %v1039 = vmul.f32 %v1038, %v910
    %v1040 = vrot.slane %v348, 3
    %v1041 = vrot.slane %v349, 2
    %v1042 = vsel %vm258, %v1041, %v1040
    %v1043 = vrot.slane %v350, 1
    %v1044 = vsel %vm261, %v1043, %v1042
    %v1045 = vsel %vm264, %v351, %v1044
    %1046 = vrot.lane.b32.xlu0 %v1045, 32
    %v1047 = vpop.permute.xlu0 %1046
    %v1049 = vmul.f32 %v1038, %v1047
    %1051 = vrot.lane.b32.xlu0 %v1049, 96
    %v1052 = vpop.permute.xlu0 %1051
    %v1054 = vadd.f32 %v1039, %v1052
    %1056 = vrot.lane.b32.xlu0 %v1017, 96
    %v1057 = vpop.permute.xlu0 %1056
    %v1059 = vmul.f32 %v1038, %v1057
    %1061 = vrot.lane.b32.xlu0 %v1059, 64
    %v1062 = vpop.permute.xlu0 %1061
    %v1064 = vadd.f32 %v1054, %v1062
    %v1065 = vsel %vm382, %v1064, 0.0
    %1066 = vadd.xlane.f32.xlu0 %v1065
    %v1067 = vpop.xlane.xlu0 %1066
    %v1068 = vmul.f32 %v1067, 0.03125
    %v1069 = vsub.f32 %v1064, %v1068
    %v1070 = vmul.f32 %v1069, %v1069
    %v1071 = vsel %vm382, %v1070, 0.0
    %1072 = vadd.xlane.f32.xlu0 %v1071
    %v1073 = vpop.xlane.xlu0 %1072
    %v1074 = vmul.f32 %v1073, 0.03125
    %v1075 = vadd.f32 %v1074, 1e-05
    %v1076 = vrsqrt.pop %v1075
    %v1077 = vmul.f32 %v1076, %v1075
    %v1078 = vmul.f32 %v1077, %v1076
    %v1079 = vmul.f32 0.5, %v1078
    %v1080 = vsub.f32 1.5, %v1079
    %v1081 = vmul.f32 %v1076, %v1080
    %vm1082 = vweird.f32 %v1075
    %vm1083 = vweird.f32 %v1076
    %vm1084 = vmor %vm1082, %vm1083
    %v1085 = vsel %vm1084, %v1076, %v1081
    %v1086 = vmul.f32 %v1069, %v1085
    %v1087 = vmul.f32 %v1086, %v106
    %v1088 = vadd.f32 %v1087, %v110
    %v1089 = vld [vmem:[%s1 + $0x3] sm:$0x1]
    %v1090 = vld [vmem:[%s1 + $0xb] sm:$0x1]
    %v1091 = vld [vmem:[%s1 + $0x13] sm:$0x1]
    %v1092 = vld [vmem:[%s1 + $0x1b] sm:$0x1]
    %v1093 = vsub.f32 %v1088, %v910
    %1095 = vset.pattern.permute.xlu0 0
    %1096 = vperm.xlu0 %1095, %v1089
    %v1097 = vpop.permute.xlu0 %1096
    %1100 = vset.pattern.permute.xlu0 0
    %1101 = vperm.xlu0 %1100, %v1090
    %v1102 = vpop.permute.xlu0 %1101
    %1105 = vset.pattern.permute.xlu0 0
    %1106 = vperm.xlu0 %1105, %v1091
    %v1107 = vpop.permute.xlu0 %1106
    %1110 = vset.pattern.permute.xlu0 0
    %1111 = vperm.xlu0 %1110, %v1092
    %v1112 = vpop.permute.xlu0 %1111
    %v1115 = vrot.slane %v1093, 1
    %v1116 = vrot.slane %v1093, 2
    %v1117 = vrot.slane %v1093, 3
    %v1122 = vmul.f32 %v1097, %v1093
    %v1123 = vmul.f32 %v1102, %v1115
    %v1124 = vmul.f32 %v1107, %v1116
    %v1125 = vmul.f32 %v1112, %v1117
    %v1130 = vrot.slane %v1123, 7
    %v1131 = vsel %vm258, %v1130, %v1122
    %v1132 = vrot.slane %v1124, 6
    %v1133 = vsel %vm261, %v1132, %v1131
    %v1134 = vrot.slane %v1125, 5
    %v1135 = vsel %vm264, %v1134, %v1133
    %v1137 = vadd.f32 %v910, %v1135
    %v1139 = vrot.slane %v1137, 1
    %v1140 = vrot.slane %v1137, 2
    %v1141 = vrot.slane %v1137, 3
    %1145 = vst.msk [vmem:[#allocation8 + $0x3] sm:$0x1] %vm463, %v1137
    %1146 = vst.msk [vmem:[#allocation8 + $0xb] sm:$0x1] %vm463, %v1139
    %1147 = vst.msk [vmem:[#allocation8 + $0x13] sm:$0x1] %vm463, %v1140
    %1148 = vst.msk [vmem:[#allocation8 + $0x1b] sm:$0x1] %vm463, %v1141
    %v1149 = vpack.c.bf16 %v1137, %v1137
    %v1151 = vsel %vm141, %v1149, 0
    %1153 = vmatpush.bf16.msra.mxu0 0
    %1154 = vmatpush.bf16.msra.mxu0 0
    %1155 = vmatpush.bf16.msra.mxu0 0
    %1156 = vmatpush.bf16.msra.mxu0 0
    %1157 = vmatpush.bf16.msra.mxu0 0
    %1158 = vmatpush.bf16.msra.mxu0 0
    %1159 = vmatpush.bf16.msra.mxu0 %v178
    %1160 = vmatpush.bf16.msra.mxu0 %v177
    %1161 = vmatmul.bf16.gmra.mxu0 %v1151
    %v1162 = vpop.f32.mrf.mxu0
    %v1163 = vadd.f32 0.0, %v1162
    %v1164 = vpop.f32.mrf.mxu0
    %1165 = vdwg.mxu0
    %v1167 = vrot.slane %v1163, 4
    %v1168 = vrot.slane %v1163, 5
    %v1169 = vrot.slane %v1163, 6
    %v1170 = vrot.slane %v1163, 7
    %v1175 = vadd.f32 %v158, %v1167
    %v1176 = vadd.f32 %v160, %v1168
    %v1177 = vadd.f32 %v163, %v1169
    %v1178 = vadd.f32 %v165, %v1170
    %v1179 = vmul.f32 %v1175, %v1175
    %v1180 = vmul.f32 %v1176, %v1176
    %v1181 = vmul.f32 %v1177, %v1177
    %v1182 = vmul.f32 %v1178, %v1178
    %v1183 = vmul.f32 %v1175, %v1179
    %v1184 = vmul.f32 %v1176, %v1180
    %v1185 = vmul.f32 %v1177, %v1181
    %v1186 = vmul.f32 %v1178, %v1182
    %v1187 = vmul.f32 %v1183, 0.044715
    %v1188 = vmul.f32 %v1184, 0.044715
    %v1189 = vmul.f32 %v1185, 0.044715
    %v1190 = vmul.f32 %v1186, 0.044715
    %v1191 = vadd.f32 %v1175, %v1187
    %v1192 = vadd.f32 %v1176, %v1188
    %v1193 = vadd.f32 %v1177, %v1189
    %v1194 = vadd.f32 %v1178, %v1190
    %v1195 = vmul.f32 %v1191, 0.7978846
    %v1196 = vmul.f32 %v1192, 0.7978846
    %v1197 = vmul.f32 %v1193, 0.7978846
    %v1198 = vmul.f32 %v1194, 0.7978846
    %v1199 = vtanh.pop %v1195
    %v1200 = vtanh.pop %v1196
    %v1201 = vtanh.pop %v1197
    %v1202 = vtanh.pop %v1198
    %v1203 = vadd.f32 %v1199, 1.0
    %v1204 = vadd.f32 %v1200, 1.0
    %v1205 = vadd.f32 %v1201, 1.0
    %v1206 = vadd.f32 %v1202, 1.0
    %v1207 = vmul.f32 %v1203, 0.5
    %v1208 = vmul.f32 %v1204, 0.5
    %v1209 = vmul.f32 %v1205, 0.5
    %v1210 = vmul.f32 %v1206, 0.5
    %v1211 = vmul.f32 %v1175, %v1207
    %v1212 = vmul.f32 %v1176, %v1208
    %v1213 = vmul.f32 %v1177, %v1209
    %v1214 = vmul.f32 %v1178, %v1210
    %v1215 = vpack.c.bf16 %v1211, %v1211
    %v1216 = vpack.c.bf16 %v1212, %v1212
    %v1217 = vpack.c.bf16 %v1213, %v1213
    %v1218 = vpack.c.bf16 %v1214, %v1214
    %v1223 = vunpack.c.l.b16 %v1215
    %v1224 = vunpack.c.l.b16 %v1216
    %v1225 = vunpack.c.l.b16 %v1217
    %v1226 = vunpack.c.l.b16 %v1218
    %v1227 = vrot.slane %v1223, 4
    %v1228 = vrot.slane %v1224, 3
    %v1229 = vsel %vm258, %v1228, %v1227
    %v1230 = vrot.slane %v1225, 2
    %v1231 = vsel %vm261, %v1230, %v1229
    %v1232 = vrot.slane %v1226, 1
    %v1233 = vsel %vm264, %v1232, %v1231
    %v1234 = vpack.c.b16 %v1233, %v1233
    %1236 = vmatpush.bf16.msra.mxu0 %v307
    %1237 = vmatpush.bf16.msra.mxu0 %v306
    %1238 = vmatpush.bf16.msra.mxu0 %v305
    %1239 = vmatpush.bf16.msra.mxu0 %v304
    %1240 = vmatpush.bf16.msra.mxu0 %v303
    %1241 = vmatpush.bf16.msra.mxu0 %v302
    %1242 = vmatpush.bf16.msra.mxu0 %v301
    %1243 = vmatpush.bf16.msra.mxu0 %v300
    %1244 = vmatmul.bf16.gmra.mxu0 %v1234
    %v1245 = vpop.f32.mrf.mxu0
    %v1246 = vadd.f32 %v102, %v1245
    %v1247 = vpop.f32.mrf.mxu0
    %1248 = vdwg.mxu0
    %v1249 = vxor.u32 %v1246, 2147483648
    %v1250 = vmul.f32 %v1249, 1.442695
    %v1251 = vpow.pop %v1250
    %v1252 = vadd.f32 %v1251, 1.0
    %v1253 = vrcp.pop %v1252
    %v1254 = vmul.f32 %v1252, %v1253
    %v1255 = vsub.f32 1.0, %v1254
    %v1256 = vmul.f32 %v1253, %v1255
    %v1257 = vadd.f32 %v1253, %v1256
    %vm1258 = vweird.f32 %v1252
    %vm1259 = vweird.f32 %v1253
    %vm1260 = vmor %vm1258, %vm1259
    %v1261 = vsel %vm1260, %v1253, %v1257
    %v1262 = vand.u32 2147483647, %v1252
    %vm1263 = vcmp.eq.f32.partialorder %v1262, 8.507059e+37
    %v1264 = vand.u32 %v1252, 2147483648
    %v1265 = vor.u32 1.1754944e-38, %v1264
    %v1266 = vsel %vm1263, %v1265, %v1261
    %v1267 = vmul.f32 1.0, %v1266
    %v1268 = vmul.f32 %v1267, %v1137
    %v1269 = vrot.slane %v348, 4
    %v1270 = vrot.slane %v349, 3
    %v1271 = vsel %vm258, %v1270, %v1269
    %v1272 = vrot.slane %v350, 2
    %v1273 = vsel %vm261, %v1272, %v1271
    %v1274 = vrot.slane %v351, 1
    %v1275 = vsel %vm264, %v1274, %v1273
    %1276 = vrot.lane.b32.xlu0 %v1275, 32
    %v1277 = vpop.permute.xlu0 %1276
    %v1279 = vmul.f32 %v1267, %v1277
    %1281 = vrot.lane.b32.xlu0 %v1279, 96
    %v1282 = vpop.permute.xlu0 %1281
    %v1284 = vadd.f32 %v1268, %v1282
    %1286 = vrot.lane.b32.xlu0 %v1246, 96
    %v1287 = vpop.permute.xlu0 %1286
    %v1289 = vmul.f32 %v1267, %v1287
    %1291 = vrot.lane.b32.xlu0 %v1289, 64
    %v1292 = vpop.permute.xlu0 %1291
    %v1294 = vadd.f32 %v1284, %v1292
    %v1295 = vsel %vm382, %v1294, 0.0
    %1296 = vadd.xlane.f32.xlu0 %v1295
    %v1297 = vpop.xlane.xlu0 %1296
    %v1298 = vmul.f32 %v1297, 0.03125
    %v1299 = vsub.f32 %v1294, %v1298
    %v1300 = vmul.f32 %v1299, %v1299
    %v1301 = vsel %vm382, %v1300, 0.0
    %1302 = vadd.xlane.f32.xlu0 %v1301
    %v1303 = vpop.xlane.xlu0 %1302
    %v1304 = vmul.f32 %v1303, 0.03125
    %v1305 = vadd.f32 %v1304, 1e-05
    %v1306 = vrsqrt.pop %v1305
    %v1307 = vmul.f32 %v1306, %v1305
    %v1308 = vmul.f32 %v1307, %v1306
    %v1309 = vmul.f32 0.5, %v1308
    %v1310 = vsub.f32 1.5, %v1309
    %v1311 = vmul.f32 %v1306, %v1310
    %vm1312 = vweird.f32 %v1305
    %vm1313 = vweird.f32 %v1306
    %vm1314 = vmor %vm1312, %vm1313
    %v1315 = vsel %vm1314, %v1306, %v1311
    %v1316 = vmul.f32 %v1299, %v1315
    %v1317 = vmul.f32 %v1316, %v106
    %v1318 = vadd.f32 %v1317, %v110
    %v1319 = vld [vmem:[%s1 + $0x4] sm:$0x1]
    %v1320 = vld [vmem:[%s1 + $0xc] sm:$0x1]
    %v1321 = vld [vmem:[%s1 + $0x14] sm:$0x1]
    %v1322 = vld [vmem:[%s1 + $0x1c] sm:$0x1]
    %v1323 = vsub.f32 %v1318, %v1137
    %1325 = vset.pattern.permute.xlu0 0
    %1326 = vperm.xlu0 %1325, %v1319
    %v1327 = vpop.permute.xlu0 %1326
    %1330 = vset.pattern.permute.xlu0 0
    %1331 = vperm.xlu0 %1330, %v1320
    %v1332 = vpop.permute.xlu0 %1331
    %1335 = vset.pattern.permute.xlu0 0
    %1336 = vperm.xlu0 %1335, %v1321
    %v1337 = vpop.permute.xlu0 %1336
    %1340 = vset.pattern.permute.xlu0 0
    %1341 = vperm.xlu0 %1340, %v1322
    %v1342 = vpop.permute.xlu0 %1341
    %v1345 = vrot.slane %v1323, 1
    %v1346 = vrot.slane %v1323, 2
    %v1347 = vrot.slane %v1323, 3
    %v1352 = vmul.f32 %v1327, %v1323
    %v1353 = vmul.f32 %v1332, %v1345
    %v1354 = vmul.f32 %v1337, %v1346
    %v1355 = vmul.f32 %v1342, %v1347
    %v1360 = vrot.slane %v1353, 7
    %v1361 = vsel %vm258, %v1360, %v1352
    %v1362 = vrot.slane %v1354, 6
    %v1363 = vsel %vm261, %v1362, %v1361
    %v1364 = vrot.slane %v1355, 5
    %v1365 = vsel %vm264, %v1364, %v1363
    %v1367 = vadd.f32 %v1137, %v1365
    %v1369 = vrot.slane %v1367, 1
    %v1370 = vrot.slane %v1367, 2
    %v1371 = vrot.slane %v1367, 3
    %1375 = vst.msk [vmem:[#allocation8 + $0x4] sm:$0x1] %vm463, %v1367
    %1376 = vst.msk [vmem:[#allocation8 + $0xc] sm:$0x1] %vm463, %v1369
    %1377 = vst.msk [vmem:[#allocation8 + $0x14] sm:$0x1] %vm463, %v1370
    %1378 = vst.msk [vmem:[#allocation8 + $0x1c] sm:$0x1] %vm463, %v1371
    %v1379 = vpack.c.bf16 %v1367, %v1367
    %v1381 = vsel %vm141, %v1379, 0
    %1383 = vmatpush.bf16.msra.mxu0 0
    %1384 = vmatpush.bf16.msra.mxu0 0
    %1385 = vmatpush.bf16.msra.mxu0 0
    %1386 = vmatpush.bf16.msra.mxu0 0
    %1387 = vmatpush.bf16.msra.mxu0 0
    %1388 = vmatpush.bf16.msra.mxu0 0
    %1389 = vmatpush.bf16.msra.mxu0 %v178
    %1390 = vmatpush.bf16.msra.mxu0 %v177
    %1391 = vmatmul.bf16.gmra.mxu0 %v1381
    %v1392 = vpop.f32.mrf.mxu0
    %v1393 = vadd.f32 0.0, %v1392
    %v1394 = vpop.f32.mrf.mxu0
    %1395 = vdwg.mxu0
    %v1397 = vrot.slane %v1393, 3
    %v1398 = vrot.slane %v1393, 4
    %v1399 = vrot.slane %v1393, 5
    %v1400 = vrot.slane %v1393, 6
    %v1405 = vadd.f32 %v158, %v1397
    %v1406 = vadd.f32 %v160, %v1398
    %v1407 = vadd.f32 %v163, %v1399
    %v1408 = vadd.f32 %v165, %v1400
    %v1409 = vmul.f32 %v1405, %v1405
    %v1410 = vmul.f32 %v1406, %v1406
    %v1411 = vmul.f32 %v1407, %v1407
    %v1412 = vmul.f32 %v1408, %v1408
    %v1413 = vmul.f32 %v1405, %v1409
    %v1414 = vmul.f32 %v1406, %v1410
    %v1415 = vmul.f32 %v1407, %v1411
    %v1416 = vmul.f32 %v1408, %v1412
    %v1417 = vmul.f32 %v1413, 0.044715
    %v1418 = vmul.f32 %v1414, 0.044715
    %v1419 = vmul.f32 %v1415, 0.044715
    %v1420 = vmul.f32 %v1416, 0.044715
    %v1421 = vadd.f32 %v1405, %v1417
    %v1422 = vadd.f32 %v1406, %v1418
    %v1423 = vadd.f32 %v1407, %v1419
    %v1424 = vadd.f32 %v1408, %v1420
    %v1425 = vmul.f32 %v1421, 0.7978846
    %v1426 = vmul.f32 %v1422, 0.7978846
    %v1427 = vmul.f32 %v1423, 0.7978846
    %v1428 = vmul.f32 %v1424, 0.7978846
    %v1429 = vtanh.pop %v1425
    %v1430 = vtanh.pop %v1426
    %v1431 = vtanh.pop %v1427
    %v1432 = vtanh.pop %v1428
    %v1433 = vadd.f32 %v1429, 1.0
    %v1434 = vadd.f32 %v1430, 1.0
    %v1435 = vadd.f32 %v1431, 1.0
    %v1436 = vadd.f32 %v1432, 1.0
    %v1437 = vmul.f32 %v1433, 0.5
    %v1438 = vmul.f32 %v1434, 0.5
    %v1439 = vmul.f32 %v1435, 0.5
    %v1440 = vmul.f32 %v1436, 0.5
    %v1441 = vmul.f32 %v1405, %v1437
    %v1442 = vmul.f32 %v1406, %v1438
    %v1443 = vmul.f32 %v1407, %v1439
    %v1444 = vmul.f32 %v1408, %v1440
    %v1445 = vpack.c.bf16 %v1441, %v1441
    %v1446 = vpack.c.bf16 %v1442, %v1442
    %v1447 = vpack.c.bf16 %v1443, %v1443
    %v1448 = vpack.c.bf16 %v1444, %v1444
    %v1453 = vunpack.c.l.b16 %v1445
    %v1454 = vunpack.c.l.b16 %v1446
    %v1455 = vunpack.c.l.b16 %v1447
    %v1456 = vunpack.c.l.b16 %v1448
    %v1457 = vrot.slane %v1453, 5
    %v1458 = vrot.slane %v1454, 4
    %v1459 = vsel %vm258, %v1458, %v1457
    %v1460 = vrot.slane %v1455, 3
    %v1461 = vsel %vm261, %v1460, %v1459
    %v1462 = vrot.slane %v1456, 2
    %v1463 = vsel %vm264, %v1462, %v1461
    %v1464 = vpack.c.b16 %v1463, %v1463
    %1466 = vmatpush.bf16.msra.mxu0 %v307
    %1467 = vmatpush.bf16.msra.mxu0 %v306
    %1468 = vmatpush.bf16.msra.mxu0 %v305
    %1469 = vmatpush.bf16.msra.mxu0 %v304
    %1470 = vmatpush.bf16.msra.mxu0 %v303
    %1471 = vmatpush.bf16.msra.mxu0 %v302
    %1472 = vmatpush.bf16.msra.mxu0 %v301
    %1473 = vmatpush.bf16.msra.mxu0 %v300
    %1474 = vmatmul.bf16.gmra.mxu0 %v1464
    %v1475 = vpop.f32.mrf.mxu0
    %v1476 = vadd.f32 %v102, %v1475
    %v1477 = vpop.f32.mrf.mxu0
    %1478 = vdwg.mxu0
    %v1479 = vxor.u32 %v1476, 2147483648
    %v1480 = vmul.f32 %v1479, 1.442695
    %v1481 = vpow.pop %v1480
    %v1482 = vadd.f32 %v1481, 1.0
    %v1483 = vrcp.pop %v1482
    %v1484 = vmul.f32 %v1482, %v1483
    %v1485 = vsub.f32 1.0, %v1484
    %v1486 = vmul.f32 %v1483, %v1485
    %v1487 = vadd.f32 %v1483, %v1486
    %vm1488 = vweird.f32 %v1482
    %vm1489 = vweird.f32 %v1483
    %vm1490 = vmor %vm1488, %vm1489
    %v1491 = vsel %vm1490, %v1483, %v1487
    %v1492 = vand.u32 2147483647, %v1482
    %vm1493 = vcmp.eq.f32.partialorder %v1492, 8.507059e+37
    %v1494 = vand.u32 %v1482, 2147483648
    %v1495 = vor.u32 1.1754944e-38, %v1494
    %v1496 = vsel %vm1493, %v1495, %v1491
    %v1497 = vmul.f32 1.0, %v1496
    %v1498 = vmul.f32 %v1497, %v1367
    %v1499 = vrot.slane %v348, 5
    %v1500 = vrot.slane %v349, 4
    %v1501 = vsel %vm258, %v1500, %v1499
    %v1502 = vrot.slane %v350, 3
    %v1503 = vsel %vm261, %v1502, %v1501
    %v1504 = vrot.slane %v351, 2
    %v1505 = vsel %vm264, %v1504, %v1503
    %1506 = vrot.lane.b32.xlu0 %v1505, 32
    %v1507 = vpop.permute.xlu0 %1506
    %v1509 = vmul.f32 %v1497, %v1507
    %1511 = vrot.lane.b32.xlu0 %v1509, 96
    %v1512 = vpop.permute.xlu0 %1511
    %v1514 = vadd.f32 %v1498, %v1512
    %1516 = vrot.lane.b32.xlu0 %v1476, 96
    %v1517 = vpop.permute.xlu0 %1516
    %v1519 = vmul.f32 %v1497, %v1517
    %1521 = vrot.lane.b32.xlu0 %v1519, 64
    %v1522 = vpop.permute.xlu0 %1521
    %v1524 = vadd.f32 %v1514, %v1522
    %v1525 = vsel %vm382, %v1524, 0.0
    %1526 = vadd.xlane.f32.xlu0 %v1525
    %v1527 = vpop.xlane.xlu0 %1526
    %v1528 = vmul.f32 %v1527, 0.03125
    %v1529 = vsub.f32 %v1524, %v1528
    %v1530 = vmul.f32 %v1529, %v1529
    %v1531 = vsel %vm382, %v1530, 0.0
    %1532 = vadd.xlane.f32.xlu0 %v1531
    %v1533 = vpop.xlane.xlu0 %1532
    %v1534 = vmul.f32 %v1533, 0.03125
    %v1535 = vadd.f32 %v1534, 1e-05
    %v1536 = vrsqrt.pop %v1535
    %v1537 = vmul.f32 %v1536, %v1535
    %v1538 = vmul.f32 %v1537, %v1536
    %v1539 = vmul.f32 0.5, %v1538
    %v1540 = vsub.f32 1.5, %v1539
    %v1541 = vmul.f32 %v1536, %v1540
    %vm1542 = vweird.f32 %v1535
    %vm1543 = vweird.f32 %v1536
    %vm1544 = vmor %vm1542, %vm1543
    %v1545 = vsel %vm1544, %v1536, %v1541
    %v1546 = vmul.f32 %v1529, %v1545
    %v1547 = vmul.f32 %v1546, %v106
    %v1548 = vadd.f32 %v1547, %v110
    %v1549 = vld [vmem:[%s1 + $0x5] sm:$0x1]
    %v1550 = vld [vmem:[%s1 + $0xd] sm:$0x1]
    %v1551 = vld [vmem:[%s1 + $0x15] sm:$0x1]
    %v1552 = vld [vmem:[%s1 + $0x1d] sm:$0x1]
    %v1553 = vsub.f32 %v1548, %v1367
    %1555 = vset.pattern.permute.xlu0 0
    %1556 = vperm.xlu0 %1555, %v1549
    %v1557 = vpop.permute.xlu0 %1556
    %1560 = vset.pattern.permute.xlu0 0
    %1561 = vperm.xlu0 %1560, %v1550
    %v1562 = vpop.permute.xlu0 %1561
    %1565 = vset.pattern.permute.xlu0 0
    %1566 = vperm.xlu0 %1565, %v1551
    %v1567 = vpop.permute.xlu0 %1566
    %1570 = vset.pattern.permute.xlu0 0
    %1571 = vperm.xlu0 %1570, %v1552
    %v1572 = vpop.permute.xlu0 %1571
    %v1575 = vrot.slane %v1553, 1
    %v1576 = vrot.slane %v1553, 2
    %v1577 = vrot.slane %v1553, 3
    %v1582 = vmul.f32 %v1557, %v1553
    %v1583 = vmul.f32 %v1562, %v1575
    %v1584 = vmul.f32 %v1567, %v1576
    %v1585 = vmul.f32 %v1572, %v1577
    %v1590 = vrot.slane %v1583, 7
    %v1591 = vsel %vm258, %v1590, %v1582
    %v1592 = vrot.slane %v1584, 6
    %v1593 = vsel %vm261, %v1592, %v1591
    %v1594 = vrot.slane %v1585, 5
    %v1595 = vsel %vm264, %v1594, %v1593
    %v1597 = vadd.f32 %v1367, %v1595
    %v1599 = vrot.slane %v1597, 1
    %v1600 = vrot.slane %v1597, 2
    %v1601 = vrot.slane %v1597, 3
    %1605 = vst.msk [vmem:[#allocation8 + $0x5] sm:$0x1] %vm463, %v1597
    %1606 = vst.msk [vmem:[#allocation8 + $0xd] sm:$0x1] %vm463, %v1599
    %1607 = vst.msk [vmem:[#allocation8 + $0x15] sm:$0x1] %vm463, %v1600
    %1608 = vst.msk [vmem:[#allocation8 + $0x1d] sm:$0x1] %vm463, %v1601
    %v1609 = vpack.c.bf16 %v1597, %v1597
    %v1611 = vsel %vm141, %v1609, 0
    %1613 = vmatpush.bf16.msra.mxu0 0
    %1614 = vmatpush.bf16.msra.mxu0 0
    %1615 = vmatpush.bf16.msra.mxu0 0
    %1616 = vmatpush.bf16.msra.mxu0 0
    %1617 = vmatpush.bf16.msra.mxu0 0
    %1618 = vmatpush.bf16.msra.mxu0 0
    %1619 = vmatpush.bf16.msra.mxu0 %v178
    %1620 = vmatpush.bf16.msra.mxu0 %v177
    %1621 = vmatmul.bf16.gmra.mxu0 %v1611
    %v1622 = vpop.f32.mrf.mxu0
    %v1623 = vadd.f32 0.0, %v1622
    %v1624 = vpop.f32.mrf.mxu0
    %1625 = vdwg.mxu0
    %v1627 = vrot.slane %v1623, 2
    %v1628 = vrot.slane %v1623, 3
    %v1629 = vrot.slane %v1623, 4
    %v1630 = vrot.slane %v1623, 5
    %v1635 = vadd.f32 %v158, %v1627
    %v1636 = vadd.f32 %v160, %v1628
    %v1637 = vadd.f32 %v163, %v1629
    %v1638 = vadd.f32 %v165, %v1630
    %v1639 = vmul.f32 %v1635, %v1635
    %v1640 = vmul.f32 %v1636, %v1636
    %v1641 = vmul.f32 %v1637, %v1637
    %v1642 = vmul.f32 %v1638, %v1638
    %v1643 = vmul.f32 %v1635, %v1639
    %v1644 = vmul.f32 %v1636, %v1640
    %v1645 = vmul.f32 %v1637, %v1641
    %v1646 = vmul.f32 %v1638, %v1642
    %v1647 = vmul.f32 %v1643, 0.044715
    %v1648 = vmul.f32 %v1644, 0.044715
    %v1649 = vmul.f32 %v1645, 0.044715
    %v1650 = vmul.f32 %v1646, 0.044715
    %v1651 = vadd.f32 %v1635, %v1647
    %v1652 = vadd.f32 %v1636, %v1648
    %v1653 = vadd.f32 %v1637, %v1649
    %v1654 = vadd.f32 %v1638, %v1650
    %v1655 = vmul.f32 %v1651, 0.7978846
    %v1656 = vmul.f32 %v1652, 0.7978846
    %v1657 = vmul.f32 %v1653, 0.7978846
    %v1658 = vmul.f32 %v1654, 0.7978846
    %v1659 = vtanh.pop %v1655
    %v1660 = vtanh.pop %v1656
    %v1661 = vtanh.pop %v1657
    %v1662 = vtanh.pop %v1658
    %v1663 = vadd.f32 %v1659, 1.0
    %v1664 = vadd.f32 %v1660, 1.0
    %v1665 = vadd.f32 %v1661, 1.0
    %v1666 = vadd.f32 %v1662, 1.0
    %v1667 = vmul.f32 %v1663, 0.5
    %v1668 = vmul.f32 %v1664, 0.5
    %v1669 = vmul.f32 %v1665, 0.5
    %v1670 = vmul.f32 %v1666, 0.5
    %v1671 = vmul.f32 %v1635, %v1667
    %v1672 = vmul.f32 %v1636, %v1668
    %v1673 = vmul.f32 %v1637, %v1669
    %v1674 = vmul.f32 %v1638, %v1670
    %v1675 = vpack.c.bf16 %v1671, %v1671
    %v1676 = vpack.c.bf16 %v1672, %v1672
    %v1677 = vpack.c.bf16 %v1673, %v1673
    %v1678 = vpack.c.bf16 %v1674, %v1674
    %v1683 = vunpack.c.l.b16 %v1675
    %v1684 = vunpack.c.l.b16 %v1676
    %v1685 = vunpack.c.l.b16 %v1677
    %v1686 = vunpack.c.l.b16 %v1678
    %v1687 = vrot.slane %v1683, 6
    %v1688 = vrot.slane %v1684, 5
    %v1689 = vsel %vm258, %v1688, %v1687
    %v1690 = vrot.slane %v1685, 4
    %v1691 = vsel %vm261, %v1690, %v1689
    %v1692 = vrot.slane %v1686, 3
    %v1693 = vsel %vm264, %v1692, %v1691
    %v1694 = vpack.c.b16 %v1693, %v1693
    %1696 = vmatpush.bf16.msra.mxu0 %v307
    %1697 = vmatpush.bf16.msra.mxu0 %v306
    %1698 = vmatpush.bf16.msra.mxu0 %v305
    %1699 = vmatpush.bf16.msra.mxu0 %v304
    %1700 = vmatpush.bf16.msra.mxu0 %v303
    %1701 = vmatpush.bf16.msra.mxu0 %v302
    %1702 = vmatpush.bf16.msra.mxu0 %v301
    %1703 = vmatpush.bf16.msra.mxu0 %v300
    %1704 = vmatmul.bf16.gmra.mxu0 %v1694
    %v1705 = vpop.f32.mrf.mxu0
    %v1706 = vadd.f32 %v102, %v1705
    %v1707 = vpop.f32.mrf.mxu0
    %1708 = vdwg.mxu0
    %v1709 = vxor.u32 %v1706, 2147483648
    %v1710 = vmul.f32 %v1709, 1.442695
    %v1711 = vpow.pop %v1710
    %v1712 = vadd.f32 %v1711, 1.0
    %v1713 = vrcp.pop %v1712
    %v1714 = vmul.f32 %v1712, %v1713
    %v1715 = vsub.f32 1.0, %v1714
    %v1716 = vmul.f32 %v1713, %v1715
    %v1717 = vadd.f32 %v1713, %v1716
    %vm1718 = vweird.f32 %v1712
    %vm1719 = vweird.f32 %v1713
    %vm1720 = vmor %vm1718, %vm1719
    %v1721 = vsel %vm1720, %v1713, %v1717
    %v1722 = vand.u32 2147483647, %v1712
    %vm1723 = vcmp.eq.f32.partialorder %v1722, 8.507059e+37
    %v1724 = vand.u32 %v1712, 2147483648
    %v1725 = vor.u32 1.1754944e-38, %v1724
    %v1726 = vsel %vm1723, %v1725, %v1721
    %v1727 = vmul.f32 1.0, %v1726
    %v1728 = vmul.f32 %v1727, %v1597
    %v1729 = vrot.slane %v348, 6
    %v1730 = vrot.slane %v349, 5
    %v1731 = vsel %vm258, %v1730, %v1729
    %v1732 = vrot.slane %v350, 4
    %v1733 = vsel %vm261, %v1732, %v1731
    %v1734 = vrot.slane %v351, 3
    %v1735 = vsel %vm264, %v1734, %v1733
    %1736 = vrot.lane.b32.xlu0 %v1735, 32
    %v1737 = vpop.permute.xlu0 %1736
    %v1739 = vmul.f32 %v1727, %v1737
    %1741 = vrot.lane.b32.xlu0 %v1739, 96
    %v1742 = vpop.permute.xlu0 %1741
    %v1744 = vadd.f32 %v1728, %v1742
    %1746 = vrot.lane.b32.xlu0 %v1706, 96
    %v1747 = vpop.permute.xlu0 %1746
    %v1749 = vmul.f32 %v1727, %v1747
    %1751 = vrot.lane.b32.xlu0 %v1749, 64
    %v1752 = vpop.permute.xlu0 %1751
    %v1754 = vadd.f32 %v1744, %v1752
    %v1755 = vsel %vm382, %v1754, 0.0
    %1756 = vadd.xlane.f32.xlu0 %v1755
    %v1757 = vpop.xlane.xlu0 %1756
    %v1758 = vmul.f32 %v1757, 0.03125
    %v1759 = vsub.f32 %v1754, %v1758
    %v1760 = vmul.f32 %v1759, %v1759
    %v1761 = vsel %vm382, %v1760, 0.0
    %1762 = vadd.xlane.f32.xlu0 %v1761
    %v1763 = vpop.xlane.xlu0 %1762
    %v1764 = vmul.f32 %v1763, 0.03125
    %v1765 = vadd.f32 %v1764, 1e-05
    %v1766 = vrsqrt.pop %v1765
    %v1767 = vmul.f32 %v1766, %v1765
    %v1768 = vmul.f32 %v1767, %v1766
    %v1769 = vmul.f32 0.5, %v1768
    %v1770 = vsub.f32 1.5, %v1769
    %v1771 = vmul.f32 %v1766, %v1770
    %vm1772 = vweird.f32 %v1765
    %vm1773 = vweird.f32 %v1766
    %vm1774 = vmor %vm1772, %vm1773
    %v1775 = vsel %vm1774, %v1766, %v1771
    %v1776 = vmul.f32 %v1759, %v1775
    %v1777 = vmul.f32 %v1776, %v106
    %v1778 = vadd.f32 %v1777, %v110
    %v1779 = vld [vmem:[%s1 + $0x6] sm:$0x1]
    %v1780 = vld [vmem:[%s1 + $0xe] sm:$0x1]
    %v1781 = vld [vmem:[%s1 + $0x16] sm:$0x1]
    %v1782 = vld [vmem:[%s1 + $0x1e] sm:$0x1]
    %v1783 = vsub.f32 %v1778, %v1597
    %1785 = vset.pattern.permute.xlu0 0
    %1786 = vperm.xlu0 %1785, %v1779
    %v1787 = vpop.permute.xlu0 %1786
    %1790 = vset.pattern.permute.xlu0 0
    %1791 = vperm.xlu0 %1790, %v1780
    %v1792 = vpop.permute.xlu0 %1791
    %1795 = vset.pattern.permute.xlu0 0
    %1796 = vperm.xlu0 %1795, %v1781
    %v1797 = vpop.permute.xlu0 %1796
    %1800 = vset.pattern.permute.xlu0 0
    %1801 = vperm.xlu0 %1800, %v1782
    %v1802 = vpop.permute.xlu0 %1801
    %v1805 = vrot.slane %v1783, 1
    %v1806 = vrot.slane %v1783, 2
    %v1807 = vrot.slane %v1783, 3
    %v1812 = vmul.f32 %v1787, %v1783
    %v1813 = vmul.f32 %v1792, %v1805
    %v1814 = vmul.f32 %v1797, %v1806
    %v1815 = vmul.f32 %v1802, %v1807
    %v1820 = vrot.slane %v1813, 7
    %v1821 = vsel %vm258, %v1820, %v1812
    %v1822 = vrot.slane %v1814, 6
    %v1823 = vsel %vm261, %v1822, %v1821
    %v1824 = vrot.slane %v1815, 5
    %v1825 = vsel %vm264, %v1824, %v1823
    %v1827 = vadd.f32 %v1597, %v1825
    %v1829 = vrot.slane %v1827, 1
    %v1830 = vrot.slane %v1827, 2
    %v1831 = vrot.slane %v1827, 3
    %1835 = vst.msk [vmem:[#allocation8 + $0x6] sm:$0x1] %vm463, %v1827
    %1836 = vst.msk [vmem:[#allocation8 + $0xe] sm:$0x1] %vm463, %v1829
    %1837 = vst.msk [vmem:[#allocation8 + $0x16] sm:$0x1] %vm463, %v1830
    %1838 = vst.msk [vmem:[#allocation8 + $0x1e] sm:$0x1] %vm463, %v1831
    %v1839 = vpack.c.bf16 %v1827, %v1827
    %v1841 = vsel %vm141, %v1839, 0
    %1843 = vmatpush.bf16.msra.mxu0 0
    %1844 = vmatpush.bf16.msra.mxu0 0
    %1845 = vmatpush.bf16.msra.mxu0 0
    %1846 = vmatpush.bf16.msra.mxu0 0
    %1847 = vmatpush.bf16.msra.mxu0 0
    %1848 = vmatpush.bf16.msra.mxu0 0
    %1849 = vmatpush.bf16.msra.mxu0 %v178
    %1850 = vmatpush.bf16.msra.mxu0 %v177
    %1851 = vmatmul.bf16.gmra.mxu0 %v1841
    %v1852 = vpop.f32.mrf.mxu0
    %v1853 = vadd.f32 0.0, %v1852
    %v1854 = vpop.f32.mrf.mxu0
    %1855 = vdwg.mxu0
    %v1857 = vrot.slane %v1853, 1
    %v1858 = vrot.slane %v1853, 2
    %v1859 = vrot.slane %v1853, 3
    %v1860 = vrot.slane %v1853, 4
    %v1865 = vadd.f32 %v158, %v1857
    %v1866 = vadd.f32 %v160, %v1858
    %v1867 = vadd.f32 %v163, %v1859
    %v1868 = vadd.f32 %v165, %v1860
    %v1869 = vmul.f32 %v1865, %v1865
    %v1870 = vmul.f32 %v1866, %v1866
    %v1871 = vmul.f32 %v1867, %v1867
    %v1872 = vmul.f32 %v1868, %v1868
    %v1873 = vmul.f32 %v1865, %v1869
    %v1874 = vmul.f32 %v1866, %v1870
    %v1875 = vmul.f32 %v1867, %v1871
    %v1876 = vmul.f32 %v1868, %v1872
    %v1877 = vmul.f32 %v1873, 0.044715
    %v1878 = vmul.f32 %v1874, 0.044715
    %v1879 = vmul.f32 %v1875, 0.044715
    %v1880 = vmul.f32 %v1876, 0.044715
    %v1881 = vadd.f32 %v1865, %v1877
    %v1882 = vadd.f32 %v1866, %v1878
    %v1883 = vadd.f32 %v1867, %v1879
    %v1884 = vadd.f32 %v1868, %v1880
    %v1885 = vmul.f32 %v1881, 0.7978846
    %v1886 = vmul.f32 %v1882, 0.7978846
    %v1887 = vmul.f32 %v1883, 0.7978846
    %v1888 = vmul.f32 %v1884, 0.7978846
    %v1889 = vtanh.pop %v1885
    %v1890 = vtanh.pop %v1886
    %v1891 = vtanh.pop %v1887
    %v1892 = vtanh.pop %v1888
    %v1893 = vadd.f32 %v1889, 1.0
    %v1894 = vadd.f32 %v1890, 1.0
    %v1895 = vadd.f32 %v1891, 1.0
    %v1896 = vadd.f32 %v1892, 1.0
    %v1897 = vmul.f32 %v1893, 0.5
    %v1898 = vmul.f32 %v1894, 0.5
    %v1899 = vmul.f32 %v1895, 0.5
    %v1900 = vmul.f32 %v1896, 0.5
    %v1901 = vmul.f32 %v1865, %v1897
    %v1902 = vmul.f32 %v1866, %v1898
    %v1903 = vmul.f32 %v1867, %v1899
    %v1904 = vmul.f32 %v1868, %v1900
    %v1905 = vpack.c.bf16 %v1901, %v1901
    %v1906 = vpack.c.bf16 %v1902, %v1902
    %v1907 = vpack.c.bf16 %v1903, %v1903
    %v1908 = vpack.c.bf16 %v1904, %v1904
    %v1913 = vunpack.c.l.b16 %v1905
    %v1914 = vunpack.c.l.b16 %v1906
    %v1915 = vunpack.c.l.b16 %v1907
    %v1916 = vunpack.c.l.b16 %v1908
    %v1917 = vrot.slane %v1913, 7
    %v1918 = vrot.slane %v1914, 6
    %v1919 = vsel %vm258, %v1918, %v1917
    %v1920 = vrot.slane %v1915, 5
    %v1921 = vsel %vm261, %v1920, %v1919
    %v1922 = vrot.slane %v1916, 4
    %v1923 = vsel %vm264, %v1922, %v1921
    %v1924 = vpack.c.b16 %v1923, %v1923
    %1926 = vmatpush.bf16.msra.mxu0 %v307
    %1927 = vmatpush.bf16.msra.mxu0 %v306
    %1928 = vmatpush.bf16.msra.mxu0 %v305
    %1929 = vmatpush.bf16.msra.mxu0 %v304
    %1930 = vmatpush.bf16.msra.mxu0 %v303
    %1931 = vmatpush.bf16.msra.mxu0 %v302
    %1932 = vmatpush.bf16.msra.mxu0 %v301
    %1933 = vmatpush.bf16.msra.mxu0 %v300
    %1934 = vmatmul.bf16.gmra.mxu0 %v1924
    %v1935 = vpop.f32.mrf.mxu0
    %v1936 = vadd.f32 %v102, %v1935
    %v1937 = vpop.f32.mrf.mxu0
    %1938 = vdwg.mxu0
    %v1939 = vxor.u32 %v1936, 2147483648
    %v1940 = vmul.f32 %v1939, 1.442695
    %v1941 = vpow.pop %v1940
    %v1942 = vadd.f32 %v1941, 1.0
    %v1943 = vrcp.pop %v1942
    %v1944 = vmul.f32 %v1942, %v1943
    %v1945 = vsub.f32 1.0, %v1944
    %v1946 = vmul.f32 %v1943, %v1945
    %v1947 = vadd.f32 %v1943, %v1946
    %vm1948 = vweird.f32 %v1942
    %vm1949 = vweird.f32 %v1943
    %vm1950 = vmor %vm1948, %vm1949
    %v1951 = vsel %vm1950, %v1943, %v1947
    %v1952 = vand.u32 2147483647, %v1942
    %vm1953 = vcmp.eq.f32.partialorder %v1952, 8.507059e+37
    %v1954 = vand.u32 %v1942, 2147483648
    %v1955 = vor.u32 1.1754944e-38, %v1954
    %v1956 = vsel %vm1953, %v1955, %v1951
    %v1957 = vmul.f32 1.0, %v1956
    %v1958 = vmul.f32 %v1957, %v1827
    %v1959 = vrot.slane %v348, 7
    %v1960 = vrot.slane %v349, 6
    %v1961 = vsel %vm258, %v1960, %v1959
    %v1962 = vrot.slane %v350, 5
    %v1963 = vsel %vm261, %v1962, %v1961
    %v1964 = vrot.slane %v351, 4
    %v1965 = vsel %vm264, %v1964, %v1963
    %1966 = vrot.lane.b32.xlu0 %v1965, 32
    %v1967 = vpop.permute.xlu0 %1966
    %v1969 = vmul.f32 %v1957, %v1967
    %1971 = vrot.lane.b32.xlu0 %v1969, 96
    %v1972 = vpop.permute.xlu0 %1971
    %v1974 = vadd.f32 %v1958, %v1972
    %1976 = vrot.lane.b32.xlu0 %v1936, 96
    %v1977 = vpop.permute.xlu0 %1976
    %v1979 = vmul.f32 %v1957, %v1977
    %1981 = vrot.lane.b32.xlu0 %v1979, 64
    %v1982 = vpop.permute.xlu0 %1981
    %v1984 = vadd.f32 %v1974, %v1982
    %v1985 = vsel %vm382, %v1984, 0.0
    %1986 = vadd.xlane.f32.xlu0 %v1985
    %v1987 = vpop.xlane.xlu0 %1986
    %v1988 = vmul.f32 %v1987, 0.03125
    %v1989 = vsub.f32 %v1984, %v1988
    %v1990 = vmul.f32 %v1989, %v1989
    %v1991 = vsel %vm382, %v1990, 0.0
    %1992 = vadd.xlane.f32.xlu0 %v1991
    %v1993 = vpop.xlane.xlu0 %1992
    %v1994 = vmul.f32 %v1993, 0.03125
    %v1995 = vadd.f32 %v1994, 1e-05
    %v1996 = vrsqrt.pop %v1995
    %v1997 = vmul.f32 %v1996, %v1995
    %v1998 = vmul.f32 %v1997, %v1996
    %v1999 = vmul.f32 0.5, %v1998
    %v2000 = vsub.f32 1.5, %v1999
    %v2001 = vmul.f32 %v1996, %v2000
    %vm2002 = vweird.f32 %v1995
    %vm2003 = vweird.f32 %v1996
    %vm2004 = vmor %vm2002, %vm2003
    %v2005 = vsel %vm2004, %v1996, %v2001
    %v2006 = vmul.f32 %v1989, %v2005
    %v2007 = vmul.f32 %v2006, %v106
    %v2008 = vadd.f32 %v2007, %v110
    %v2009 = vld [vmem:[%s1 + $0x7] sm:$0x1]
    %v2010 = vld [vmem:[%s1 + $0xf] sm:$0x1]
    %v2011 = vld [vmem:[%s1 + $0x17] sm:$0x1]
    %v2012 = vld [vmem:[%s1 + $0x1f] sm:$0x1]
    %v2013 = vsub.f32 %v2008, %v1827
    %2015 = vset.pattern.permute.xlu0 0
    %2016 = vperm.xlu0 %2015, %v2009
    %v2017 = vpop.permute.xlu0 %2016
    %2020 = vset.pattern.permute.xlu0 0
    %2021 = vperm.xlu0 %2020, %v2010
    %v2022 = vpop.permute.xlu0 %2021
    %2025 = vset.pattern.permute.xlu0 0
    %2026 = vperm.xlu0 %2025, %v2011
    %v2027 = vpop.permute.xlu0 %2026
    %2030 = vset.pattern.permute.xlu0 0
    %2031 = vperm.xlu0 %2030, %v2012
    %v2032 = vpop.permute.xlu0 %2031
    %v2035 = vrot.slane %v2013, 1
    %v2036 = vrot.slane %v2013, 2
    %v2037 = vrot.slane %v2013, 3
    %v2042 = vmul.f32 %v2017, %v2013
    %v2043 = vmul.f32 %v2022, %v2035
    %v2044 = vmul.f32 %v2027, %v2036
    %v2045 = vmul.f32 %v2032, %v2037
    %v2050 = vrot.slane %v2043, 7
    %v2051 = vsel %vm258, %v2050, %v2042
    %v2052 = vrot.slane %v2044, 6
    %v2053 = vsel %vm261, %v2052, %v2051
    %v2054 = vrot.slane %v2045, 5
    %v2055 = vsel %vm264, %v2054, %v2053
    %v2057 = vadd.f32 %v1827, %v2055
    %v2059 = vrot.slane %v2057, 1
    %v2060 = vrot.slane %v2057, 2
    %v2061 = vrot.slane %v2057, 3
    %2065 = vst.msk [vmem:[#allocation8 + $0x7] sm:$0x1] %vm463, %v2057
    %2066 = vst.msk [vmem:[#allocation8 + $0xf] sm:$0x1] %vm463, %v2059
    %2067 = vst.msk [vmem:[#allocation8 + $0x17] sm:$0x1] %vm463, %v2060
    %2068 = vst.msk [vmem:[#allocation8 + $0x1f] sm:$0x1] %vm463, %v2061
    %2069 = vst.msk [vmem:[#allocation2] sm:$0xf] %vm382, %v2057
    // Predicated region
    $region50: #{tpu_custom_call.1} parent=1 // pred_check
      %p2070 = pneg %p69
    $region51: #{tpu_custom_call.1} parent=1 // pred_check_branch
      %2072 = sbr.rel (%p2070) target = $region53
    $region52: #{tpu_custom_call.1} parent=1 // pred_region
      %2073 = vst.msk [vmem:[#allocation9] sm:$0xf] %vm382, %v2057
    $region53: #{tpu_custom_call.1} parent=1 // pred_fallthru
      _
    // Predicated region
    $region54: #{tpu_custom_call.1} parent=1 // pred_check
      _
    $region55: #{tpu_custom_call.1} parent=1 // pred_check_branch
      %2075 = sbr.rel (0) target = $region57
    $region56: #{tpu_custom_call.1} parent=1 // pred_region
      %2077 = vsyncadd [#allocation5], 0
      %s2078 = sshll.u32 [#allocation8], 4
      %s2079 = int_to_ptr.vmem [resolvable:$true] %s2078
      %s2080 = sshll.u32 %s9, 4
      %s2081 = int_to_ptr.hbm [resolvable:$true] %s2080
      %2086 = dma.vmem_to_hbm [thread:$0]  %s2079, 512, %s2081, [#allocation5], 128, 128, 8
    $region57: #{tpu_custom_call.1} parent=1 // pred_fallthru
      _
    // Predicated region
    $region58: #{tpu_custom_call.1} parent=1 // pred_check
      _
    $region59: #{tpu_custom_call.1} parent=1 // pred_check_branch
      %2088 = sbr.rel (0) target = $region61
    $region60: #{tpu_custom_call.1} parent=1 // pred_region
      %2090 = vsyncadd [#allocation10], 0
      %s2092 = sshll.u32 [#allocation9], 4
      %s2093 = int_to_ptr.vmem [resolvable:$true] %s2092
      %s2094 = sshll.u32 %s10, 4
      %s2095 = int_to_ptr.hbm [resolvable:$true] %s2094
      %2097 = dma.vmem_to_hbm [thread:$0]  %s2093, 64, %s2095, [#allocation10]
    $region61: #{tpu_custom_call.1} parent=1 // pred_fallthru
      _
    // Predicated region
    $region62: #{tpu_custom_call.1} parent=1 // pred_check
      _
    $region63: #{tpu_custom_call.1} parent=1 // pred_check_branch
      %2099 = sbr.rel (0) target = $region65
    $region64: #{tpu_custom_call.1} parent=1 // pred_region
      %2101 = dma.done [#allocation5], 512
    $region65: #{tpu_custom_call.1} parent=1 // pred_fallthru
      _
    // Predicated region
    $region66: #{tpu_custom_call.1} parent=1 // pred_check
      _
    $region67: #{tpu_custom_call.1} parent=1 // pred_check_branch
      %2103 = sbr.rel (0) target = $region69
    $region68: #{tpu_custom_call.1} parent=1 // pred_region
      %2105 = dma.done [#allocation10], 64
    $region69: #{tpu_custom_call.1} parent=1 // pred_fallthru
      _
    %2106 = vsyncpa [#allocation4], 1
    %2107 = vsyncpa [#allocation7], 1
    %2108 = vsyncpa [#allocation5], 1
    %2109 = vsyncpa [#allocation10], 1

</llo_original>
